<compile_context>
chip_gen: v6e
topology: v6e:2x2x1
jax: 0.10.0
libtpu: 0.0.40
codegen_flags: <defaults>
</compile_context>

<pallas_src>
import functools
import math

import jax
import jax.numpy as jnp
from jax.experimental import pallas as pl
from jax.experimental.pallas import tpu as pltpu


_PARAM_ORDER = ['wq', 'bq', 'wk', 'bk', 'wv', 'bv', 'wo', 'bo',
                'g1', 'be1', 'w1', 'b1', 'w2', 'b2', 'g2', 'be2']
_MATMUL_WEIGHTS = ('wq', 'wk', 'wv', 'wo', 'w1', 'w2')


def encoder_stack_kernel(x_ref, wq_ref, bq_ref, wk_ref, bk_ref, wv_ref, bv_ref,
                         wo_ref, bo_ref, g1_ref, be1_ref,
                         w1_ref, b1_ref, w2_ref, b2_ref, g2_ref, be2_ref,
                         o_ref, h_ref,
                         *, batch, seq, num_heads, dim_k, ff_block, eps,
                         matmul_dtype):
    B, S, H, dk = batch, seq, num_heads, dim_k
    D = H * dk
    BS = B * S

    layer = pl.program_id(1)

    # Load this row-block's input into the resident VMEM carry on layer 0.
    @pl.when(layer == 0)
    def _():
        h_ref[...] = x_ref[...].reshape(BS, D).astype(jnp.float32)

    x = h_ref[...]                                            # (BS, D) f32

    def matmul(a, w):
        return jnp.dot(a.astype(matmul_dtype), w.astype(matmul_dtype),
                       preferred_element_type=jnp.float32)

    # ---- Q/K/V projections over all rows of this block ---------------------
    q = matmul(x, wq_ref[...]) + bq_ref[...]                  # (BS, D) f32
    k = matmul(x, wk_ref[...]) + bk_ref[...]
    v = matmul(x, wv_ref[...]) + bv_ref[...]

    # ---- heads moved into the leading (batch) dim ---------------------------
    # (BS, D) -> (H*B, S, dk) using only static lane slices + major-dim concat
    # (no minor-dim reshape, no replicated/masked K-V, no (HS,HS) bookkeeping
    # matmul).  Attention MXU work is the per-head-correct B*S^2*D.
    def split_heads(t):
        t3 = t.reshape(B, S, D)                               # major split: free
        return jnp.concatenate(
            [t3[:, :, h * dk:(h + 1) * dk] for h in range(H)], axis=0)

    qh, kh, vh = split_heads(q), split_heads(k), split_heads(v)   # (H*B, S, dk)

    scale = 1.0 / math.sqrt(dk)
    s = jnp.einsum('gqd,gkd->gqk',
                   (qh * scale).astype(matmul_dtype), kh.astype(matmul_dtype),
                   preferred_element_type=jnp.float32)        # (H*B, S, S)
    # Per-head, per-query max: exp args <= 0 and denominator >= 1 (robust with
    # the approximate EUP reciprocal).
    s = s - jnp.max(s, axis=-1, keepdims=True)
    p = jnp.exp(s)
    p = p * pl.reciprocal(jnp.sum(p, axis=-1, keepdims=True), approx=True)
    # TODO(synk): flash-style query tiling over S (online softmax) for realistic
    # sequence lengths so the (H*B, S, S) scores never fully materialize.
    ctx = jnp.einsum('gqk,gkd->gqd',
                     p.astype(matmul_dtype), vh.astype(matmul_dtype),
                     preferred_element_type=jnp.float32)      # (H*B, S, dk)

    # Merge heads back to the lane dim: (H*B, S, dk) -> (BS, D).
    attn = jnp.concatenate([ctx[h * B:(h + 1) * B] for h in range(H)], axis=-1)
    attn = attn.reshape(BS, D)

    proj = matmul(attn, wo_ref[...]) + bo_ref[...]

    def layer_norm(z, g, b):
        mu = jnp.mean(z, axis=-1, keepdims=True)
        var = jnp.mean((z - mu) ** 2, axis=-1, keepdims=True)
        return (z - mu) * jax.lax.rsqrt(var + eps) * g + b

    # dropout is eval-mode identity
    y = layer_norm(x + proj, g1_ref[...], be1_ref[...])

    # ---- feed-forward, tiled over the FF axis -------------------------------
    FF = w1_ref.shape[1]
    ffc = ff_block if (ff_block < FF and FF % ff_block == 0) else FF
    acc = None
    for c in range(FF // ffc):
        c0 = c * ffc
        h1 = jnp.maximum(
            matmul(y, w1_ref[:, c0:c0 + ffc]) + b1_ref[:, c0:c0 + ffc], 0.0)
        part = matmul(h1, w2_ref[c0:c0 + ffc, :])
        acc = part if acc is None else acc + part
    ff = acc + b2_ref[...]

    z = layer_norm(y + ff, g2_ref[...], be2_ref[...])

    # Carry for the next layer (stays in VMEM; no HBM round trip).
    h_ref[...] = z

    # Only write the HBM output block on the final layer.
    @pl.when(layer == pl.num_programs(1) - 1)
    def _():
        o_ref[...] = z.reshape(B, S, D).astype(o_ref.dtype)


def transformer_encoder(x, layer_params, *, num_heads,
                        matmul_dtype=jnp.bfloat16, ff_block=512,
                        num_batch_blocks=1, eps=1e-5, vmem_limit_bytes=None):
    """Applies the full encoder stack in a single fused pallas_call."""
    B, S, D = x.shape
    L = len(layer_params)
    dk = D // num_heads
    assert num_heads * dk == D
    assert B % num_batch_blocks == 0
    Bb = B // num_batch_blocks

    # Stack per-layer params along a leading layer axis; matmul weights are
    # stored in `matmul_dtype` (bf16 by default: halves weight DMA + weight
    # VMEM, bf16 MXU rate).  Biases / LN params stay f32.
    stacked = {}
    for n in _PARAM_ORDER:
        p = jnp.stack([lp[n] for lp in layer_params])
        stacked[n] = p.astype(matmul_dtype) if n in _MATMUL_WEIGHTS else p

    kernel = functools.partial(
        encoder_stack_kernel, batch=Bb, seq=S, num_heads=num_heads, dim_k=dk,
        ff_block=ff_block, eps=eps, matmul_dtype=matmul_dtype)

    def param_spec(name):
        shp = stacked[name].shape                      # (L, ...)
        nrest = len(shp) - 1
        return pl.BlockSpec((None,) + shp[1:],
                            lambda r, l, _n=nrest: (l,) + (0,) * _n)

    in_specs = [pl.BlockSpec((Bb, S, D), lambda r, l: (r, 0, 0))]
    in_specs += [param_spec(n) for n in _PARAM_ORDER]

    if vmem_limit_bytes is None:
        nbytes = lambda a: a.size * a.dtype.itemsize
        per_layer_w = sum(nbytes(stacked[n][0]) for n in _PARAM_ORDER)
        FF = stacked['w1'].shape[-1]
        ffc = ff_block if (ff_block < FF and FF % ff_block == 0) else FF
        # rough f32 working set: q/k/v/attn/y/ff (+carry) + scores/probs + one
        # FF chunk; 2x weight slab for double-buffered prefetch.
        work = 4 * Bb * S * (8 * D + 2 * num_heads * S + ffc)
        want = 2 * per_layer_w + 3 * Bb * S * D * 4 + work + (8 << 20)
        try:
            cap = pltpu.get_tpu_info().vmem_capacity_bytes
        except Exception:
            cap = 64 << 20                             # conservative (v7x)
        vmem_limit_bytes = int(max(32 << 20, min(want, cap - (4 << 20))))

    grid_spec = pltpu.PrefetchScalarGridSpec(
        num_scalar_prefetch=0,
        grid=(num_batch_blocks, L),
        in_specs=in_specs,
        out_specs=pl.BlockSpec((Bb, S, D), lambda r, l: (r, 0, 0)),
        scratch_shapes=[pltpu.VMEM((Bb * S, D), jnp.float32)],  # activation carry
    )

    return pl.pallas_call(
        kernel,
        out_shape=jax.ShapeDtypeStruct((B, S, D), x.dtype),
        grid_spec=grid_spec,
        compiler_params=pltpu.CompilerParams(
            # Row-block axis is independent ("parallel": megacore split on v7x);
            # the layer axis is a sequential carry ("arbitrary").
            dimension_semantics=("parallel", "arbitrary"),
            vmem_limit_bytes=vmem_limit_bytes,
        ),
    )(x, *[stacked[n] for n in _PARAM_ORDER])


# ---------------- deterministic parameter init (synthetic) -------------------

def _linear(key, fan_in, fan_out):
    bound = 1.0 / math.sqrt(fan_in)
    kw, kb = jax.random.split(key)
    w = jax.random.uniform(kw, (fan_in, fan_out), jnp.float32, -bound, bound)
    b = jax.random.uniform(kb, (1, fan_out), jnp.float32, -bound, bound)
    return w, b


def init_params(key, num_layers, dim_model, num_heads, dim_feedforward):
    layers = []
    for l in range(num_layers):
        keys = jax.random.split(jax.random.fold_in(key, l), 6)
        wq, bq = _linear(keys[0], dim_model, dim_model)
        wk, bk = _linear(keys[1], dim_model, dim_model)
        wv, bv = _linear(keys[2], dim_model, dim_model)
        wo, bo = _linear(keys[3], dim_model, dim_model)
        w1, b1 = _linear(keys[4], dim_model, dim_feedforward)
        w2, b2 = _linear(keys[5], dim_feedforward, dim_model)
        layers.append(dict(
            wq=wq, bq=bq, wk=wk, bk=bk, wv=wv, bv=bv, wo=wo, bo=bo,
            g1=jnp.ones((1, dim_model), jnp.float32),
            be1=jnp.zeros((1, dim_model), jnp.float32),
            w1=w1, b1=b1, w2=w2, b2=b2,
            g2=jnp.ones((1, dim_model), jnp.float32),
            be2=jnp.zeros((1, dim_model), jnp.float32),
        ))
    return layers


# ---------------- pure-JAX reference (sanity check) --------------------------

def _ref_layer(x, p, num_heads):
    D = x.shape[-1]
    dk = D // num_heads
    q = x @ p['wq'] + p['bq']
    k = x @ p['wk'] + p['bk']
    v = x @ p['wv'] + p['bv']
    outs = []
    for h in range(num_heads):
        sl = slice(h * dk, (h + 1) * dk)
        s = jnp.einsum('bqd,bkd->bqk', q[..., sl], k[..., sl]) / math.sqrt(dk)
        pr = jax.nn.softmax(s, axis=-1)
        outs.append(jnp.einsum('bqk,bkd->bqd', pr, v[..., sl]))
    attn = jnp.concatenate(outs, axis=-1) @ p['wo'] + p['bo']

    def ln(z, g, b):
        mu = jnp.mean(z, axis=-1, keepdims=True)
        var = jnp.mean((z - mu) ** 2, axis=-1, keepdims=True)
        return (z - mu) * jax.lax.rsqrt(var + 1e-5) * g + b

    y = ln(x + attn, p['g1'], p['be1'])
    ff = jnp.maximum(y @ p['w1'] + p['b1'], 0.0) @ p['w2'] + p['b2']
    return ln(y + ff, p['g2'], p['be2'])


def _ref(x, layer_params, num_heads):
    for p in layer_params:
        x = _ref_layer(x, p, num_heads)
    return x


if __name__ == "__main__":
    num_layers = 2
    dim_model = 32
    num_heads = 4
    dim_feedforward = 64
    batch, seq = 2, 8

    key = jax.random.PRNGKey(0)
    k_x, k_p = jax.random.split(key)
    x = jax.random.normal(k_x, (batch, seq, dim_model), jnp.float32)
    layer_params = init_params(k_p, num_layers, dim_model, num_heads,
                               dim_feedforward)

    ref = _ref(x, layer_params, num_heads)

    # fp32 path: tight parity with the fp32 PyTorch reference semantics.
    out_f32 = transformer_encoder(x, layer_params, num_heads=num_heads,
                                  matmul_dtype=jnp.float32)
    out_f32 = jax.block_until_ready(out_f32)
    assert out_f32.shape == (batch, seq, dim_model)
    assert jnp.allclose(out_f32, ref, rtol=5e-3, atol=5e-3), "f32 mismatch"

    # Default production path: bf16 weights/operands on the MXU plus a 2-way
    # batch-block split (megacore-ready).  Looser tolerance for bf16 operands.
    out_bf16 = transformer_encoder(x, layer_params, num_heads=num_heads,
                                   num_batch_blocks=2)
    out_bf16 = jax.block_until_ready(out_bf16)
    assert out_bf16.shape == (batch, seq, dim_model)
    assert jnp.allclose(out_bf16, ref, rtol=5e-2, atol=5e-2), "bf16 mismatch"

    print("KERNEL_OK")
</pallas_src>

<mosaic_0001>
module attributes {stable_mosaic.version = 11 : i64} {
  func.func @encoder_stack_kernel(%arg0: i32, %arg1: i32, %arg2: memref<2x8x32xf32, #tpu.memory_space<vmem>>, %arg3: memref<1x32x32xf32, #tpu.memory_space<vmem>>, %arg4: memref<1x1x32xf32, #tpu.memory_space<vmem>>, %arg5: memref<1x32x32xf32, #tpu.memory_space<vmem>>, %arg6: memref<1x1x32xf32, #tpu.memory_space<vmem>>, %arg7: memref<1x32x32xf32, #tpu.memory_space<vmem>>, %arg8: memref<1x1x32xf32, #tpu.memory_space<vmem>>, %arg9: memref<1x32x32xf32, #tpu.memory_space<vmem>>, %arg10: memref<1x1x32xf32, #tpu.memory_space<vmem>>, %arg11: memref<1x1x32xf32, #tpu.memory_space<vmem>>, %arg12: memref<1x1x32xf32, #tpu.memory_space<vmem>>, %arg13: memref<1x32x64xf32, #tpu.memory_space<vmem>>, %arg14: memref<1x1x64xf32, #tpu.memory_space<vmem>>, %arg15: memref<1x64x32xf32, #tpu.memory_space<vmem>>, %arg16: memref<1x1x32xf32, #tpu.memory_space<vmem>>, %arg17: memref<1x1x32xf32, #tpu.memory_space<vmem>>, %arg18: memref<1x1x32xf32, #tpu.memory_space<vmem>>, %arg19: memref<2x8x32xf32, #tpu.memory_space<vmem>>, %arg20: memref<16x32xf32, #tpu.memory_space<vmem>>) attributes {dimension_semantics = [#tpu.dimension_semantics<parallel>, #tpu.dimension_semantics<arbitrary>], iteration_bounds = array<i64: 1, 2>, scalar_prefetch = 0 : i64, scratch_operands = 1 : i64, tpu.core_type = #tpu.core_type<tc>, window_params = [{transform_indices = @transform_0, window_bounds = array<i64: 2, 8, 32>}, {transform_indices = @transform_1, window_bounds = array<i64: 1, 32, 32>}, {transform_indices = @transform_2, window_bounds = array<i64: 1, 1, 32>}, {transform_indices = @transform_3, window_bounds = array<i64: 1, 32, 32>}, {transform_indices = @transform_4, window_bounds = array<i64: 1, 1, 32>}, {transform_indices = @transform_5, window_bounds = array<i64: 1, 32, 32>}, {transform_indices = @transform_6, window_bounds = array<i64: 1, 1, 32>}, {transform_indices = @transform_7, window_bounds = array<i64: 1, 32, 32>}, {transform_indices = @transform_8, window_bounds = array<i64: 1, 1, 32>}, {transform_indices = @transform_9, window_bounds = array<i64: 1, 1, 32>}, {transform_indices = @transform_10, window_bounds = array<i64: 1, 1, 32>}, {transform_indices = @transform_11, window_bounds = array<i64: 1, 32, 64>}, {transform_indices = @transform_12, window_bounds = array<i64: 1, 1, 64>}, {transform_indices = @transform_13, window_bounds = array<i64: 1, 64, 32>}, {transform_indices = @transform_14, window_bounds = array<i64: 1, 1, 32>}, {transform_indices = @transform_15, window_bounds = array<i64: 1, 1, 32>}, {transform_indices = @transform_16, window_bounds = array<i64: 1, 1, 32>}, {transform_indices = @transform_17, window_bounds = array<i64: 2, 8, 32>}]} {
    %c0_i32 = arith.constant 0 : i32
    %0 = arith.cmpi eq, %arg1, %c0_i32 : i32
    %1 = arith.extui %0 : i1 to i32
    %c0_i32_0 = arith.constant 0 : i32
    %2 = arith.cmpi ne, %1, %c0_i32_0 : i32
    scf.if %2 {
      %c0_74 = arith.constant 0 : index
      %c0_75 = arith.constant 0 : index
      %c0_76 = arith.constant 0 : index
      %144 = vector.load %arg2[%c0_74, %c0_75, %c0_76] : memref<2x8x32xf32, #tpu.memory_space<vmem>>, vector<2x8x32xf32>
      %145 = vector.shape_cast %144 : vector<2x8x32xf32> to vector<16x32xf32>
      %c0_77 = arith.constant 0 : index
      %c0_78 = arith.constant 0 : index
      %146 = vector.load %arg20[%c0_77, %c0_78] : memref<16x32xf32, #tpu.memory_space<vmem>>, vector<16x32xf32>
      tpu.vector_store %arg20[%c0_77, %c0_78], %145 {strides = array<i32>} : memref<16x32xf32, #tpu.memory_space<vmem>>, vector<16x32xf32>,
    } else {
    }
    %c0 = arith.constant 0 : index
    %c0_1 = arith.constant 0 : index
    %3 = vector.load %arg20[%c0, %c0_1] : memref<16x32xf32, #tpu.memory_space<vmem>>, vector<16x32xf32>
    %c0_2 = arith.constant 0 : index
    %c0_3 = arith.constant 0 : index
    %c0_4 = arith.constant 0 : index
    %4 = vector.load %arg3[%c0_2, %c0_3, %c0_4] : memref<1x32x32xf32, #tpu.memory_space<vmem>>, vector<1x32x32xf32>
    %5 = vector.shape_cast %4 : vector<1x32x32xf32> to vector<32x32xf32>
    %cst = arith.constant dense<0.000000e+00> : vector<16x32xf32>
    %6 = tpu.matmul %3, %5, %cst {dimension_numbers = #tpu.dot_dimension_numbers<[1], [0], [0], [1], [0, 0, 1, 1], [], []>} : vector<16x32xf32>, vector<32x32xf32>, vector<16x32xf32> -> vector<16x32xf32>
    %c0_5 = arith.constant 0 : index
    %c0_6 = arith.constant 0 : index
    %c0_7 = arith.constant 0 : index
    %7 = vector.load %arg4[%c0_5, %c0_6, %c0_7] : memref<1x1x32xf32, #tpu.memory_space<vmem>>, vector<1x1x32xf32>
    %8 = vector.shape_cast %7 : vector<1x1x32xf32> to vector<1x32xf32>
    %9 = vector.broadcast %8 : vector<1x32xf32> to vector<16x32xf32>
    %10 = arith.addf %6, %9 : vector<16x32xf32>
    %c0_8 = arith.constant 0 : index
    %c0_9 = arith.constant 0 : index
    %c0_10 = arith.constant 0 : index
    %11 = vector.load %arg5[%c0_8, %c0_9, %c0_10] : memref<1x32x32xf32, #tpu.memory_space<vmem>>, vector<1x32x32xf32>
    %12 = vector.shape_cast %11 : vector<1x32x32xf32> to vector<32x32xf32>
    %cst_11 = arith.constant dense<0.000000e+00> : vector<16x32xf32>
    %13 = tpu.matmul %3, %12, %cst_11 {dimension_numbers = #tpu.dot_dimension_numbers<[1], [0], [0], [1], [0, 0, 1, 1], [], []>} : vector<16x32xf32>, vector<32x32xf32>, vector<16x32xf32> -> vector<16x32xf32>
    %c0_12 = arith.constant 0 : index
    %c0_13 = arith.constant 0 : index
    %c0_14 = arith.constant 0 : index
    %14 = vector.load %arg6[%c0_12, %c0_13, %c0_14] : memref<1x1x32xf32, #tpu.memory_space<vmem>>, vector<1x1x32xf32>
    %15 = vector.shape_cast %14 : vector<1x1x32xf32> to vector<1x32xf32>
    %16 = vector.broadcast %15 : vector<1x32xf32> to vector<16x32xf32>
    %17 = arith.addf %13, %16 : vector<16x32xf32>
    %c0_15 = arith.constant 0 : index
    %c0_16 = arith.constant 0 : index
    %c0_17 = arith.constant 0 : index
    %18 = vector.load %arg7[%c0_15, %c0_16, %c0_17] : memref<1x32x32xf32, #tpu.memory_space<vmem>>, vector<1x32x32xf32>
    %19 = vector.shape_cast %18 : vector<1x32x32xf32> to vector<32x32xf32>
    %cst_18 = arith.constant dense<0.000000e+00> : vector<16x32xf32>
    %20 = tpu.matmul %3, %19, %cst_18 {dimension_numbers = #tpu.dot_dimension_numbers<[1], [0], [0], [1], [0, 0, 1, 1], [], []>} : vector<16x32xf32>, vector<32x32xf32>, vector<16x32xf32> -> vector<16x32xf32>
    %c0_19 = arith.constant 0 : index
    %c0_20 = arith.constant 0 : index
    %c0_21 = arith.constant 0 : index
    %21 = vector.load %arg8[%c0_19, %c0_20, %c0_21] : memref<1x1x32xf32, #tpu.memory_space<vmem>>, vector<1x1x32xf32>
    %22 = vector.shape_cast %21 : vector<1x1x32xf32> to vector<1x32xf32>
    %23 = vector.broadcast %22 : vector<1x32xf32> to vector<16x32xf32>
    %24 = arith.addf %20, %23 : vector<16x32xf32>
    %25 = vector.shape_cast %10 : vector<16x32xf32> to vector<2x8x32xf32>
    %26 = vector.extract_strided_slice %25 {offsets = [0, 0, 0], sizes = [2, 8, 8], strides = [1, 1, 1]} : vector<2x8x32xf32> to vector<2x8x8xf32>
    %27 = vector.extract_strided_slice %25 {offsets = [0, 0, 8], sizes = [2, 8, 8], strides = [1, 1, 1]} : vector<2x8x32xf32> to vector<2x8x8xf32>
    %28 = vector.extract_strided_slice %25 {offsets = [0, 0, 16], sizes = [2, 8, 8], strides = [1, 1, 1]} : vector<2x8x32xf32> to vector<2x8x8xf32>
    %29 = vector.extract_strided_slice %25 {offsets = [0, 0, 24], sizes = [2, 8, 8], strides = [1, 1, 1]} : vector<2x8x32xf32> to vector<2x8x8xf32>
    %30 = tpu.concatenate %26, %27, %28, %29 in 0 : vector<2x8x8xf32>, vector<2x8x8xf32>, vector<2x8x8xf32>, vector<2x8x8xf32> -> vector<8x8x8xf32>
    %31 = vector.shape_cast %17 : vector<16x32xf32> to vector<2x8x32xf32>
    %32 = vector.extract_strided_slice %31 {offsets = [0, 0, 0], sizes = [2, 8, 8], strides = [1, 1, 1]} : vector<2x8x32xf32> to vector<2x8x8xf32>
    %33 = vector.extract_strided_slice %31 {offsets = [0, 0, 8], sizes = [2, 8, 8], strides = [1, 1, 1]} : vector<2x8x32xf32> to vector<2x8x8xf32>
    %34 = vector.extract_strided_slice %31 {offsets = [0, 0, 16], sizes = [2, 8, 8], strides = [1, 1, 1]} : vector<2x8x32xf32> to vector<2x8x8xf32>
    %35 = vector.extract_strided_slice %31 {offsets = [0, 0, 24], sizes = [2, 8, 8], strides = [1, 1, 1]} : vector<2x8x32xf32> to vector<2x8x8xf32>
    %36 = tpu.concatenate %32, %33, %34, %35 in 0 : vector<2x8x8xf32>, vector<2x8x8xf32>, vector<2x8x8xf32>, vector<2x8x8xf32> -> vector<8x8x8xf32>
    %37 = vector.shape_cast %24 : vector<16x32xf32> to vector<2x8x32xf32>
    %38 = vector.extract_strided_slice %37 {offsets = [0, 0, 0], sizes = [2, 8, 8], strides = [1, 1, 1]} : vector<2x8x32xf32> to vector<2x8x8xf32>
    %39 = vector.extract_strided_slice %37 {offsets = [0, 0, 8], sizes = [2, 8, 8], strides = [1, 1, 1]} : vector<2x8x32xf32> to vector<2x8x8xf32>
    %40 = vector.extract_strided_slice %37 {offsets = [0, 0, 16], sizes = [2, 8, 8], strides = [1, 1, 1]} : vector<2x8x32xf32> to vector<2x8x8xf32>
    %41 = vector.extract_strided_slice %37 {offsets = [0, 0, 24], sizes = [2, 8, 8], strides = [1, 1, 1]} : vector<2x8x32xf32> to vector<2x8x8xf32>
    %42 = tpu.concatenate %38, %39, %40, %41 in 0 : vector<2x8x8xf32>, vector<2x8x8xf32>, vector<2x8x8xf32>, vector<2x8x8xf32> -> vector<8x8x8xf32>
    %cst_22 = arith.constant 0.353553385 : f32
    %43 = vector.broadcast %cst_22 : f32 to vector<8x8x8xf32>
    %44 = arith.mulf %30, %43 : vector<8x8x8xf32>
    "tpu.trace_start"() <{level = 10 : i32, message = "gqd,gkd->gqk"}> : () -> ()
    %cst_23 = arith.constant dense<0.000000e+00> : vector<8x8x8xf32>
    %45 = tpu.matmul %44, %36, %cst_23 {dimension_numbers = #tpu.dot_dimension_numbers<[2], [2], [1], [1], [0, 0, 0, 1, 1, 1], [0], [0]>} : vector<8x8x8xf32>, vector<8x8x8xf32>, vector<8x8x8xf32> -> vector<8x8x8xf32>
    "tpu.trace_stop"() : () -> ()
    %cst_24 = arith.constant dense<0xFF800000> : vector<8x8xf32>
    %46 = vector.multi_reduction <maximumf>, %45, %cst_24 [2] : vector<8x8x8xf32> to vector<8x8xf32>
    %47 = vector.shape_cast %46 : vector<8x8xf32> to vector<8x8x1xf32>
    %48 = vector.broadcast %47 : vector<8x8x1xf32> to vector<8x8x8xf32>
    %49 = arith.subf %45, %48 : vector<8x8x8xf32>
    %50 = math.exp %49 : vector<8x8x8xf32>
    %cst_25 = arith.constant dense<0.000000e+00> : vector<8x8xf32>
    %51 = vector.multi_reduction <add>, %50, %cst_25 [2] : vector<8x8x8xf32> to vector<8x8xf32>
    %52 = vector.shape_cast %51 : vector<8x8xf32> to vector<8x8x1xf32>
    %53 = tpu.reciprocal %52 {approx = true} : vector<8x8x1xf32> -> vector<8x8x1xf32>
    %54 = vector.broadcast %53 : vector<8x8x1xf32> to vector<8x8x8xf32>
    %55 = arith.mulf %50, %54 : vector<8x8x8xf32>
    "tpu.trace_start"() <{level = 10 : i32, message = "gqk,gkd->gqd"}> : () -> ()
    %cst_26 = arith.constant dense<0.000000e+00> : vector<8x8x8xf32>
    %56 = tpu.matmul %55, %42, %cst_26 {dimension_numbers = #tpu.dot_dimension_numbers<[2], [1], [1], [2], [0, 0, 0, 1, 1, 2], [0], [0]>} : vector<8x8x8xf32>, vector<8x8x8xf32>, vector<8x8x8xf32> -> vector<8x8x8xf32>
    "tpu.trace_stop"() : () -> ()
    %57 = vector.extract_strided_slice %56 {offsets = [0, 0, 0], sizes = [2, 8, 8], strides = [1, 1, 1]} : vector<8x8x8xf32> to vector<2x8x8xf32>
    %58 = vector.extract_strided_slice %56 {offsets = [2, 0, 0], sizes = [2, 8, 8], strides = [1, 1, 1]} : vector<8x8x8xf32> to vector<2x8x8xf32>
    %59 = vector.extract_strided_slice %56 {offsets = [4, 0, 0], sizes = [2, 8, 8], strides = [1, 1, 1]} : vector<8x8x8xf32> to vector<2x8x8xf32>
    %60 = vector.extract_strided_slice %56 {offsets = [6, 0, 0], sizes = [2, 8, 8], strides = [1, 1, 1]} : vector<8x8x8xf32> to vector<2x8x8xf32>
    %61 = tpu.concatenate %57, %58, %59, %60 in 2 : vector<2x8x8xf32>, vector<2x8x8xf32>, vector<2x8x8xf32>, vector<2x8x8xf32> -> vector<2x8x32xf32>
    %62 = vector.shape_cast %61 : vector<2x8x32xf32> to vector<16x32xf32>
    %c0_27 = arith.constant 0 : index
    %c0_28 = arith.constant 0 : index
    %c0_29 = arith.constant 0 : index
    %63 = vector.load %arg9[%c0_27, %c0_28, %c0_29] : memref<1x32x32xf32, #tpu.memory_space<vmem>>, vector<1x32x32xf32>
    %64 = vector.shape_cast %63 : vector<1x32x32xf32> to vector<32x32xf32>
    %cst_30 = arith.constant dense<0.000000e+00> : vector<16x32xf32>
    %65 = tpu.matmul %62, %64, %cst_30 {dimension_numbers = #tpu.dot_dimension_numbers<[1], [0], [0], [1], [0, 0, 1, 1], [], []>} : vector<16x32xf32>, vector<32x32xf32>, vector<16x32xf32> -> vector<16x32xf32>
    %c0_31 = arith.constant 0 : index
    %c0_32 = arith.constant 0 : index
    %c0_33 = arith.constant 0 : index
    %66 = vector.load %arg10[%c0_31, %c0_32, %c0_33] : memref<1x1x32xf32, #tpu.memory_space<vmem>>, vector<1x1x32xf32>
    %67 = vector.shape_cast %66 : vector<1x1x32xf32> to vector<1x32xf32>
    %68 = vector.broadcast %67 : vector<1x32xf32> to vector<16x32xf32>
    %69 = arith.addf %65, %68 : vector<16x32xf32>
    %70 = arith.addf %3, %69 : vector<16x32xf32>
    %c0_34 = arith.constant 0 : index
    %c0_35 = arith.constant 0 : index
    %c0_36 = arith.constant 0 : index
    %71 = vector.load %arg11[%c0_34, %c0_35, %c0_36] : memref<1x1x32xf32, #tpu.memory_space<vmem>>, vector<1x1x32xf32>
    %72 = vector.shape_cast %71 : vector<1x1x32xf32> to vector<1x32xf32>
    %c0_37 = arith.constant 0 : index
    %c0_38 = arith.constant 0 : index
    %c0_39 = arith.constant 0 : index
    %73 = vector.load %arg12[%c0_37, %c0_38, %c0_39] : memref<1x1x32xf32, #tpu.memory_space<vmem>>, vector<1x1x32xf32>
    %74 = vector.shape_cast %73 : vector<1x1x32xf32> to vector<1x32xf32>
    %cst_40 = arith.constant dense<0.000000e+00> : vector<16xf32>
    %75 = vector.multi_reduction <add>, %70, %cst_40 [1] : vector<16x32xf32> to vector<16xf32>
    %76 = vector.shape_cast %75 : vector<16xf32> to vector<16x1xf32>
    %cst_41 = arith.constant 3.200000e+01 : f32
    %77 = vector.broadcast %cst_41 : f32 to vector<16x1xf32>
    %78 = arith.divf %76, %77 : vector<16x1xf32>
    %79 = vector.broadcast %78 : vector<16x1xf32> to vector<16x32xf32>
    %80 = arith.subf %70, %79 : vector<16x32xf32>
    %81 = arith.mulf %80, %80 : vector<16x32xf32>
    %cst_42 = arith.constant dense<0.000000e+00> : vector<16xf32>
    %82 = vector.multi_reduction <add>, %81, %cst_42 [1] : vector<16x32xf32> to vector<16xf32>
    %83 = vector.shape_cast %82 : vector<16xf32> to vector<16x1xf32>
    %cst_43 = arith.constant 3.200000e+01 : f32
    %84 = vector.broadcast %cst_43 : f32 to vector<16x1xf32>
    %85 = arith.divf %83, %84 : vector<16x1xf32>
    %86 = vector.broadcast %78 : vector<16x1xf32> to vector<16x32xf32>
    %87 = arith.subf %70, %86 : vector<16x32xf32>
    %cst_44 = arith.constant 9.99999974E-6 : f32
    %88 = vector.broadcast %cst_44 : f32 to vector<16x1xf32>
    %89 = arith.addf %85, %88 : vector<16x1xf32>
    %90 = math.rsqrt %89 : vector<16x1xf32>
    %91 = vector.broadcast %90 : vector<16x1xf32> to vector<16x32xf32>
    %92 = arith.mulf %87, %91 : vector<16x32xf32>
    %93 = vector.broadcast %72 : vector<1x32xf32> to vector<16x32xf32>
    %94 = arith.mulf %92, %93 : vector<16x32xf32>
    %95 = vector.broadcast %74 : vector<1x32xf32> to vector<16x32xf32>
    %96 = arith.addf %94, %95 : vector<16x32xf32>
    %c0_45 = arith.constant 0 : index
    %c0_46 = arith.constant 0 : index
    %c0_47 = arith.constant 0 : index
    %97 = vector.load %arg13[%c0_45, %c0_46, %c0_47] : memref<1x32x64xf32, #tpu.memory_space<vmem>>, vector<1x32x64xf32>
    %98 = vector.shape_cast %97 : vector<1x32x64xf32> to vector<32x64xf32>
    %cst_48 = arith.constant dense<0.000000e+00> : vector<16x64xf32>
    %99 = tpu.matmul %96, %98, %cst_48 {dimension_numbers = #tpu.dot_dimension_numbers<[1], [0], [0], [1], [0, 0, 1, 1], [], []>} : vector<16x32xf32>, vector<32x64xf32>, vector<16x64xf32> -> vector<16x64xf32>
    %c0_49 = arith.constant 0 : index
    %c0_50 = arith.constant 0 : index
    %c0_51 = arith.constant 0 : index
    %100 = vector.load %arg14[%c0_49, %c0_50, %c0_51] : memref<1x1x64xf32, #tpu.memory_space<vmem>>, vector<1x1x64xf32>
    %101 = vector.shape_cast %100 : vector<1x1x64xf32> to vector<1x64xf32>
    %102 = vector.broadcast %101 : vector<1x64xf32> to vector<16x64xf32>
    %103 = arith.addf %99, %102 : vector<16x64xf32>
    %cst_52 = arith.constant 0.000000e+00 : f32
    %104 = vector.broadcast %cst_52 : f32 to vector<16x64xf32>
    %105 = arith.maximumf %103, %104 : vector<16x64xf32>
    %c0_53 = arith.constant 0 : index
    %c0_54 = arith.constant 0 : index
    %c0_55 = arith.constant 0 : index
    %106 = vector.load %arg15[%c0_53, %c0_54, %c0_55] : memref<1x64x32xf32, #tpu.memory_space<vmem>>, vector<1x64x32xf32>
    %107 = vector.shape_cast %106 : vector<1x64x32xf32> to vector<64x32xf32>
    %cst_56 = arith.constant dense<0.000000e+00> : vector<16x32xf32>
    %108 = tpu.matmul %105, %107, %cst_56 {dimension_numbers = #tpu.dot_dimension_numbers<[1], [0], [0], [1], [0, 0, 1, 1], [], []>} : vector<16x64xf32>, vector<64x32xf32>, vector<16x32xf32> -> vector<16x32xf32>
    %c0_57 = arith.constant 0 : index
    %c0_58 = arith.constant 0 : index
    %c0_59 = arith.constant 0 : index
    %109 = vector.load %arg16[%c0_57, %c0_58, %c0_59] : memref<1x1x32xf32, #tpu.memory_space<vmem>>, vector<1x1x32xf32>
    %110 = vector.shape_cast %109 : vector<1x1x32xf32> to vector<1x32xf32>
    %111 = vector.broadcast %110 : vector<1x32xf32> to vector<16x32xf32>
    %112 = arith.addf %108, %111 : vector<16x32xf32>
    %113 = arith.addf %96, %112 : vector<16x32xf32>
    %c0_60 = arith.constant 0 : index
    %c0_61 = arith.constant 0 : index
    %c0_62 = arith.constant 0 : index
    %114 = vector.load %arg17[%c0_60, %c0_61, %c0_62] : memref<1x1x32xf32, #tpu.memory_space<vmem>>, vector<1x1x32xf32>
    %115 = vector.shape_cast %114 : vector<1x1x32xf32> to vector<1x32xf32>
    %c0_63 = arith.constant 0 : index
    %c0_64 = arith.constant 0 : index
    %c0_65 = arith.constant 0 : index
    %116 = vector.load %arg18[%c0_63, %c0_64, %c0_65] : memref<1x1x32xf32, #tpu.memory_space<vmem>>, vector<1x1x32xf32>
    %117 = vector.shape_cast %116 : vector<1x1x32xf32> to vector<1x32xf32>
    %cst_66 = arith.constant dense<0.000000e+00> : vector<16xf32>
    %118 = vector.multi_reduction <add>, %113, %cst_66 [1] : vector<16x32xf32> to vector<16xf32>
    %119 = vector.shape_cast %118 : vector<16xf32> to vector<16x1xf32>
    %cst_67 = arith.constant 3.200000e+01 : f32
    %120 = vector.broadcast %cst_67 : f32 to vector<16x1xf32>
    %121 = arith.divf %119, %120 : vector<16x1xf32>
    %122 = vector.broadcast %121 : vector<16x1xf32> to vector<16x32xf32>
    %123 = arith.subf %113, %122 : vector<16x32xf32>
    %124 = arith.mulf %123, %123 : vector<16x32xf32>
    %cst_68 = arith.constant dense<0.000000e+00> : vector<16xf32>
    %125 = vector.multi_reduction <add>, %124, %cst_68 [1] : vector<16x32xf32> to vector<16xf32>
    %126 = vector.shape_cast %125 : vector<16xf32> to vector<16x1xf32>
    %cst_69 = arith.constant 3.200000e+01 : f32
    %127 = vector.broadcast %cst_69 : f32 to vector<16x1xf32>
    %128 = arith.divf %126, %127 : vector<16x1xf32>
    %129 = vector.broadcast %121 : vector<16x1xf32> to vector<16x32xf32>
    %130 = arith.subf %113, %129 : vector<16x32xf32>
    %cst_70 = arith.constant 9.99999974E-6 : f32
    %131 = vector.broadcast %cst_70 : f32 to vector<16x1xf32>
    %132 = arith.addf %128, %131 : vector<16x1xf32>
    %133 = math.rsqrt %132 : vector<16x1xf32>
    %134 = vector.broadcast %133 : vector<16x1xf32> to vector<16x32xf32>
    %135 = arith.mulf %130, %134 : vector<16x32xf32>
    %136 = vector.broadcast %115 : vector<1x32xf32> to vector<16x32xf32>
    %137 = arith.mulf %135, %136 : vector<16x32xf32>
    %138 = vector.broadcast %117 : vector<1x32xf32> to vector<16x32xf32>
    %139 = arith.addf %137, %138 : vector<16x32xf32>
    %c0_71 = arith.constant 0 : index
    %c0_72 = arith.constant 0 : index
    %140 = vector.load %arg20[%c0_71, %c0_72] : memref<16x32xf32, #tpu.memory_space<vmem>>, vector<16x32xf32>
    tpu.vector_store %arg20[%c0_71, %c0_72], %139 {strides = array<i32>} : memref<16x32xf32, #tpu.memory_space<vmem>>, vector<16x32xf32>,
    %c1_i32 = arith.constant 1 : i32
    %141 = arith.cmpi eq, %arg1, %c1_i32 : i32
    %142 = arith.extui %141 : i1 to i32
    %c0_i32_73 = arith.constant 0 : i32
    %143 = arith.cmpi ne, %142, %c0_i32_73 : i32
    scf.if %143 {
      %144 = vector.shape_cast %139 : vector<16x32xf32> to vector<2x8x32xf32>
      %c0_74 = arith.constant 0 : index
      %c0_75 = arith.constant 0 : index
      %c0_76 = arith.constant 0 : index
      %145 = vector.load %arg19[%c0_74, %c0_75, %c0_76] : memref<2x8x32xf32, #tpu.memory_space<vmem>>, vector<2x8x32xf32>
      tpu.vector_store %arg19[%c0_74, %c0_75, %c0_76], %144 {strides = array<i32>} : memref<2x8x32xf32, #tpu.memory_space<vmem>>, vector<2x8x32xf32>,
    } else {
    }
    return
  }
  func.func @transform_0(%arg0: i32, %arg1: i32) -> (i32, i32, i32) {
    %c0_i32 = arith.constant 0 : i32
    %c0_i32_0 = arith.constant 0 : i32
    %c0_i32_1 = arith.constant 0 : i32
    return %arg0, %c0_i32, %c0_i32_0 : i32, i32, i32
  }
  func.func @transform_1(%arg0: i32, %arg1: i32) -> (i32, i32, i32) {
    %c0_i32 = arith.constant 0 : i32
    %c0_i32_0 = arith.constant 0 : i32
    %c0_i32_1 = arith.constant 0 : i32
    return %arg1, %c0_i32, %c0_i32_0 : i32, i32, i32
  }
  func.func @transform_2(%arg0: i32, %arg1: i32) -> (i32, i32, i32) {
    %c0_i32 = arith.constant 0 : i32
    %c0_i32_0 = arith.constant 0 : i32
    %c0_i32_1 = arith.constant 0 : i32
    return %arg1, %c0_i32, %c0_i32_0 : i32, i32, i32
  }
  func.func @transform_3(%arg0: i32, %arg1: i32) -> (i32, i32, i32) {
    %c0_i32 = arith.constant 0 : i32
    %c0_i32_0 = arith.constant 0 : i32
    %c0_i32_1 = arith.constant 0 : i32
    return %arg1, %c0_i32, %c0_i32_0 : i32, i32, i32
  }
  func.func @transform_4(%arg0: i32, %arg1: i32) -> (i32, i32, i32) {
    %c0_i32 = arith.constant 0 : i32
    %c0_i32_0 = arith.constant 0 : i32
    %c0_i32_1 = arith.constant 0 : i32
    return %arg1, %c0_i32, %c0_i32_0 : i32, i32, i32
  }
  func.func @transform_5(%arg0: i32, %arg1: i32) -> (i32, i32, i32) {
    %c0_i32 = arith.constant 0 : i32
    %c0_i32_0 = arith.constant 0 : i32
    %c0_i32_1 = arith.constant 0 : i32
    return %arg1, %c0_i32, %c0_i32_0 : i32, i32, i32
  }
  func.func @transform_6(%arg0: i32, %arg1: i32) -> (i32, i32, i32) {
    %c0_i32 = arith.constant 0 : i32
    %c0_i32_0 = arith.constant 0 : i32
    %c0_i32_1 = arith.constant 0 : i32
    return %arg1, %c0_i32, %c0_i32_0 : i32, i32, i32
  }
  func.func @transform_7(%arg0: i32, %arg1: i32) -> (i32, i32, i32) {
    %c0_i32 = arith.constant 0 : i32
    %c0_i32_0 = arith.constant 0 : i32
    %c0_i32_1 = arith.constant 0 : i32
    return %arg1, %c0_i32, %c0_i32_0 : i32, i32, i32
  }
  func.func @transform_8(%arg0: i32, %arg1: i32) -> (i32, i32, i32) {
    %c0_i32 = arith.constant 0 : i32
    %c0_i32_0 = arith.constant 0 : i32
    %c0_i32_1 = arith.constant 0 : i32
    return %arg1, %c0_i32, %c0_i32_0 : i32, i32, i32
  }
  func.func @transform_9(%arg0: i32, %arg1: i32) -> (i32, i32, i32) {
    %c0_i32 = arith.constant 0 : i32
    %c0_i32_0 = arith.constant 0 : i32
    %c0_i32_1 = arith.constant 0 : i32
    return %arg1, %c0_i32, %c0_i32_0 : i32, i32, i32
  }
  func.func @transform_10(%arg0: i32, %arg1: i32) -> (i32, i32, i32) {
    %c0_i32 = arith.constant 0 : i32
    %c0_i32_0 = arith.constant 0 : i32
    %c0_i32_1 = arith.constant 0 : i32
    return %arg1, %c0_i32, %c0_i32_0 : i32, i32, i32
  }
  func.func @transform_11(%arg0: i32, %arg1: i32) -> (i32, i32, i32) {
    %c0_i32 = arith.constant 0 : i32
    %c0_i32_0 = arith.constant 0 : i32
    %c0_i32_1 = arith.constant 0 : i32
    return %arg1, %c0_i32, %c0_i32_0 : i32, i32, i32
  }
  func.func @transform_12(%arg0: i32, %arg1: i32) -> (i32, i32, i32) {
    %c0_i32 = arith.constant 0 : i32
    %c0_i32_0 = arith.constant 0 : i32
    %c0_i32_1 = arith.constant 0 : i32
    return %arg1, %c0_i32, %c0_i32_0 : i32, i32, i32
  }
  func.func @transform_13(%arg0: i32, %arg1: i32) -> (i32, i32, i32) {
    %c0_i32 = arith.constant 0 : i32
    %c0_i32_0 = arith.constant 0 : i32
    %c0_i32_1 = arith.constant 0 : i32
    return %arg1, %c0_i32, %c0_i32_0 : i32, i32, i32
  }
  func.func @transform_14(%arg0: i32, %arg1: i32) -> (i32, i32, i32) {
    %c0_i32 = arith.constant 0 : i32
    %c0_i32_0 = arith.constant 0 : i32
    %c0_i32_1 = arith.constant 0 : i32
    return %arg1, %c0_i32, %c0_i32_0 : i32, i32, i32
  }
  func.func @transform_15(%arg0: i32, %arg1: i32) -> (i32, i32, i32) {
    %c0_i32 = arith.constant 0 : i32
    %c0_i32_0 = arith.constant 0 : i32
    %c0_i32_1 = arith.constant 0 : i32
    return %arg1, %c0_i32, %c0_i32_0 : i32, i32, i32
  }
  func.func @transform_16(%arg0: i32, %arg1: i32) -> (i32, i32, i32) {
    %c0_i32 = arith.constant 0 : i32
    %c0_i32_0 = arith.constant 0 : i32
    %c0_i32_1 = arith.constant 0 : i32
    return %arg1, %c0_i32, %c0_i32_0 : i32, i32, i32
  }
  func.func @transform_17(%arg0: i32, %arg1: i32) -> (i32, i32, i32) {
    %c0_i32 = arith.constant 0 : i32
    %c0_i32_0 = arith.constant 0 : i32
    %c0_i32_1 = arith.constant 0 : i32
    return %arg0, %c0_i32, %c0_i32_0 : i32, i32, i32
  }
}

</mosaic_0001>

<llo_original>
// kernel: tpu_custom_call.1
$region0: #{tpu_custom_call.1}
  #allocation0 [shape = 'u32[]', space=smem, size = 0x4, offset = 0x4, fixed_abs, tag = 'smem constant byte address 0x4 - core index']
  #allocation1 [shape = 'u32[144,128]{1,0:T(1,128)}', space=vmem, size = 0x12000, scoped, tag = 'internal scratch']
  #allocation2 [shape = 'f32[16,32]{1,0:T(8,128)}', space=vmem, size = 0x2000, scoped, tag = 'scratch operand']
  %s0 = inlined_call_operand.hbm [shape: f32[2,8,32], index: 0, kind: input, shape index: {}]
  %s1 = inlined_call_operand.vmem [shape: f32[2,32,32], index: 1, kind: input, shape index: {}]
  %s2 = inlined_call_operand.vmem [shape: f32[2,1,32], index: 2, kind: input, shape index: {}]
  %s3 = inlined_call_operand.vmem [shape: f32[2,32,32], index: 3, kind: input, shape index: {}]
  %s4 = inlined_call_operand.vmem [shape: f32[2,1,32], index: 4, kind: input, shape index: {}]
  %s5 = inlined_call_operand.vmem [shape: f32[2,32,32], index: 5, kind: input, shape index: {}]
  %s6 = inlined_call_operand.vmem [shape: f32[2,1,32], index: 6, kind: input, shape index: {}]
  %s7 = inlined_call_operand.hbm [shape: f32[2,32,32], index: 7, kind: input, shape index: {}]
  %s8 = inlined_call_operand.vmem [shape: f32[2,1,32], index: 8, kind: input, shape index: {}]
  %s9 = inlined_call_operand.vmem [shape: f32[2,1,32], index: 9, kind: input, shape index: {}]
  %s10 = inlined_call_operand.vmem [shape: f32[2,1,32], index: 10, kind: input, shape index: {}]
  %s11 = inlined_call_operand.hbm [shape: f32[2,32,64], index: 11, kind: input, shape index: {}]
  %s12 = inlined_call_operand.vmem [shape: f32[2,1,64], index: 12, kind: input, shape index: {}]
  %s13 = inlined_call_operand.vmem [shape: f32[2,64,32], index: 13, kind: input, shape index: {}]
  %s14 = inlined_call_operand.vmem [shape: f32[2,1,32], index: 14, kind: input, shape index: {}]
  %s15 = inlined_call_operand.vmem [shape: f32[2,1,32], index: 15, kind: input, shape index: {}]
  %s16 = inlined_call_operand.vmem [shape: f32[2,1,32], index: 16, kind: input, shape index: {}]
  %s17 = inlined_call_operand.hbm [shape: f32[2,8,32], index: 17, kind: output, shape index: {}]
  %s18 = sld [smem:[#allocation0]]
  $region121: #{tpu_custom_call.1} parent=0
    _
  %s20 = ssub.s32 1, %s18
  %s21 = scalar_select 0, %s20, %s18
  $region1: #{tpu_custom_call.1} parent=0
    #allocation3 [shape = 'u8[8192]{0}', space=vmem, size = 0x2000, scoped, tag = 'input window, operand 0, single buffered']
    #allocation4 [shape = 's32[2]{0}', space=sflag, size = 0x8, scoped, tag = 'scoped memory for tpu_custom_call.1']
    #allocation5 [shape = 's32[2]{0}', space=sflag, size = 0x8, scoped, tag = 'scoped memory for tpu_custom_call.1']
    #allocation6 [shape = 'u8[32768]{0}', space=vmem, size = 0x8000, scoped, tag = 'input window, operand 7']
    #allocation7 [shape = 's32[2]{0}', space=sflag, size = 0x8, scoped, tag = 'scoped memory for tpu_custom_call.1']
    #allocation8 [shape = 'u8[32768]{0}', space=vmem, size = 0x8000, scoped, tag = 'input window, operand 11']
    #allocation9 [shape = 'u8[8192]{0}', space=vmem, size = 0x2000, scoped, tag = 'output window, operand 0, single buffered']
    %22 = vsyncpa [#allocation4], 0
    %23 = vsyncpa [#allocation7], 0
    %s24 = scalar_lea.sflag [#allocation7], 1
    %25 = vsyncpa %s24, 0
    %26 = vsyncpa [#allocation5], 0
    loop: start=0, step=1, limit=4
    $region2: #{tpu_custom_call.1} parent=1 // loop_pre_header
      _
    $region3: #{tpu_custom_call.1} parent=1 // loop_header
      %s28 = sphi 0, %s32
      %p29 = scmp.ge.s32.totalorder %s28, 4
      %s35 = sphi 0, %s47
      %s36 = sphi 0, %s43
      %s37 = sphi 0, %s35
      %s38 = sphi 0, %s36
      %s39 = sphi 0, %s37
      %s40 = sphi 0, %s38
      %s50 = sphi 0, %s52
      %s53 = sphi 0, %s50
      %s54 = sphi 0, %s53
      %s70 = sphi 0, %s54
      %s76 = sphi 0, %s78
      %s79 = sphi 0, %s76
      %s80 = sphi 0, %s79
      %s96 = sphi 0, %s80
      %s102 = sphi 0, %s104
      %s105 = sphi 0, %s102
      %s106 = sphi 0, %s105
      %s122 = sphi 0, %s106
      %s128 = sphi 0, %s130
      %s131 = sphi 0, %s128
      %s132 = sphi 0, %s131
      %s148 = sphi 0, %s132
      %s154 = sphi 0, %s156
      %s157 = sphi 0, %s154
      %s158 = sphi 0, %s157
      %s174 = sphi 0, %s158
      %s180 = sphi 0, %s182
      %s183 = sphi 0, %s180
      %s184 = sphi 0, %s183
      %s200 = sphi 0, %s184
      %s206 = sphi 0, %s208
      %s209 = sphi 0, %s206
      %s210 = sphi 0, %s209
      %s226 = sphi 0, %s210
      %s232 = sphi 0, %s234
      %s235 = sphi 0, %s232
      %s236 = sphi 0, %s235
      %s252 = sphi 0, %s236
      %s258 = sphi 0, %s260
      %s261 = sphi 0, %s258
      %s262 = sphi 0, %s261
      %s278 = sphi 0, %s262
      %s284 = sphi 0, %s286
      %s287 = sphi 0, %s284
      %s288 = sphi 0, %s287
      %s304 = sphi 0, %s288
      %s310 = sphi 0, %s312
      %s313 = sphi 0, %s310
      %s314 = sphi 0, %s313
      %s330 = sphi 0, %s314
      %s336 = sphi 0, %s338
      %s339 = sphi 0, %s336
      %s340 = sphi 0, %s339
      %s356 = sphi 0, %s340
      %s362 = sphi 0, %s364
      %s365 = sphi 0, %s362
      %s366 = sphi 0, %s365
      %s382 = sphi 0, %s366
      %s388 = sphi 0, %s390
      %s391 = sphi 0, %s388
      %s392 = sphi 0, %s391
      %s408 = sphi 0, %s392
      %s414 = sphi 0, %s416
      %s417 = sphi 0, %s414
      %s418 = sphi 0, %s417
      %s434 = sphi 0, %s418
      %s440 = sphi 0, %s442
      %s443 = sphi 0, %s440
      %s444 = sphi 0, %s443
      %s460 = sphi 0, %s444
      %s466 = sphi 0, %s468
      %s469 = sphi 0, %s466
      %s470 = sphi 0, %s469
      %s486 = sphi 0, %s470
      %s492 = sphi 0, %s494
      %s495 = sphi 0, %s492
      %s496 = sphi 0, %s495
      %s512 = sphi 0, %s496
    $region4: #{tpu_custom_call.1} parent=1 // loop_header_branch
      %31 = sbr.rel (%p29) target = $region8
    $region5: #{tpu_custom_call.1} parent=1 // loop_body
      %s33 = ssub.s32 %s28, 1
      %s34 = ssub.s32 %s28, 2
      %s41 = sadd.s32 1, %s36
      %p42 = scmp.ge.s32.totalorder %s41, 2
      %s43 = scalar_select %p42, 0, %s41
      %s44 = sadd.s32 1, %s35
      %s45 = scalar_select %p42, %s44, %s35
      %p46 = scmp.ge.s32.totalorder %s45, 1
      %s47 = scalar_select %p46, 0, %s45
      %s48 = ssub.s32 %s35, %s47
      %p49 = scmp.eq.s32.totalorder %s48, 0
      %s51 = sadd.s32 %s50, 1
      %s52 = scalar_select %p49, %s50, %s51
      %p55 = pneg %p49
      %p56 = scmp.eq.s32.totalorder %s28, 1
      %p57 = por %p55, %p56
      %p58 = scmp.ne.s32.totalorder %s50, %s53
      %p59 = scmp.eq.s32.totalorder %s28, 0
      %p60 = por %p58, %p59
      %p61 = scmp.ne.s32.totalorder %s50, %s53
      %p62 = scmp.eq.s32.totalorder %s33, 1
      %p63 = por %p61, %p62
      %p64 = scmp.ne.s32.totalorder %s53, %s54
      %p65 = scmp.eq.s32.totalorder %s33, 0
      %p66 = por %p64, %p65
      %p67 = scmp.ne.s32.totalorder %s53, %s54
      %p68 = scmp.eq.s32.totalorder %s34, 1
      %p69 = por %p67, %p68
      %p71 = scmp.ne.s32.totalorder %s54, %s70
      %p72 = scmp.eq.s32.totalorder %s34, 0
      %p73 = por %p71, %p72
      %s74 = ssub.s32 %s36, %s43
      %p75 = scmp.eq.s32.totalorder %s74, 0
      %s77 = sadd.s32 %s76, 1
      %s78 = scalar_select %p75, %s76, %s77
      %p81 = pneg %p75
      %p82 = scmp.eq.s32.totalorder %s28, 1
      %p83 = por %p81, %p82
      %p84 = scmp.ne.s32.totalorder %s76, %s79
      %p85 = scmp.eq.s32.totalorder %s28, 0
      %p86 = por %p84, %p85
      %p87 = scmp.ne.s32.totalorder %s76, %s79
      %p88 = scmp.eq.s32.totalorder %s33, 1
      %p89 = por %p87, %p88
      %p90 = scmp.ne.s32.totalorder %s79, %s80
      %p91 = scmp.eq.s32.totalorder %s33, 0
      %p92 = por %p90, %p91
      %p93 = scmp.ne.s32.totalorder %s79, %s80
      %p94 = scmp.eq.s32.totalorder %s34, 1
      %p95 = por %p93, %p94
      %p97 = scmp.ne.s32.totalorder %s80, %s96
      %p98 = scmp.eq.s32.totalorder %s34, 0
      %p99 = por %p97, %p98
      %s100 = ssub.s32 %s36, %s43
      %p101 = scmp.eq.s32.totalorder %s100, 0
      %s103 = sadd.s32 %s102, 1
      %s104 = scalar_select %p101, %s102, %s103
      %p107 = pneg %p101
      %p108 = scmp.eq.s32.totalorder %s28, 1
      %p109 = por %p107, %p108
      %p110 = scmp.ne.s32.totalorder %s102, %s105
      %p111 = scmp.eq.s32.totalorder %s28, 0
      %p112 = por %p110, %p111
      %p113 = scmp.ne.s32.totalorder %s102, %s105
      %p114 = scmp.eq.s32.totalorder %s33, 1
      %p115 = por %p113, %p114
      %p116 = scmp.ne.s32.totalorder %s105, %s106
      %p117 = scmp.eq.s32.totalorder %s33, 0
      %p118 = por %p116, %p117
      %p119 = scmp.ne.s32.totalorder %s105, %s106
      %p120 = scmp.eq.s32.totalorder %s34, 1
      %p121 = por %p119, %p120
      %p123 = scmp.ne.s32.totalorder %s106, %s122
      %p124 = scmp.eq.s32.totalorder %s34, 0
      %p125 = por %p123, %p124
      %s126 = ssub.s32 %s36, %s43
      %p127 = scmp.eq.s32.totalorder %s126, 0
      %s129 = sadd.s32 %s128, 1
      %s130 = scalar_select %p127, %s128, %s129
      %p133 = pneg %p127
      %p134 = scmp.eq.s32.totalorder %s28, 1
      %p135 = por %p133, %p134
      %p136 = scmp.ne.s32.totalorder %s128, %s131
      %p137 = scmp.eq.s32.totalorder %s28, 0
      %p138 = por %p136, %p137
      %p139 = scmp.ne.s32.totalorder %s128, %s131
      %p140 = scmp.eq.s32.totalorder %s33, 1
      %p141 = por %p139, %p140
      %p142 = scmp.ne.s32.totalorder %s131, %s132
      %p143 = scmp.eq.s32.totalorder %s33, 0
      %p144 = por %p142, %p143
      %p145 = scmp.ne.s32.totalorder %s131, %s132
      %p146 = scmp.eq.s32.totalorder %s34, 1
      %p147 = por %p145, %p146
      %p149 = scmp.ne.s32.totalorder %s132, %s148
      %p150 = scmp.eq.s32.totalorder %s34, 0
      %p151 = por %p149, %p150
      %s152 = ssub.s32 %s36, %s43
      %p153 = scmp.eq.s32.totalorder %s152, 0
      %s155 = sadd.s32 %s154, 1
      %s156 = scalar_select %p153, %s154, %s155
      %p159 = pneg %p153
      %p160 = scmp.eq.s32.totalorder %s28, 1
      %p161 = por %p159, %p160
      %p162 = scmp.ne.s32.totalorder %s154, %s157
      %p163 = scmp.eq.s32.totalorder %s28, 0
      %p164 = por %p162, %p163
      %p165 = scmp.ne.s32.totalorder %s154, %s157
      %p166 = scmp.eq.s32.totalorder %s33, 1
      %p167 = por %p165, %p166
      %p168 = scmp.ne.s32.totalorder %s157, %s158
      %p169 = scmp.eq.s32.totalorder %s33, 0
      %p170 = por %p168, %p169
      %p171 = scmp.ne.s32.totalorder %s157, %s158
      %p172 = scmp.eq.s32.totalorder %s34, 1
      %p173 = por %p171, %p172
      %p175 = scmp.ne.s32.totalorder %s158, %s174
      %p176 = scmp.eq.s32.totalorder %s34, 0
      %p177 = por %p175, %p176
      %s178 = ssub.s32 %s36, %s43
      %p179 = scmp.eq.s32.totalorder %s178, 0
      %s181 = sadd.s32 %s180, 1
      %s182 = scalar_select %p179, %s180, %s181
      %p185 = pneg %p179
      %p186 = scmp.eq.s32.totalorder %s28, 1
      %p187 = por %p185, %p186
      %p188 = scmp.ne.s32.totalorder %s180, %s183
      %p189 = scmp.eq.s32.totalorder %s28, 0
      %p190 = por %p188, %p189
      %p191 = scmp.ne.s32.totalorder %s180, %s183
      %p192 = scmp.eq.s32.totalorder %s33, 1
      %p193 = por %p191, %p192
      %p194 = scmp.ne.s32.totalorder %s183, %s184
      %p195 = scmp.eq.s32.totalorder %s33, 0
      %p196 = por %p194, %p195
      %p197 = scmp.ne.s32.totalorder %s183, %s184
      %p198 = scmp.eq.s32.totalorder %s34, 1
      %p199 = por %p197, %p198
      %p201 = scmp.ne.s32.totalorder %s184, %s200
      %p202 = scmp.eq.s32.totalorder %s34, 0
      %p203 = por %p201, %p202
      %s204 = ssub.s32 %s36, %s43
      %p205 = scmp.eq.s32.totalorder %s204, 0
      %s207 = sadd.s32 %s206, 1
      %s208 = scalar_select %p205, %s206, %s207
      %p211 = pneg %p205
      %p212 = scmp.eq.s32.totalorder %s28, 1
      %p213 = por %p211, %p212
      %p214 = scmp.ne.s32.totalorder %s206, %s209
      %p215 = scmp.eq.s32.totalorder %s28, 0
      %p216 = por %p214, %p215
      %p217 = scmp.ne.s32.totalorder %s206, %s209
      %p218 = scmp.eq.s32.totalorder %s33, 1
      %p219 = por %p217, %p218
      %p220 = scmp.ne.s32.totalorder %s209, %s210
      %p221 = scmp.eq.s32.totalorder %s33, 0
      %p222 = por %p220, %p221
      %p223 = scmp.ne.s32.totalorder %s209, %s210
      %p224 = scmp.eq.s32.totalorder %s34, 1
      %p225 = por %p223, %p224
      %p227 = scmp.ne.s32.totalorder %s210, %s226
      %p228 = scmp.eq.s32.totalorder %s34, 0
      %p229 = por %p227, %p228
      %s230 = ssub.s32 %s36, %s43
      %p231 = scmp.eq.s32.totalorder %s230, 0
      %s233 = sadd.s32 %s232, 1
      %s234 = scalar_select %p231, %s232, %s233
      %p237 = pneg %p231
      %p238 = scmp.eq.s32.totalorder %s28, 1
      %p239 = por %p237, %p238
      %p240 = scmp.ne.s32.totalorder %s232, %s235
      %p241 = scmp.eq.s32.totalorder %s28, 0
      %p242 = por %p240, %p241
      %p243 = scmp.ne.s32.totalorder %s232, %s235
      %p244 = scmp.eq.s32.totalorder %s33, 1
      %p245 = por %p243, %p244
      %p246 = scmp.ne.s32.totalorder %s235, %s236
      %p247 = scmp.eq.s32.totalorder %s33, 0
      %p248 = por %p246, %p247
      %p249 = scmp.ne.s32.totalorder %s235, %s236
      %p250 = scmp.eq.s32.totalorder %s34, 1
      %p251 = por %p249, %p250
      %p253 = scmp.ne.s32.totalorder %s236, %s252
      %p254 = scmp.eq.s32.totalorder %s34, 0
      %p255 = por %p253, %p254
      %s256 = ssub.s32 %s36, %s43
      %p257 = scmp.eq.s32.totalorder %s256, 0
      %s259 = sadd.s32 %s258, 1
      %s260 = scalar_select %p257, %s258, %s259
      %p263 = pneg %p257
      %p264 = scmp.eq.s32.totalorder %s28, 1
      %p265 = por %p263, %p264
      %p266 = scmp.ne.s32.totalorder %s258, %s261
      %p267 = scmp.eq.s32.totalorder %s28, 0
      %p268 = por %p266, %p267
      %p269 = scmp.ne.s32.totalorder %s258, %s261
      %p270 = scmp.eq.s32.totalorder %s33, 1
      %p271 = por %p269, %p270
      %p272 = scmp.ne.s32.totalorder %s261, %s262
      %p273 = scmp.eq.s32.totalorder %s33, 0
      %p274 = por %p272, %p273
      %p275 = scmp.ne.s32.totalorder %s261, %s262
      %p276 = scmp.eq.s32.totalorder %s34, 1
      %p277 = por %p275, %p276
      %p279 = scmp.ne.s32.totalorder %s262, %s278
      %p280 = scmp.eq.s32.totalorder %s34, 0
      %p281 = por %p279, %p280
      %s282 = ssub.s32 %s36, %s43
      %p283 = scmp.eq.s32.totalorder %s282, 0
      %s285 = sadd.s32 %s284, 1
      %s286 = scalar_select %p283, %s284, %s285
      %p289 = pneg %p283
      %p290 = scmp.eq.s32.totalorder %s28, 1
      %p291 = por %p289, %p290
      %p292 = scmp.ne.s32.totalorder %s284, %s287
      %p293 = scmp.eq.s32.totalorder %s28, 0
      %p294 = por %p292, %p293
      %p295 = scmp.ne.s32.totalorder %s284, %s287
      %p296 = scmp.eq.s32.totalorder %s33, 1
      %p297 = por %p295, %p296
      %p298 = scmp.ne.s32.totalorder %s287, %s288
      %p299 = scmp.eq.s32.totalorder %s33, 0
      %p300 = por %p298, %p299
      %p301 = scmp.ne.s32.totalorder %s287, %s288
      %p302 = scmp.eq.s32.totalorder %s34, 1
      %p303 = por %p301, %p302
      %p305 = scmp.ne.s32.totalorder %s288, %s304
      %p306 = scmp.eq.s32.totalorder %s34, 0
      %p307 = por %p305, %p306
      %s308 = ssub.s32 %s36, %s43
      %p309 = scmp.eq.s32.totalorder %s308, 0
      %s311 = sadd.s32 %s310, 1
      %s312 = scalar_select %p309, %s310, %s311
      %p315 = pneg %p309
      %p316 = scmp.eq.s32.totalorder %s28, 1
      %p317 = por %p315, %p316
      %p318 = scmp.ne.s32.totalorder %s310, %s313
      %p319 = scmp.eq.s32.totalorder %s28, 0
      %p320 = por %p318, %p319
      %p321 = scmp.ne.s32.totalorder %s310, %s313
      %p322 = scmp.eq.s32.totalorder %s33, 1
      %p323 = por %p321, %p322
      %p324 = scmp.ne.s32.totalorder %s313, %s314
      %p325 = scmp.eq.s32.totalorder %s33, 0
      %p326 = por %p324, %p325
      %p327 = scmp.ne.s32.totalorder %s313, %s314
      %p328 = scmp.eq.s32.totalorder %s34, 1
      %p329 = por %p327, %p328
      %p331 = scmp.ne.s32.totalorder %s314, %s330
      %p332 = scmp.eq.s32.totalorder %s34, 0
      %p333 = por %p331, %p332
      %s334 = ssub.s32 %s36, %s43
      %p335 = scmp.eq.s32.totalorder %s334, 0
      %s337 = sadd.s32 %s336, 1
      %s338 = scalar_select %p335, %s336, %s337
      %p341 = pneg %p335
      %p342 = scmp.eq.s32.totalorder %s28, 1
      %p343 = por %p341, %p342
      %p344 = scmp.ne.s32.totalorder %s336, %s339
      %p345 = scmp.eq.s32.totalorder %s28, 0
      %p346 = por %p344, %p345
      %p347 = scmp.ne.s32.totalorder %s336, %s339
      %p348 = scmp.eq.s32.totalorder %s33, 1
      %p349 = por %p347, %p348
      %p350 = scmp.ne.s32.totalorder %s339, %s340
      %p351 = scmp.eq.s32.totalorder %s33, 0
      %p352 = por %p350, %p351
      %p353 = scmp.ne.s32.totalorder %s339, %s340
      %p354 = scmp.eq.s32.totalorder %s34, 1
      %p355 = por %p353, %p354
      %p357 = scmp.ne.s32.totalorder %s340, %s356
      %p358 = scmp.eq.s32.totalorder %s34, 0
      %p359 = por %p357, %p358
      %s360 = ssub.s32 %s36, %s43
      %p361 = scmp.eq.s32.totalorder %s360, 0
      %s363 = sadd.s32 %s362, 1
      %s364 = scalar_select %p361, %s362, %s363
      %p367 = pneg %p361
      %p368 = scmp.eq.s32.totalorder %s28, 1
      %p369 = por %p367, %p368
      %p370 = scmp.ne.s32.totalorder %s362, %s365
      %p371 = scmp.eq.s32.totalorder %s28, 0
      %p372 = por %p370, %p371
      %p373 = scmp.ne.s32.totalorder %s362, %s365
      %p374 = scmp.eq.s32.totalorder %s33, 1
      %p375 = por %p373, %p374
      %p376 = scmp.ne.s32.totalorder %s365, %s366
      %p377 = scmp.eq.s32.totalorder %s33, 0
      %p378 = por %p376, %p377
      %p379 = scmp.ne.s32.totalorder %s365, %s366
      %p380 = scmp.eq.s32.totalorder %s34, 1
      %p381 = por %p379, %p380
      %p383 = scmp.ne.s32.totalorder %s366, %s382
      %p384 = scmp.eq.s32.totalorder %s34, 0
      %p385 = por %p383, %p384
      %s386 = ssub.s32 %s36, %s43
      %p387 = scmp.eq.s32.totalorder %s386, 0
      %s389 = sadd.s32 %s388, 1
      %s390 = scalar_select %p387, %s388, %s389
      %p393 = pneg %p387
      %p394 = scmp.eq.s32.totalorder %s28, 1
      %p395 = por %p393, %p394
      %p396 = scmp.ne.s32.totalorder %s388, %s391
      %p397 = scmp.eq.s32.totalorder %s28, 0
      %p398 = por %p396, %p397
      %p399 = scmp.ne.s32.totalorder %s388, %s391
      %p400 = scmp.eq.s32.totalorder %s33, 1
      %p401 = por %p399, %p400
      %p402 = scmp.ne.s32.totalorder %s391, %s392
      %p403 = scmp.eq.s32.totalorder %s33, 0
      %p404 = por %p402, %p403
      %p405 = scmp.ne.s32.totalorder %s391, %s392
      %p406 = scmp.eq.s32.totalorder %s34, 1
      %p407 = por %p405, %p406
      %p409 = scmp.ne.s32.totalorder %s392, %s408
      %p410 = scmp.eq.s32.totalorder %s34, 0
      %p411 = por %p409, %p410
      %s412 = ssub.s32 %s36, %s43
      %p413 = scmp.eq.s32.totalorder %s412, 0
      %s415 = sadd.s32 %s414, 1
      %s416 = scalar_select %p413, %s414, %s415
      %p419 = pneg %p413
      %p420 = scmp.eq.s32.totalorder %s28, 1
      %p421 = por %p419, %p420
      %p422 = scmp.ne.s32.totalorder %s414, %s417
      %p423 = scmp.eq.s32.totalorder %s28, 0
      %p424 = por %p422, %p423
      %p425 = scmp.ne.s32.totalorder %s414, %s417
      %p426 = scmp.eq.s32.totalorder %s33, 1
      %p427 = por %p425, %p426
      %p428 = scmp.ne.s32.totalorder %s417, %s418
      %p429 = scmp.eq.s32.totalorder %s33, 0
      %p430 = por %p428, %p429
      %p431 = scmp.ne.s32.totalorder %s417, %s418
      %p432 = scmp.eq.s32.totalorder %s34, 1
      %p433 = por %p431, %p432
      %p435 = scmp.ne.s32.totalorder %s418, %s434
      %p436 = scmp.eq.s32.totalorder %s34, 0
      %p437 = por %p435, %p436
      %s438 = ssub.s32 %s36, %s43
      %p439 = scmp.eq.s32.totalorder %s438, 0
      %s441 = sadd.s32 %s440, 1
      %s442 = scalar_select %p439, %s440, %s441
      %p445 = pneg %p439
      %p446 = scmp.eq.s32.totalorder %s28, 1
      %p447 = por %p445, %p446
      %p448 = scmp.ne.s32.totalorder %s440, %s443
      %p449 = scmp.eq.s32.totalorder %s28, 0
      %p450 = por %p448, %p449
      %p451 = scmp.ne.s32.totalorder %s440, %s443
      %p452 = scmp.eq.s32.totalorder %s33, 1
      %p453 = por %p451, %p452
      %p454 = scmp.ne.s32.totalorder %s443, %s444
      %p455 = scmp.eq.s32.totalorder %s33, 0
      %p456 = por %p454, %p455
      %p457 = scmp.ne.s32.totalorder %s443, %s444
      %p458 = scmp.eq.s32.totalorder %s34, 1
      %p459 = por %p457, %p458
      %p461 = scmp.ne.s32.totalorder %s444, %s460
      %p462 = scmp.eq.s32.totalorder %s34, 0
      %p463 = por %p461, %p462
      %s464 = ssub.s32 %s36, %s43
      %p465 = scmp.eq.s32.totalorder %s464, 0
      %s467 = sadd.s32 %s466, 1
      %s468 = scalar_select %p465, %s466, %s467
      %p471 = pneg %p465
      %p472 = scmp.eq.s32.totalorder %s28, 1
      %p473 = por %p471, %p472
      %p474 = scmp.ne.s32.totalorder %s466, %s469
      %p475 = scmp.eq.s32.totalorder %s28, 0
      %p476 = por %p474, %p475
      %p477 = scmp.ne.s32.totalorder %s466, %s469
      %p478 = scmp.eq.s32.totalorder %s33, 1
      %p479 = por %p477, %p478
      %p480 = scmp.ne.s32.totalorder %s469, %s470
      %p481 = scmp.eq.s32.totalorder %s33, 0
      %p482 = por %p480, %p481
      %p483 = scmp.ne.s32.totalorder %s469, %s470
      %p484 = scmp.eq.s32.totalorder %s34, 1
      %p485 = por %p483, %p484
      %p487 = scmp.ne.s32.totalorder %s470, %s486
      %p488 = scmp.eq.s32.totalorder %s34, 0
      %p489 = por %p487, %p488
      %s490 = ssub.s32 %s35, %s47
      %p491 = scmp.eq.s32.totalorder %s490, 0
      %s493 = sadd.s32 %s492, 1
      %s494 = scalar_select %p491, %s492, %s493
      %p497 = pneg %p491
      %p498 = scmp.eq.s32.totalorder %s28, 1
      %p499 = por %p497, %p498
      %p500 = scmp.ne.s32.totalorder %s492, %s495
      %p501 = scmp.eq.s32.totalorder %s28, 0
      %p502 = por %p500, %p501
      %p503 = scmp.ne.s32.totalorder %s492, %s495
      %p504 = scmp.eq.s32.totalorder %s33, 1
      %p505 = por %p503, %p504
      %p506 = scmp.ne.s32.totalorder %s495, %s496
      %p507 = scmp.eq.s32.totalorder %s33, 0
      %p508 = por %p506, %p507
      %p509 = scmp.ne.s32.totalorder %s495, %s496
      %p510 = scmp.eq.s32.totalorder %s34, 1
      %p511 = por %p509, %p510
      %p513 = scmp.ne.s32.totalorder %s496, %s512
      %p514 = scmp.eq.s32.totalorder %s34, 0
      %p515 = por %p513, %p514
      %p516 = scmp.le.s32.totalorder 1, %s28
      %p517 = scmp.lt.s32.totalorder %s28, 3
      %p518 = pnand %p516, %p517
      %p519 = pneg %p518
      // Predicated region
      $region9: #{tpu_custom_call.1} parent=5 // pred_check
        _
      $region10: #{tpu_custom_call.1} parent=5 // pred_check_branch
        %521 = sbr.rel (%p518) target = $region12
      $region11: #{tpu_custom_call.1} parent=5 // pred_region
        %s522 = ssub.s32 %s28, 1
        // Predicated region
        $region13: #{tpu_custom_call.1} parent=11 // pred_check
          %p523 = pneg %p66
        $region14: #{tpu_custom_call.1} parent=11 // pred_check_branch
          %525 = sbr.rel (%p523) target = $region16
        $region15: #{tpu_custom_call.1} parent=11 // pred_region
          %s526 = smul.u32 2, %s37
          %s528 = ssub.s32 256, 256
          %529 = vsyncadd [#allocation4], %s528
          %s530 = smul.addr %s526, 128
          %s531 = scalar_lea.hbm %s0, %s530
          %s532 = sshll.u32 [#allocation3], 4
          %s533 = int_to_ptr.vmem [resolvable:$true] %s532
          %538 = dma.hbm_to_vmem [thread:$0]  %s531, 256, %s533, [#allocation4], 128, 128, 8
        $region16: #{tpu_custom_call.1} parent=11 // pred_fallthru
          _
      $region12: #{tpu_custom_call.1} parent=5 // pred_fallthru
        _
      %p539 = scmp.lt.s32.totalorder %s28, 2
      // Predicated region
      $region17: #{tpu_custom_call.1} parent=5 // pred_check
        %p540 = pneg %p539
      $region18: #{tpu_custom_call.1} parent=5 // pred_check_branch
        %542 = sbr.rel (%p540) target = $region20
      $region19: #{tpu_custom_call.1} parent=5 // pred_region
        // Predicated region
        $region21: #{tpu_custom_call.1} parent=19 // pred_check
          %p543 = pneg %p86
        $region22: #{tpu_custom_call.1} parent=19 // pred_check_branch
          %545 = sbr.rel (%p543) target = $region24
        $region23: #{tpu_custom_call.1} parent=19 // pred_region
          %p546 = scmp.lt.s32.totalorder %s36, 1
          %s547 = scalar_select %p546, %s36, 1
          %s548 = smul.addr %s547, 4
          %s549 = smul.addr %s548, 8
          %s550 = scalar_lea.vmem %s1, %s549
        $region24: #{tpu_custom_call.1} parent=19 // pred_fallthru
          _
        // Predicated region
        $region25: #{tpu_custom_call.1} parent=19 // pred_check
          %p551 = pneg %p112
        $region26: #{tpu_custom_call.1} parent=19 // pred_check_branch
          %553 = sbr.rel (%p551) target = $region28
        $region27: #{tpu_custom_call.1} parent=19 // pred_region
          %p554 = scmp.lt.s32.totalorder %s36, 1
          %s555 = scalar_select %p554, %s36, 1
          %s556 = scalar_lea.vmem %s2, %s555
        $region28: #{tpu_custom_call.1} parent=19 // pred_fallthru
          _
        // Predicated region
        $region29: #{tpu_custom_call.1} parent=19 // pred_check
          %p557 = pneg %p138
        $region30: #{tpu_custom_call.1} parent=19 // pred_check_branch
          %559 = sbr.rel (%p557) target = $region32
        $region31: #{tpu_custom_call.1} parent=19 // pred_region
          %p560 = scmp.lt.s32.totalorder %s36, 1
          %s561 = scalar_select %p560, %s36, 1
          %s562 = smul.addr %s561, 4
          %s563 = smul.addr %s562, 8
          %s564 = scalar_lea.vmem %s3, %s563
        $region32: #{tpu_custom_call.1} parent=19 // pred_fallthru
          _
        // Predicated region
        $region33: #{tpu_custom_call.1} parent=19 // pred_check
          %p565 = pneg %p164
        $region34: #{tpu_custom_call.1} parent=19 // pred_check_branch
          %567 = sbr.rel (%p565) target = $region36
        $region35: #{tpu_custom_call.1} parent=19 // pred_region
          %p568 = scmp.lt.s32.totalorder %s36, 1
          %s569 = scalar_select %p568, %s36, 1
          %s570 = scalar_lea.vmem %s4, %s569
        $region36: #{tpu_custom_call.1} parent=19 // pred_fallthru
          _
        // Predicated region
        $region37: #{tpu_custom_call.1} parent=19 // pred_check
          %p571 = pneg %p190
        $region38: #{tpu_custom_call.1} parent=19 // pred_check_branch
          %573 = sbr.rel (%p571) target = $region40
        $region39: #{tpu_custom_call.1} parent=19 // pred_region
          %p574 = scmp.lt.s32.totalorder %s36, 1
          %s575 = scalar_select %p574, %s36, 1
          %s576 = smul.addr %s575, 4
          %s577 = smul.addr %s576, 8
          %s578 = scalar_lea.vmem %s5, %s577
        $region40: #{tpu_custom_call.1} parent=19 // pred_fallthru
          _
        // Predicated region
        $region41: #{tpu_custom_call.1} parent=19 // pred_check
          %p579 = pneg %p216
        $region42: #{tpu_custom_call.1} parent=19 // pred_check_branch
          %581 = sbr.rel (%p579) target = $region44
        $region43: #{tpu_custom_call.1} parent=19 // pred_region
          %p582 = scmp.lt.s32.totalorder %s36, 1
          %s583 = scalar_select %p582, %s36, 1
          %s584 = scalar_lea.vmem %s6, %s583
        $region44: #{tpu_custom_call.1} parent=19 // pred_fallthru
          _
        // Predicated region
        $region45: #{tpu_custom_call.1} parent=19 // pred_check
          %p585 = pneg %p242
        $region46: #{tpu_custom_call.1} parent=19 // pred_check_branch
          %587 = sbr.rel (%p585) target = $region48
        $region47: #{tpu_custom_call.1} parent=19 // pred_region
          %s588 = sand.u32 %s28, 1
          %s589 = scalar_lea.sflag [#allocation7], %s588
          %s590 = sand.u32 %s232, 1
          %s591 = smul.addr %s590, 32
          %s592 = scalar_lea.vmem [#allocation6], %s591
          %s594 = ssub.s32 512, 512
          %595 = vsyncadd %s589, %s594
          %s596 = smul.addr %s36, 4
          %s597 = smul.addr %s596, 128
          %s598 = scalar_lea.hbm %s7, %s597
          %s599 = sshll.u32 %s592, 4
          %s600 = int_to_ptr.vmem [resolvable:$true] %s599
          %605 = dma.hbm_to_vmem [thread:$0]  %s598, 512, %s600, %s589, 128, 128, 8
        $region48: #{tpu_custom_call.1} parent=19 // pred_fallthru
          _
        // Predicated region
        $region49: #{tpu_custom_call.1} parent=19 // pred_check
          %p606 = pneg %p268
        $region50: #{tpu_custom_call.1} parent=19 // pred_check_branch
          %608 = sbr.rel (%p606) target = $region52
        $region51: #{tpu_custom_call.1} parent=19 // pred_region
          %p609 = scmp.lt.s32.totalorder %s36, 1
          %s610 = scalar_select %p609, %s36, 1
          %s611 = scalar_lea.vmem %s8, %s610
        $region52: #{tpu_custom_call.1} parent=19 // pred_fallthru
          _
        // Predicated region
        $region53: #{tpu_custom_call.1} parent=19 // pred_check
          %p612 = pneg %p294
        $region54: #{tpu_custom_call.1} parent=19 // pred_check_branch
          %614 = sbr.rel (%p612) target = $region56
        $region55: #{tpu_custom_call.1} parent=19 // pred_region
          %p615 = scmp.lt.s32.totalorder %s36, 1
          %s616 = scalar_select %p615, %s36, 1
          %s617 = scalar_lea.vmem %s9, %s616
        $region56: #{tpu_custom_call.1} parent=19 // pred_fallthru
          _
        // Predicated region
        $region57: #{tpu_custom_call.1} parent=19 // pred_check
          %p618 = pneg %p320
        $region58: #{tpu_custom_call.1} parent=19 // pred_check_branch
          %620 = sbr.rel (%p618) target = $region60
        $region59: #{tpu_custom_call.1} parent=19 // pred_region
          %p621 = scmp.lt.s32.totalorder %s36, 1
          %s622 = scalar_select %p621, %s36, 1
          %s623 = scalar_lea.vmem %s10, %s622
        $region60: #{tpu_custom_call.1} parent=19 // pred_fallthru
          _
        // Predicated region
        $region61: #{tpu_custom_call.1} parent=19 // pred_check
          %p624 = pneg %p346
        $region62: #{tpu_custom_call.1} parent=19 // pred_check_branch
          %626 = sbr.rel (%p624) target = $region64
        $region63: #{tpu_custom_call.1} parent=19 // pred_region
          %s627 = sand.u32 %s28, 1
          %s628 = scalar_lea.sflag [#allocation7], %s627
          %s629 = sand.u32 %s336, 1
          %s630 = smul.addr %s629, 32
          %s631 = scalar_lea.vmem [#allocation8], %s630
          %s633 = ssub.s32 512, 512
          %634 = vsyncadd %s628, %s633
          %s635 = smul.addr %s36, 4
          %s636 = smul.addr %s635, 128
          %s637 = scalar_lea.hbm %s11, %s636
          %s638 = sshll.u32 %s631, 4
          %s639 = int_to_ptr.vmem [resolvable:$true] %s638
          %644 = dma.hbm_to_vmem [thread:$0]  %s637, 512, %s639, %s628, 128, 128, 8
        $region64: #{tpu_custom_call.1} parent=19 // pred_fallthru
          _
        // Predicated region
        $region65: #{tpu_custom_call.1} parent=19 // pred_check
          %p645 = pneg %p372
        $region66: #{tpu_custom_call.1} parent=19 // pred_check_branch
          %647 = sbr.rel (%p645) target = $region68
        $region67: #{tpu_custom_call.1} parent=19 // pred_region
          %p648 = scmp.lt.s32.totalorder %s36, 1
          %s649 = scalar_select %p648, %s36, 1
          %s650 = scalar_lea.vmem %s12, %s649
        $region68: #{tpu_custom_call.1} parent=19 // pred_fallthru
          _
        // Predicated region
        $region69: #{tpu_custom_call.1} parent=19 // pred_check
          %p651 = pneg %p398
        $region70: #{tpu_custom_call.1} parent=19 // pred_check_branch
          %653 = sbr.rel (%p651) target = $region72
        $region71: #{tpu_custom_call.1} parent=19 // pred_region
          %p654 = scmp.lt.s32.totalorder %s36, 1
          %s655 = scalar_select %p654, %s36, 1
          %s656 = smul.addr %s655, 8
          %s657 = smul.addr %s656, 8
          %s658 = scalar_lea.vmem %s13, %s657
        $region72: #{tpu_custom_call.1} parent=19 // pred_fallthru
          _
        // Predicated region
        $region73: #{tpu_custom_call.1} parent=19 // pred_check
          %p659 = pneg %p424
        $region74: #{tpu_custom_call.1} parent=19 // pred_check_branch
          %661 = sbr.rel (%p659) target = $region76
        $region75: #{tpu_custom_call.1} parent=19 // pred_region
          %p662 = scmp.lt.s32.totalorder %s36, 1
          %s663 = scalar_select %p662, %s36, 1
          %s664 = scalar_lea.vmem %s14, %s663
        $region76: #{tpu_custom_call.1} parent=19 // pred_fallthru
          _
        // Predicated region
        $region77: #{tpu_custom_call.1} parent=19 // pred_check
          %p665 = pneg %p450
        $region78: #{tpu_custom_call.1} parent=19 // pred_check_branch
          %667 = sbr.rel (%p665) target = $region80
        $region79: #{tpu_custom_call.1} parent=19 // pred_region
          %p668 = scmp.lt.s32.totalorder %s36, 1
          %s669 = scalar_select %p668, %s36, 1
          %s670 = scalar_lea.vmem %s15, %s669
        $region80: #{tpu_custom_call.1} parent=19 // pred_fallthru
          _
        // Predicated region
        $region81: #{tpu_custom_call.1} parent=19 // pred_check
          %p671 = pneg %p476
        $region82: #{tpu_custom_call.1} parent=19 // pred_check_branch
          %673 = sbr.rel (%p671) target = $region84
        $region83: #{tpu_custom_call.1} parent=19 // pred_region
          %p674 = scmp.lt.s32.totalorder %s36, 1
          %s675 = scalar_select %p674, %s36, 1
          %s676 = scalar_lea.vmem %s16, %s675
        $region84: #{tpu_custom_call.1} parent=19 // pred_fallthru
          _
      $region20: #{tpu_custom_call.1} parent=5 // pred_fallthru
        _
      %p677 = scmp.le.s32.totalorder 1, %s28
      %p678 = scmp.lt.s32.totalorder %s28, 3
      %p679 = pnand %p677, %p678
      %p680 = pneg %p679
      // Predicated region
      $region85: #{tpu_custom_call.1} parent=5 // pred_check
        _
      $region86: #{tpu_custom_call.1} parent=5 // pred_check_branch
        %682 = sbr.rel (%p679) target = $region88
      $region87: #{tpu_custom_call.1} parent=5 // pred_region
        %s683 = ssub.s32 %s28, 1
        // Predicated region
        $region89: #{tpu_custom_call.1} parent=87 // pred_check
          %p684 = pneg %p66
        $region90: #{tpu_custom_call.1} parent=87 // pred_check_branch
          %686 = sbr.rel (%p684) target = $region92
        $region91: #{tpu_custom_call.1} parent=87 // pred_region
          %687 = dma.done [#allocation4], 256
        $region92: #{tpu_custom_call.1} parent=87 // pred_fallthru
          _
        %s688 = sand.u32 %s33, 1
        %s689 = scalar_lea.sflag [#allocation7], %s688
        %s690 = sand.u32 %s235, 1
        %s691 = smul.addr %s690, 32
        %s692 = scalar_lea.vmem [#allocation6], %s691
        // Predicated region
        $region93: #{tpu_custom_call.1} parent=87 // pred_check
          %p693 = pneg %p248
        $region94: #{tpu_custom_call.1} parent=87 // pred_check_branch
          %695 = sbr.rel (%p693) target = $region96
        $region95: #{tpu_custom_call.1} parent=87 // pred_region
          %696 = dma.done %s689, 512
        $region96: #{tpu_custom_call.1} parent=87 // pred_fallthru
          _
        %s697 = sand.u32 %s33, 1
        %s698 = scalar_lea.sflag [#allocation7], %s697
        %s699 = sand.u32 %s339, 1
        %s700 = smul.addr %s699, 32
        %s701 = scalar_lea.vmem [#allocation8], %s700
        // Predicated region
        $region97: #{tpu_custom_call.1} parent=87 // pred_check
          %p702 = pneg %p352
        $region98: #{tpu_custom_call.1} parent=87 // pred_check_branch
          %704 = sbr.rel (%p702) target = $region100
        $region99: #{tpu_custom_call.1} parent=87 // pred_region
          %705 = dma.done %s698, 512
        $region100: #{tpu_custom_call.1} parent=87 // pred_fallthru
          _
        %p706 = pneg %p66
        %p707 = pneg %p63
        %p708 = scmp.lt.s32.totalorder %s38, 1
        %s709 = scalar_select %p708, %s38, 1
        %s710 = smul.addr %s709, 4
        %s711 = smul.addr %s710, 8
        %s712 = scalar_lea.vmem %s1, %s711
        %p713 = pneg %p92
        %p714 = pneg %p89
        %p715 = scmp.lt.s32.totalorder %s38, 1
        %s716 = scalar_select %p715, %s38, 1
        %s717 = scalar_lea.vmem %s2, %s716
        %p718 = pneg %p118
        %p719 = pneg %p115
        %p720 = scmp.lt.s32.totalorder %s38, 1
        %s721 = scalar_select %p720, %s38, 1
        %s722 = smul.addr %s721, 4
        %s723 = smul.addr %s722, 8
        %s724 = scalar_lea.vmem %s3, %s723
        %p725 = pneg %p144
        %p726 = pneg %p141
        %p727 = scmp.lt.s32.totalorder %s38, 1
        %s728 = scalar_select %p727, %s38, 1
        %s729 = scalar_lea.vmem %s4, %s728
        %p730 = pneg %p170
        %p731 = pneg %p167
        %p732 = scmp.lt.s32.totalorder %s38, 1
        %s733 = scalar_select %p732, %s38, 1
        %s734 = smul.addr %s733, 4
        %s735 = smul.addr %s734, 8
        %s736 = scalar_lea.vmem %s5, %s735
        %p737 = pneg %p196
        %p738 = pneg %p193
        %p739 = scmp.lt.s32.totalorder %s38, 1
        %s740 = scalar_select %p739, %s38, 1
        %s741 = scalar_lea.vmem %s6, %s740
        %p742 = pneg %p222
        %p743 = pneg %p219
        %s744 = sand.u32 %s33, 1
        %s745 = scalar_lea.sflag [#allocation7], %s744
        %s746 = sand.u32 %s235, 1
        %s747 = smul.addr %s746, 32
        %s748 = scalar_lea.vmem [#allocation6], %s747
        %p749 = pneg %p248
        %p750 = pneg %p245
        %p751 = scmp.lt.s32.totalorder %s38, 1
        %s752 = scalar_select %p751, %s38, 1
        %s753 = scalar_lea.vmem %s8, %s752
        %p754 = pneg %p274
        %p755 = pneg %p271
        %p756 = scmp.lt.s32.totalorder %s38, 1
        %s757 = scalar_select %p756, %s38, 1
        %s758 = scalar_lea.vmem %s9, %s757
        %p759 = pneg %p300
        %p760 = pneg %p297
        %p761 = scmp.lt.s32.totalorder %s38, 1
        %s762 = scalar_select %p761, %s38, 1
        %s763 = scalar_lea.vmem %s10, %s762
        %p764 = pneg %p326
        %p765 = pneg %p323
        %s766 = sand.u32 %s33, 1
        %s767 = scalar_lea.sflag [#allocation7], %s766
        %s768 = sand.u32 %s339, 1
        %s769 = smul.addr %s768, 32
        %s770 = scalar_lea.vmem [#allocation8], %s769
        %p771 = pneg %p352
        %p772 = pneg %p349
        %p773 = scmp.lt.s32.totalorder %s38, 1
        %s774 = scalar_select %p773, %s38, 1
        %s775 = scalar_lea.vmem %s12, %s774
        %p776 = pneg %p378
        %p777 = pneg %p375
        %p778 = scmp.lt.s32.totalorder %s38, 1
        %s779 = scalar_select %p778, %s38, 1
        %s780 = smul.addr %s779, 8
        %s781 = smul.addr %s780, 8
        %s782 = scalar_lea.vmem %s13, %s781
        %p783 = pneg %p404
        %p784 = pneg %p401
        %p785 = scmp.lt.s32.totalorder %s38, 1
        %s786 = scalar_select %p785, %s38, 1
        %s787 = scalar_lea.vmem %s14, %s786
        %p788 = pneg %p430
        %p789 = pneg %p427
        %p790 = scmp.lt.s32.totalorder %s38, 1
        %s791 = scalar_select %p790, %s38, 1
        %s792 = scalar_lea.vmem %s15, %s791
        %p793 = pneg %p456
        %p794 = pneg %p453
        %p795 = scmp.lt.s32.totalorder %s38, 1
        %s796 = scalar_select %p795, %s38, 1
        %s797 = scalar_lea.vmem %s16, %s796
        %p798 = pneg %p482
        %p799 = pneg %p479
        %p800 = pneg %p508
        %p801 = pneg %p505
        %s802 = smul.u32 2, %s37
        %p803 = scmp.lt.s32.totalorder %s38, 1
        %s804 = scalar_select %p803, %s38, 1
        %s805 = smul.addr %s804, 4
        %s806 = smul.addr %s805, 8
        %s807 = scalar_lea.vmem %s1, %s806
        %p808 = scmp.lt.s32.totalorder %s38, 1
        %s809 = scalar_select %p808, %s38, 1
        %s810 = scalar_lea.vmem %s2, %s809
        %p811 = scmp.lt.s32.totalorder %s38, 1
        %s812 = scalar_select %p811, %s38, 1
        %s813 = smul.addr %s812, 4
        %s814 = smul.addr %s813, 8
        %s815 = scalar_lea.vmem %s3, %s814
        %p816 = scmp.lt.s32.totalorder %s38, 1
        %s817 = scalar_select %p816, %s38, 1
        %s818 = scalar_lea.vmem %s4, %s817
        %p819 = scmp.lt.s32.totalorder %s38, 1
        %s820 = scalar_select %p819, %s38, 1
        %s821 = smul.addr %s820, 4
        %s822 = smul.addr %s821, 8
        %s823 = scalar_lea.vmem %s5, %s822
        %p824 = scmp.lt.s32.totalorder %s38, 1
        %s825 = scalar_select %p824, %s38, 1
        %s826 = scalar_lea.vmem %s6, %s825
        %p827 = scmp.lt.s32.totalorder %s38, 1
        %s828 = scalar_select %p827, %s38, 1
        %s829 = scalar_lea.vmem %s8, %s828
        %p830 = scmp.lt.s32.totalorder %s38, 1
        %s831 = scalar_select %p830, %s38, 1
        %s832 = scalar_lea.vmem %s9, %s831
        %p833 = scmp.lt.s32.totalorder %s38, 1
        %s834 = scalar_select %p833, %s38, 1
        %s835 = scalar_lea.vmem %s10, %s834
        %p836 = scmp.lt.s32.totalorder %s38, 1
        %s837 = scalar_select %p836, %s38, 1
        %s838 = scalar_lea.vmem %s12, %s837
        %p839 = scmp.lt.s32.totalorder %s38, 1
        %s840 = scalar_select %p839, %s38, 1
        %s841 = smul.addr %s840, 8
        %s842 = smul.addr %s841, 8
        %s843 = scalar_lea.vmem %s13, %s842
        %p844 = scmp.lt.s32.totalorder %s38, 1
        %s845 = scalar_select %p844, %s38, 1
        %s846 = scalar_lea.vmem %s14, %s845
        %p847 = scmp.lt.s32.totalorder %s38, 1
        %s848 = scalar_select %p847, %s38, 1
        %s849 = scalar_lea.vmem %s15, %s848
        %p850 = scmp.lt.s32.totalorder %s38, 1
        %s851 = scalar_select %p850, %s38, 1
        %s852 = scalar_lea.vmem %s16, %s851
        %s853 = smul.u32 2, %s37
        %p854 = scmp.eq.s32.totalorder %s38, 0
        // Predicated region
        $region101: #{tpu_custom_call.1} parent=87 // pred_check
          %p855 = pneg %p854
        $region102: #{tpu_custom_call.1} parent=87 // pred_check_branch
          %857 = sbr.rel (%p855) target = $region104
        $region103: #{tpu_custom_call.1} parent=87 // pred_region
          %v858 = vld [vmem:[#allocation3] sm:$0xff]
          %v859 = vld [vmem:[#allocation3 + $0x8] sm:$0xff]
          %vm860 = vcmask 261120
          %861 = vst.msk [vmem:[#allocation2] sm:$0xff] %vm860, %v858
          %862 = vst.msk [vmem:[#allocation2 + $0x8] sm:$0xff] %vm860, %v859
        $region104: #{tpu_custom_call.1} parent=87 // pred_fallthru
          _
        %v863 = vld [vmem:[#allocation2] sm:$0xff]
        %v864 = vld [vmem:[#allocation2 + $0x8] sm:$0xff]
        %v865 = vld [vmem:[%s807] sm:$0xff]
        %v866 = vld [vmem:[%s807 + $0x8] sm:$0xff]
        %v867 = vld [vmem:[%s807 + $0x10] sm:$0xff]
        %v868 = vld [vmem:[%s807 + $0x18] sm:$0xff]
        %v869 = vld [vmem:[%s810] sm:$0x1]
        %v871 = vlaneseq
        %v872 = vshrl.u32 %v871, 7
        %v873 = vsub.s32 0, %v872
        %v874 = vrot.slane %v869, %v873
        %vm876 = vcmask 261120
        %v878 = vsel %vm876, %v863, 0
        %v881 = vsel %vm876, %v864, 0
        %883 = vmatprep.subr.mxu0 0.0
        %884 = vmatpush1.msra.mxu0 0.0
        %885 = vmatprep.subr.mxu0 0.0
        %886 = vmatpush1.msra.mxu0 0.0
        %887 = vmatprep.subr.mxu0 0.0
        %888 = vmatpush1.msra.mxu0 0.0
        %889 = vmatprep.subr.mxu0 0.0
        %890 = vmatpush1.msra.mxu0 0.0
        %891 = vmatprep.subr.mxu0 0.0
        %892 = vmatpush1.msra.mxu0 0.0
        %893 = vmatprep.subr.mxu0 0.0
        %894 = vmatpush1.msra.mxu0 0.0
        %895 = vmatprep.subr.mxu0 0.0
        %896 = vmatpush1.msra.mxu0 0.0
        %897 = vmatprep.subr.mxu0 0.0
        %898 = vmatpush1.msra.mxu0 0.0
        %899 = vmatprep.subr.mxu0 0.0
        %900 = vmatpush1.msra.mxu0 0.0
        %901 = vmatprep.subr.mxu0 0.0
        %902 = vmatpush1.msra.mxu0 0.0
        %903 = vmatprep.subr.mxu0 0.0
        %904 = vmatpush1.msra.mxu0 0.0
        %905 = vmatprep.subr.mxu0 0.0
        %906 = vmatpush1.msra.mxu0 0.0
        %907 = vmatprep.subr.mxu0 0.0
        %908 = vmatpush1.msra.mxu0 %v868
        %909 = vmatprep.subr.mxu0 0.0
        %910 = vmatpush1.msra.mxu0 %v867
        %911 = vmatprep.subr.mxu0 0.0
        %912 = vmatpush1.msra.mxu0 %v866
        %913 = vmatprep.subr.mxu0 0.0
        %914 = vmatpush1.msra.mxu0 %v865
        %915 = vmatprep.subr.mxu0 0.0
        %916 = vmatpush2.msra.mxu0 0.0
        %917 = vmatprep.subr.mxu0 0.0
        %918 = vmatpush2.msra.mxu0 0.0
        %919 = vmatprep.subr.mxu0 0.0
        %920 = vmatpush2.msra.mxu0 0.0
        %921 = vmatprep.subr.mxu0 0.0
        %922 = vmatpush2.msra.mxu0 0.0
        %923 = vmatprep.subr.mxu0 0.0
        %924 = vmatpush2.msra.mxu0 0.0
        %925 = vmatprep.subr.mxu0 0.0
        %926 = vmatpush2.msra.mxu0 0.0
        %927 = vmatprep.subr.mxu0 0.0
        %928 = vmatpush2.msra.mxu0 0.0
        %929 = vmatprep.subr.mxu0 0.0
        %930 = vmatpush2.msra.mxu0 0.0
        %931 = vmatprep.subr.mxu0 0.0
        %932 = vmatpush2.msra.mxu0 0.0
        %933 = vmatprep.subr.mxu0 0.0
        %934 = vmatpush2.msra.mxu0 0.0
        %935 = vmatprep.subr.mxu0 0.0
        %936 = vmatpush2.msra.mxu0 0.0
        %937 = vmatprep.subr.mxu0 0.0
        %938 = vmatpush2.msra.mxu0 0.0
        %939 = vmatprep.subr.mxu0 0.0
        %940 = vmatpush2.msra.mxu0 0.0
        %941 = vmatprep.subr.mxu0 0.0
        %942 = vmatpush2.msra.mxu0 0.0
        %943 = vmatprep.subr.mxu0 0.0
        %944 = vmatpush2.msra.mxu0 0.0
        %945 = vmatprep.subr.mxu0 0.0
        %946 = vmatpush2.msra.mxu0 0.0
        %947 = vmatprep.mubr.f32.mxu0 0.0
        %948 = vmatmul.mubr.f32.gmra.mxu0 %v878
        %v949 = vpop.f32.mrf.mxu0
        %v950 = vadd.f32 %v874, %v949
        %v951 = vpop.f32.mrf.mxu0
        %952 = vmatprep.mubr.f32.mxu0 0.0
        %953 = vmatmul.mubr.f32.gmra.mxu0 %v881
        %v954 = vpop.f32.mrf.mxu0
        %v955 = vadd.f32 %v874, %v954
        %v956 = vpop.f32.mrf.mxu0
        %957 = vdwg.mxu0
        %v958 = vld [vmem:[%s815] sm:$0xff]
        %v959 = vld [vmem:[%s815 + $0x8] sm:$0xff]
        %v960 = vld [vmem:[%s815 + $0x10] sm:$0xff]
        %v961 = vld [vmem:[%s815 + $0x18] sm:$0xff]
        %v962 = vld [vmem:[%s818] sm:$0x1]
        %v964 = vlaneseq
        %v965 = vshrl.u32 %v964, 7
        %v966 = vsub.s32 0, %v965
        %v967 = vrot.slane %v962, %v966
        %969 = vmatprep.subr.mxu0 0.0
        %970 = vmatpush1.msra.mxu0 0.0
        %971 = vmatprep.subr.mxu0 0.0
        %972 = vmatpush1.msra.mxu0 0.0
        %973 = vmatprep.subr.mxu0 0.0
        %974 = vmatpush1.msra.mxu0 0.0
        %975 = vmatprep.subr.mxu0 0.0
        %976 = vmatpush1.msra.mxu0 0.0
        %977 = vmatprep.subr.mxu0 0.0
        %978 = vmatpush1.msra.mxu0 0.0
        %979 = vmatprep.subr.mxu0 0.0
        %980 = vmatpush1.msra.mxu0 0.0
        %981 = vmatprep.subr.mxu0 0.0
        %982 = vmatpush1.msra.mxu0 0.0
        %983 = vmatprep.subr.mxu0 0.0
        %984 = vmatpush1.msra.mxu0 0.0
        %985 = vmatprep.subr.mxu0 0.0
        %986 = vmatpush1.msra.mxu0 0.0
        %987 = vmatprep.subr.mxu0 0.0
        %988 = vmatpush1.msra.mxu0 0.0
        %989 = vmatprep.subr.mxu0 0.0
        %990 = vmatpush1.msra.mxu0 0.0
        %991 = vmatprep.subr.mxu0 0.0
        %992 = vmatpush1.msra.mxu0 0.0
        %993 = vmatprep.subr.mxu0 0.0
        %994 = vmatpush1.msra.mxu0 %v961
        %995 = vmatprep.subr.mxu0 0.0
        %996 = vmatpush1.msra.mxu0 %v960
        %997 = vmatprep.subr.mxu0 0.0
        %998 = vmatpush1.msra.mxu0 %v959
        %999 = vmatprep.subr.mxu0 0.0
        %1000 = vmatpush1.msra.mxu0 %v958
        %1001 = vmatprep.subr.mxu0 0.0
        %1002 = vmatpush2.msra.mxu0 0.0
        %1003 = vmatprep.subr.mxu0 0.0
        %1004 = vmatpush2.msra.mxu0 0.0
        %1005 = vmatprep.subr.mxu0 0.0
        %1006 = vmatpush2.msra.mxu0 0.0
        %1007 = vmatprep.subr.mxu0 0.0
        %1008 = vmatpush2.msra.mxu0 0.0
        %1009 = vmatprep.subr.mxu0 0.0
        %1010 = vmatpush2.msra.mxu0 0.0
        %1011 = vmatprep.subr.mxu0 0.0
        %1012 = vmatpush2.msra.mxu0 0.0
        %1013 = vmatprep.subr.mxu0 0.0
        %1014 = vmatpush2.msra.mxu0 0.0
        %1015 = vmatprep.subr.mxu0 0.0
        %1016 = vmatpush2.msra.mxu0 0.0
        %1017 = vmatprep.subr.mxu0 0.0
        %1018 = vmatpush2.msra.mxu0 0.0
        %1019 = vmatprep.subr.mxu0 0.0
        %1020 = vmatpush2.msra.mxu0 0.0
        %1021 = vmatprep.subr.mxu0 0.0
        %1022 = vmatpush2.msra.mxu0 0.0
        %1023 = vmatprep.subr.mxu0 0.0
        %1024 = vmatpush2.msra.mxu0 0.0
        %1025 = vmatprep.subr.mxu0 0.0
        %1026 = vmatpush2.msra.mxu0 0.0
        %1027 = vmatprep.subr.mxu0 0.0
        %1028 = vmatpush2.msra.mxu0 0.0
        %1029 = vmatprep.subr.mxu0 0.0
        %1030 = vmatpush2.msra.mxu0 0.0
        %1031 = vmatprep.subr.mxu0 0.0
        %1032 = vmatpush2.msra.mxu0 0.0
        %1033 = vmatprep.mubr.f32.mxu0 0.0
        %1034 = vmatmul.mubr.f32.gmra.mxu0 %v878
        %v1035 = vpop.f32.mrf.mxu0
        %v1036 = vadd.f32 %v967, %v1035
        %v1037 = vpop.f32.mrf.mxu0
        %1038 = vmatprep.mubr.f32.mxu0 0.0
        %1039 = vmatmul.mubr.f32.gmra.mxu0 %v881
        %v1040 = vpop.f32.mrf.mxu0
        %v1041 = vadd.f32 %v967, %v1040
        %v1042 = vpop.f32.mrf.mxu0
        %1043 = vdwg.mxu0
        %v1044 = vld [vmem:[%s823] sm:$0xff]
        %v1045 = vld [vmem:[%s823 + $0x8] sm:$0xff]
        %v1046 = vld [vmem:[%s823 + $0x10] sm:$0xff]
        %v1047 = vld [vmem:[%s823 + $0x18] sm:$0xff]
        %v1048 = vld [vmem:[%s826] sm:$0x1]
        %v1050 = vlaneseq
        %v1051 = vshrl.u32 %v1050, 7
        %v1052 = vsub.s32 0, %v1051
        %v1053 = vrot.slane %v1048, %v1052
        %1055 = vmatprep.subr.mxu0 0.0
        %1056 = vmatpush1.msra.mxu0 0.0
        %1057 = vmatprep.subr.mxu0 0.0
        %1058 = vmatpush1.msra.mxu0 0.0
        %1059 = vmatprep.subr.mxu0 0.0
        %1060 = vmatpush1.msra.mxu0 0.0
        %1061 = vmatprep.subr.mxu0 0.0
        %1062 = vmatpush1.msra.mxu0 0.0
        %1063 = vmatprep.subr.mxu0 0.0
        %1064 = vmatpush1.msra.mxu0 0.0
        %1065 = vmatprep.subr.mxu0 0.0
        %1066 = vmatpush1.msra.mxu0 0.0
        %1067 = vmatprep.subr.mxu0 0.0
        %1068 = vmatpush1.msra.mxu0 0.0
        %1069 = vmatprep.subr.mxu0 0.0
        %1070 = vmatpush1.msra.mxu0 0.0
        %1071 = vmatprep.subr.mxu0 0.0
        %1072 = vmatpush1.msra.mxu0 0.0
        %1073 = vmatprep.subr.mxu0 0.0
        %1074 = vmatpush1.msra.mxu0 0.0
        %1075 = vmatprep.subr.mxu0 0.0
        %1076 = vmatpush1.msra.mxu0 0.0
        %1077 = vmatprep.subr.mxu0 0.0
        %1078 = vmatpush1.msra.mxu0 0.0
        %1079 = vmatprep.subr.mxu0 0.0
        %1080 = vmatpush1.msra.mxu0 %v1047
        %1081 = vmatprep.subr.mxu0 0.0
        %1082 = vmatpush1.msra.mxu0 %v1046
        %1083 = vmatprep.subr.mxu0 0.0
        %1084 = vmatpush1.msra.mxu0 %v1045
        %1085 = vmatprep.subr.mxu0 0.0
        %1086 = vmatpush1.msra.mxu0 %v1044
        %1087 = vmatprep.subr.mxu0 0.0
        %1088 = vmatpush2.msra.mxu0 0.0
        %1089 = vmatprep.subr.mxu0 0.0
        %1090 = vmatpush2.msra.mxu0 0.0
        %1091 = vmatprep.subr.mxu0 0.0
        %1092 = vmatpush2.msra.mxu0 0.0
        %1093 = vmatprep.subr.mxu0 0.0
        %1094 = vmatpush2.msra.mxu0 0.0
        %1095 = vmatprep.subr.mxu0 0.0
        %1096 = vmatpush2.msra.mxu0 0.0
        %1097 = vmatprep.subr.mxu0 0.0
        %1098 = vmatpush2.msra.mxu0 0.0
        %1099 = vmatprep.subr.mxu0 0.0
        %1100 = vmatpush2.msra.mxu0 0.0
        %1101 = vmatprep.subr.mxu0 0.0
        %1102 = vmatpush2.msra.mxu0 0.0
        %1103 = vmatprep.subr.mxu0 0.0
        %1104 = vmatpush2.msra.mxu0 0.0
        %1105 = vmatprep.subr.mxu0 0.0
        %1106 = vmatpush2.msra.mxu0 0.0
        %1107 = vmatprep.subr.mxu0 0.0
        %1108 = vmatpush2.msra.mxu0 0.0
        %1109 = vmatprep.subr.mxu0 0.0
        %1110 = vmatpush2.msra.mxu0 0.0
        %1111 = vmatprep.subr.mxu0 0.0
        %1112 = vmatpush2.msra.mxu0 0.0
        %1113 = vmatprep.subr.mxu0 0.0
        %1114 = vmatpush2.msra.mxu0 0.0
        %1115 = vmatprep.subr.mxu0 0.0
        %1116 = vmatpush2.msra.mxu0 0.0
        %1117 = vmatprep.subr.mxu0 0.0
        %1118 = vmatpush2.msra.mxu0 0.0
        %1119 = vmatprep.mubr.f32.mxu0 0.0
        %1120 = vmatmul.mubr.f32.gmra.mxu0 %v878
        %v1121 = vpop.f32.mrf.mxu0
        %v1122 = vadd.f32 %v1053, %v1121
        %v1123 = vpop.f32.mrf.mxu0
        %1124 = vmatprep.mubr.f32.mxu0 0.0
        %1125 = vmatmul.mubr.f32.gmra.mxu0 %v881
        %v1126 = vpop.f32.mrf.mxu0
        %v1127 = vadd.f32 %v1053, %v1126
        %v1128 = vpop.f32.mrf.mxu0
        %1129 = vdwg.mxu0
        %1132 = vrot.lane.b32.xlu0 %v950, 120
        %v1133 = vpop.permute.xlu0 %1132
        %1134 = vrot.lane.b32.xlu0 %v955, 120
        %v1135 = vpop.permute.xlu0 %1134
        %1138 = vrot.lane.b32.xlu0 %v950, 112
        %v1139 = vpop.permute.xlu0 %1138
        %1140 = vrot.lane.b32.xlu0 %v955, 112
        %v1141 = vpop.permute.xlu0 %1140
        %1144 = vrot.lane.b32.xlu0 %v950, 104
        %v1145 = vpop.permute.xlu0 %1144
        %1146 = vrot.lane.b32.xlu0 %v955, 104
        %v1147 = vpop.permute.xlu0 %1146
        %1152 = vrot.lane.b32.xlu0 %v1036, 120
        %v1153 = vpop.permute.xlu0 %1152
        %1154 = vrot.lane.b32.xlu0 %v1041, 120
        %v1155 = vpop.permute.xlu0 %1154
        %1156 = vrot.lane.b32.xlu0 %v1036, 112
        %v1157 = vpop.permute.xlu0 %1156
        %1158 = vrot.lane.b32.xlu0 %v1041, 112
        %v1159 = vpop.permute.xlu0 %1158
        %1160 = vrot.lane.b32.xlu0 %v1036, 104
        %v1161 = vpop.permute.xlu0 %1160
        %1162 = vrot.lane.b32.xlu0 %v1041, 104
        %v1163 = vpop.permute.xlu0 %1162
        %1166 = vrot.lane.b32.xlu0 %v1122, 120
        %v1167 = vpop.permute.xlu0 %1166
        %1168 = vrot.lane.b32.xlu0 %v1127, 120
        %v1169 = vpop.permute.xlu0 %1168
        %1172 = vrot.lane.b32.xlu0 %v1122, 112
        %v1173 = vpop.permute.xlu0 %1172
        %1174 = vrot.lane.b32.xlu0 %v1127, 112
        %v1175 = vpop.permute.xlu0 %1174
        %1178 = vrot.lane.b32.xlu0 %v1122, 104
        %v1179 = vpop.permute.xlu0 %1178
        %1180 = vrot.lane.b32.xlu0 %v1127, 104
        %v1181 = vpop.permute.xlu0 %1180
        %v1184 = vmul.f32 %v950, 0.35355338
        %v1185 = vmul.f32 %v955, 0.35355338
        %v1186 = vmul.f32 %v1133, 0.35355338
        %v1187 = vmul.f32 %v1135, 0.35355338
        %v1188 = vmul.f32 %v1139, 0.35355338
        %v1189 = vmul.f32 %v1141, 0.35355338
        %v1190 = vmul.f32 %v1145, 0.35355338
        %v1191 = vmul.f32 %v1147, 0.35355338
        %vm1192 = vcmask 64512
        %v1194 = vsel %vm1192, %v1184, 0
        %v1196 = vsel %vm1192, %v1036, 0
        %1198 = vmatprep.subr.mxu0 0.0
        %1199 = vmatpush1.xpose.msra.mxu0 0.0
        %1200 = vmatprep.subr.mxu0 0.0
        %1201 = vmatpush1.xpose.msra.mxu0 0.0
        %1202 = vmatprep.subr.mxu0 0.0
        %1203 = vmatpush1.xpose.msra.mxu0 0.0
        %1204 = vmatprep.subr.mxu0 0.0
        %1205 = vmatpush1.xpose.msra.mxu0 0.0
        %1206 = vmatprep.subr.mxu0 0.0
        %1207 = vmatpush1.xpose.msra.mxu0 0.0
        %1208 = vmatprep.subr.mxu0 0.0
        %1209 = vmatpush1.xpose.msra.mxu0 0.0
        %1210 = vmatprep.subr.mxu0 0.0
        %1211 = vmatpush1.xpose.msra.mxu0 0.0
        %1212 = vmatprep.subr.mxu0 0.0
        %1213 = vmatpush1.xpose.msra.mxu0 0.0
        %1214 = vmatprep.subr.mxu0 0.0
        %1215 = vmatpush1.xpose.msra.mxu0 0.0
        %1216 = vmatprep.subr.mxu0 0.0
        %1217 = vmatpush1.xpose.msra.mxu0 0.0
        %1218 = vmatprep.subr.mxu0 0.0
        %1219 = vmatpush1.xpose.msra.mxu0 0.0
        %1220 = vmatprep.subr.mxu0 0.0
        %1221 = vmatpush1.xpose.msra.mxu0 0.0
        %1222 = vmatprep.subr.mxu0 0.0
        %1223 = vmatpush1.xpose.msra.mxu0 0.0
        %1224 = vmatprep.subr.mxu0 0.0
        %1225 = vmatpush1.xpose.msra.mxu0 0.0
        %1226 = vmatprep.subr.mxu0 0.0
        %1227 = vmatpush1.xpose.msra.mxu0 0.0
        %1228 = vmatprep.subr.mxu0 0.0
        %1229 = vmatpush1.xpose.msra.mxu0 %v1196
        %1230 = vmatprep.subr.mxu0 0.0
        %1231 = vmatpush2.xpose.msra.mxu0 0.0
        %1232 = vmatprep.subr.mxu0 0.0
        %1233 = vmatpush2.xpose.msra.mxu0 0.0
        %1234 = vmatprep.subr.mxu0 0.0
        %1235 = vmatpush2.xpose.msra.mxu0 0.0
        %1236 = vmatprep.subr.mxu0 0.0
        %1237 = vmatpush2.xpose.msra.mxu0 0.0
        %1238 = vmatprep.subr.mxu0 0.0
        %1239 = vmatpush2.xpose.msra.mxu0 0.0
        %1240 = vmatprep.subr.mxu0 0.0
        %1241 = vmatpush2.xpose.msra.mxu0 0.0
        %1242 = vmatprep.subr.mxu0 0.0
        %1243 = vmatpush2.xpose.msra.mxu0 0.0
        %1244 = vmatprep.subr.mxu0 0.0
        %1245 = vmatpush2.xpose.msra.mxu0 0.0
        %1246 = vmatprep.subr.mxu0 0.0
        %1247 = vmatpush2.xpose.msra.mxu0 0.0
        %1248 = vmatprep.subr.mxu0 0.0
        %1249 = vmatpush2.xpose.msra.mxu0 0.0
        %1250 = vmatprep.subr.mxu0 0.0
        %1251 = vmatpush2.xpose.msra.mxu0 0.0
        %1252 = vmatprep.subr.mxu0 0.0
        %1253 = vmatpush2.xpose.msra.mxu0 0.0
        %1254 = vmatprep.subr.mxu0 0.0
        %1255 = vmatpush2.xpose.msra.mxu0 0.0
        %1256 = vmatprep.subr.mxu0 0.0
        %1257 = vmatpush2.xpose.msra.mxu0 0.0
        %1258 = vmatprep.subr.mxu0 0.0
        %1259 = vmatpush2.xpose.msra.mxu0 0.0
        %1260 = vmatprep.subr.mxu0 0.0
        %1261 = vmatpush2.xpose.msra.mxu0 0.0
        %1262 = vmatprep.mubr.f32.mxu0 0.0
        %1263 = vmatmul.mubr.f32.gmra.mxu0 %v1194
        %v1264 = vpop.f32.mrf.mxu0
        %v1265 = vadd.f32 0.0, %v1264
        %v1266 = vpop.f32.mrf.mxu0
        %1267 = vdwg.mxu0
        %v1269 = vsel %vm1192, %v1185, 0
        %v1271 = vsel %vm1192, %v1041, 0
        %1273 = vmatprep.subr.mxu0 0.0
        %1274 = vmatpush1.xpose.msra.mxu0 0.0
        %1275 = vmatprep.subr.mxu0 0.0
        %1276 = vmatpush1.xpose.msra.mxu0 0.0
        %1277 = vmatprep.subr.mxu0 0.0
        %1278 = vmatpush1.xpose.msra.mxu0 0.0
        %1279 = vmatprep.subr.mxu0 0.0
        %1280 = vmatpush1.xpose.msra.mxu0 0.0
        %1281 = vmatprep.subr.mxu0 0.0
        %1282 = vmatpush1.xpose.msra.mxu0 0.0
        %1283 = vmatprep.subr.mxu0 0.0
        %1284 = vmatpush1.xpose.msra.mxu0 0.0
        %1285 = vmatprep.subr.mxu0 0.0
        %1286 = vmatpush1.xpose.msra.mxu0 0.0
        %1287 = vmatprep.subr.mxu0 0.0
        %1288 = vmatpush1.xpose.msra.mxu0 0.0
        %1289 = vmatprep.subr.mxu0 0.0
        %1290 = vmatpush1.xpose.msra.mxu0 0.0
        %1291 = vmatprep.subr.mxu0 0.0
        %1292 = vmatpush1.xpose.msra.mxu0 0.0
        %1293 = vmatprep.subr.mxu0 0.0
        %1294 = vmatpush1.xpose.msra.mxu0 0.0
        %1295 = vmatprep.subr.mxu0 0.0
        %1296 = vmatpush1.xpose.msra.mxu0 0.0
        %1297 = vmatprep.subr.mxu0 0.0
        %1298 = vmatpush1.xpose.msra.mxu0 0.0
        %1299 = vmatprep.subr.mxu0 0.0
        %1300 = vmatpush1.xpose.msra.mxu0 0.0
        %1301 = vmatprep.subr.mxu0 0.0
        %1302 = vmatpush1.xpose.msra.mxu0 0.0
        %1303 = vmatprep.subr.mxu0 0.0
        %1304 = vmatpush1.xpose.msra.mxu0 %v1271
        %1305 = vmatprep.subr.mxu0 0.0
        %1306 = vmatpush2.xpose.msra.mxu0 0.0
        %1307 = vmatprep.subr.mxu0 0.0
        %1308 = vmatpush2.xpose.msra.mxu0 0.0
        %1309 = vmatprep.subr.mxu0 0.0
        %1310 = vmatpush2.xpose.msra.mxu0 0.0
        %1311 = vmatprep.subr.mxu0 0.0
        %1312 = vmatpush2.xpose.msra.mxu0 0.0
        %1313 = vmatprep.subr.mxu0 0.0
        %1314 = vmatpush2.xpose.msra.mxu0 0.0
        %1315 = vmatprep.subr.mxu0 0.0
        %1316 = vmatpush2.xpose.msra.mxu0 0.0
        %1317 = vmatprep.subr.mxu0 0.0
        %1318 = vmatpush2.xpose.msra.mxu0 0.0
        %1319 = vmatprep.subr.mxu0 0.0
        %1320 = vmatpush2.xpose.msra.mxu0 0.0
        %1321 = vmatprep.subr.mxu0 0.0
        %1322 = vmatpush2.xpose.msra.mxu0 0.0
        %1323 = vmatprep.subr.mxu0 0.0
        %1324 = vmatpush2.xpose.msra.mxu0 0.0
        %1325 = vmatprep.subr.mxu0 0.0
        %1326 = vmatpush2.xpose.msra.mxu0 0.0
        %1327 = vmatprep.subr.mxu0 0.0
        %1328 = vmatpush2.xpose.msra.mxu0 0.0
        %1329 = vmatprep.subr.mxu0 0.0
        %1330 = vmatpush2.xpose.msra.mxu0 0.0
        %1331 = vmatprep.subr.mxu0 0.0
        %1332 = vmatpush2.xpose.msra.mxu0 0.0
        %1333 = vmatprep.subr.mxu0 0.0
        %1334 = vmatpush2.xpose.msra.mxu0 0.0
        %1335 = vmatprep.subr.mxu0 0.0
        %1336 = vmatpush2.xpose.msra.mxu0 0.0
        %1337 = vmatprep.mubr.f32.mxu0 0.0
        %1338 = vmatmul.mubr.f32.gmra.mxu0 %v1269
        %v1339 = vpop.f32.mrf.mxu0
        %v1340 = vadd.f32 0.0, %v1339
        %v1341 = vpop.f32.mrf.mxu0
        %1342 = vdwg.mxu0
        %v1344 = vsel %vm1192, %v1186, 0
        %v1346 = vsel %vm1192, %v1153, 0
        %1348 = vmatprep.subr.mxu0 0.0
        %1349 = vmatpush1.xpose.msra.mxu0 0.0
        %1350 = vmatprep.subr.mxu0 0.0
        %1351 = vmatpush1.xpose.msra.mxu0 0.0
        %1352 = vmatprep.subr.mxu0 0.0
        %1353 = vmatpush1.xpose.msra.mxu0 0.0
        %1354 = vmatprep.subr.mxu0 0.0
        %1355 = vmatpush1.xpose.msra.mxu0 0.0
        %1356 = vmatprep.subr.mxu0 0.0
        %1357 = vmatpush1.xpose.msra.mxu0 0.0
        %1358 = vmatprep.subr.mxu0 0.0
        %1359 = vmatpush1.xpose.msra.mxu0 0.0
        %1360 = vmatprep.subr.mxu0 0.0
        %1361 = vmatpush1.xpose.msra.mxu0 0.0
        %1362 = vmatprep.subr.mxu0 0.0
        %1363 = vmatpush1.xpose.msra.mxu0 0.0
        %1364 = vmatprep.subr.mxu0 0.0
        %1365 = vmatpush1.xpose.msra.mxu0 0.0
        %1366 = vmatprep.subr.mxu0 0.0
        %1367 = vmatpush1.xpose.msra.mxu0 0.0
        %1368 = vmatprep.subr.mxu0 0.0
        %1369 = vmatpush1.xpose.msra.mxu0 0.0
        %1370 = vmatprep.subr.mxu0 0.0
        %1371 = vmatpush1.xpose.msra.mxu0 0.0
        %1372 = vmatprep.subr.mxu0 0.0
        %1373 = vmatpush1.xpose.msra.mxu0 0.0
        %1374 = vmatprep.subr.mxu0 0.0
        %1375 = vmatpush1.xpose.msra.mxu0 0.0
        %1376 = vmatprep.subr.mxu0 0.0
        %1377 = vmatpush1.xpose.msra.mxu0 0.0
        %1378 = vmatprep.subr.mxu0 0.0
        %1379 = vmatpush1.xpose.msra.mxu0 %v1346
        %1380 = vmatprep.subr.mxu0 0.0
        %1381 = vmatpush2.xpose.msra.mxu0 0.0
        %1382 = vmatprep.subr.mxu0 0.0
        %1383 = vmatpush2.xpose.msra.mxu0 0.0
        %1384 = vmatprep.subr.mxu0 0.0
        %1385 = vmatpush2.xpose.msra.mxu0 0.0
        %1386 = vmatprep.subr.mxu0 0.0
        %1387 = vmatpush2.xpose.msra.mxu0 0.0
        %1388 = vmatprep.subr.mxu0 0.0
        %1389 = vmatpush2.xpose.msra.mxu0 0.0
        %1390 = vmatprep.subr.mxu0 0.0
        %1391 = vmatpush2.xpose.msra.mxu0 0.0
        %1392 = vmatprep.subr.mxu0 0.0
        %1393 = vmatpush2.xpose.msra.mxu0 0.0
        %1394 = vmatprep.subr.mxu0 0.0
        %1395 = vmatpush2.xpose.msra.mxu0 0.0
        %1396 = vmatprep.subr.mxu0 0.0
        %1397 = vmatpush2.xpose.msra.mxu0 0.0
        %1398 = vmatprep.subr.mxu0 0.0
        %1399 = vmatpush2.xpose.msra.mxu0 0.0
        %1400 = vmatprep.subr.mxu0 0.0
        %1401 = vmatpush2.xpose.msra.mxu0 0.0
        %1402 = vmatprep.subr.mxu0 0.0
        %1403 = vmatpush2.xpose.msra.mxu0 0.0
        %1404 = vmatprep.subr.mxu0 0.0
        %1405 = vmatpush2.xpose.msra.mxu0 0.0
        %1406 = vmatprep.subr.mxu0 0.0
        %1407 = vmatpush2.xpose.msra.mxu0 0.0
        %1408 = vmatprep.subr.mxu0 0.0
        %1409 = vmatpush2.xpose.msra.mxu0 0.0
        %1410 = vmatprep.subr.mxu0 0.0
        %1411 = vmatpush2.xpose.msra.mxu0 0.0
        %1412 = vmatprep.mubr.f32.mxu0 0.0
        %1413 = vmatmul.mubr.f32.gmra.mxu0 %v1344
        %v1414 = vpop.f32.mrf.mxu0
        %v1415 = vadd.f32 0.0, %v1414
        %v1416 = vpop.f32.mrf.mxu0
        %1417 = vdwg.mxu0
        %v1419 = vsel %vm1192, %v1187, 0
        %v1421 = vsel %vm1192, %v1155, 0
        %1423 = vmatprep.subr.mxu0 0.0
        %1424 = vmatpush1.xpose.msra.mxu0 0.0
        %1425 = vmatprep.subr.mxu0 0.0
        %1426 = vmatpush1.xpose.msra.mxu0 0.0
        %1427 = vmatprep.subr.mxu0 0.0
        %1428 = vmatpush1.xpose.msra.mxu0 0.0
        %1429 = vmatprep.subr.mxu0 0.0
        %1430 = vmatpush1.xpose.msra.mxu0 0.0
        %1431 = vmatprep.subr.mxu0 0.0
        %1432 = vmatpush1.xpose.msra.mxu0 0.0
        %1433 = vmatprep.subr.mxu0 0.0
        %1434 = vmatpush1.xpose.msra.mxu0 0.0
        %1435 = vmatprep.subr.mxu0 0.0
        %1436 = vmatpush1.xpose.msra.mxu0 0.0
        %1437 = vmatprep.subr.mxu0 0.0
        %1438 = vmatpush1.xpose.msra.mxu0 0.0
        %1439 = vmatprep.subr.mxu0 0.0
        %1440 = vmatpush1.xpose.msra.mxu0 0.0
        %1441 = vmatprep.subr.mxu0 0.0
        %1442 = vmatpush1.xpose.msra.mxu0 0.0
        %1443 = vmatprep.subr.mxu0 0.0
        %1444 = vmatpush1.xpose.msra.mxu0 0.0
        %1445 = vmatprep.subr.mxu0 0.0
        %1446 = vmatpush1.xpose.msra.mxu0 0.0
        %1447 = vmatprep.subr.mxu0 0.0
        %1448 = vmatpush1.xpose.msra.mxu0 0.0
        %1449 = vmatprep.subr.mxu0 0.0
        %1450 = vmatpush1.xpose.msra.mxu0 0.0
        %1451 = vmatprep.subr.mxu0 0.0
        %1452 = vmatpush1.xpose.msra.mxu0 0.0
        %1453 = vmatprep.subr.mxu0 0.0
        %1454 = vmatpush1.xpose.msra.mxu0 %v1421
        %1455 = vmatprep.subr.mxu0 0.0
        %1456 = vmatpush2.xpose.msra.mxu0 0.0
        %1457 = vmatprep.subr.mxu0 0.0
        %1458 = vmatpush2.xpose.msra.mxu0 0.0
        %1459 = vmatprep.subr.mxu0 0.0
        %1460 = vmatpush2.xpose.msra.mxu0 0.0
        %1461 = vmatprep.subr.mxu0 0.0
        %1462 = vmatpush2.xpose.msra.mxu0 0.0
        %1463 = vmatprep.subr.mxu0 0.0
        %1464 = vmatpush2.xpose.msra.mxu0 0.0
        %1465 = vmatprep.subr.mxu0 0.0
        %1466 = vmatpush2.xpose.msra.mxu0 0.0
        %1467 = vmatprep.subr.mxu0 0.0
        %1468 = vmatpush2.xpose.msra.mxu0 0.0
        %1469 = vmatprep.subr.mxu0 0.0
        %1470 = vmatpush2.xpose.msra.mxu0 0.0
        %1471 = vmatprep.subr.mxu0 0.0
        %1472 = vmatpush2.xpose.msra.mxu0 0.0
        %1473 = vmatprep.subr.mxu0 0.0
        %1474 = vmatpush2.xpose.msra.mxu0 0.0
        %1475 = vmatprep.subr.mxu0 0.0
        %1476 = vmatpush2.xpose.msra.mxu0 0.0
        %1477 = vmatprep.subr.mxu0 0.0
        %1478 = vmatpush2.xpose.msra.mxu0 0.0
        %1479 = vmatprep.subr.mxu0 0.0
        %1480 = vmatpush2.xpose.msra.mxu0 0.0
        %1481 = vmatprep.subr.mxu0 0.0
        %1482 = vmatpush2.xpose.msra.mxu0 0.0
        %1483 = vmatprep.subr.mxu0 0.0
        %1484 = vmatpush2.xpose.msra.mxu0 0.0
        %1485 = vmatprep.subr.mxu0 0.0
        %1486 = vmatpush2.xpose.msra.mxu0 0.0
        %1487 = vmatprep.mubr.f32.mxu0 0.0
        %1488 = vmatmul.mubr.f32.gmra.mxu0 %v1419
        %v1489 = vpop.f32.mrf.mxu0
        %v1490 = vadd.f32 0.0, %v1489
        %v1491 = vpop.f32.mrf.mxu0
        %1492 = vdwg.mxu0
        %v1494 = vsel %vm1192, %v1188, 0
        %v1496 = vsel %vm1192, %v1157, 0
        %1498 = vmatprep.subr.mxu0 0.0
        %1499 = vmatpush1.xpose.msra.mxu0 0.0
        %1500 = vmatprep.subr.mxu0 0.0
        %1501 = vmatpush1.xpose.msra.mxu0 0.0
        %1502 = vmatprep.subr.mxu0 0.0
        %1503 = vmatpush1.xpose.msra.mxu0 0.0
        %1504 = vmatprep.subr.mxu0 0.0
        %1505 = vmatpush1.xpose.msra.mxu0 0.0
        %1506 = vmatprep.subr.mxu0 0.0
        %1507 = vmatpush1.xpose.msra.mxu0 0.0
        %1508 = vmatprep.subr.mxu0 0.0
        %1509 = vmatpush1.xpose.msra.mxu0 0.0
        %1510 = vmatprep.subr.mxu0 0.0
        %1511 = vmatpush1.xpose.msra.mxu0 0.0
        %1512 = vmatprep.subr.mxu0 0.0
        %1513 = vmatpush1.xpose.msra.mxu0 0.0
        %1514 = vmatprep.subr.mxu0 0.0
        %1515 = vmatpush1.xpose.msra.mxu0 0.0
        %1516 = vmatprep.subr.mxu0 0.0
        %1517 = vmatpush1.xpose.msra.mxu0 0.0
        %1518 = vmatprep.subr.mxu0 0.0
        %1519 = vmatpush1.xpose.msra.mxu0 0.0
        %1520 = vmatprep.subr.mxu0 0.0
        %1521 = vmatpush1.xpose.msra.mxu0 0.0
        %1522 = vmatprep.subr.mxu0 0.0
        %1523 = vmatpush1.xpose.msra.mxu0 0.0
        %1524 = vmatprep.subr.mxu0 0.0
        %1525 = vmatpush1.xpose.msra.mxu0 0.0
        %1526 = vmatprep.subr.mxu0 0.0
        %1527 = vmatpush1.xpose.msra.mxu0 0.0
        %1528 = vmatprep.subr.mxu0 0.0
        %1529 = vmatpush1.xpose.msra.mxu0 %v1496
        %1530 = vmatprep.subr.mxu0 0.0
        %1531 = vmatpush2.xpose.msra.mxu0 0.0
        %1532 = vmatprep.subr.mxu0 0.0
        %1533 = vmatpush2.xpose.msra.mxu0 0.0
        %1534 = vmatprep.subr.mxu0 0.0
        %1535 = vmatpush2.xpose.msra.mxu0 0.0
        %1536 = vmatprep.subr.mxu0 0.0
        %1537 = vmatpush2.xpose.msra.mxu0 0.0
        %1538 = vmatprep.subr.mxu0 0.0
        %1539 = vmatpush2.xpose.msra.mxu0 0.0
        %1540 = vmatprep.subr.mxu0 0.0
        %1541 = vmatpush2.xpose.msra.mxu0 0.0
        %1542 = vmatprep.subr.mxu0 0.0
        %1543 = vmatpush2.xpose.msra.mxu0 0.0
        %1544 = vmatprep.subr.mxu0 0.0
        %1545 = vmatpush2.xpose.msra.mxu0 0.0
        %1546 = vmatprep.subr.mxu0 0.0
        %1547 = vmatpush2.xpose.msra.mxu0 0.0
        %1548 = vmatprep.subr.mxu0 0.0
        %1549 = vmatpush2.xpose.msra.mxu0 0.0
        %1550 = vmatprep.subr.mxu0 0.0
        %1551 = vmatpush2.xpose.msra.mxu0 0.0
        %1552 = vmatprep.subr.mxu0 0.0
        %1553 = vmatpush2.xpose.msra.mxu0 0.0
        %1554 = vmatprep.subr.mxu0 0.0
        %1555 = vmatpush2.xpose.msra.mxu0 0.0
        %1556 = vmatprep.subr.mxu0 0.0
        %1557 = vmatpush2.xpose.msra.mxu0 0.0
        %1558 = vmatprep.subr.mxu0 0.0
        %1559 = vmatpush2.xpose.msra.mxu0 0.0
        %1560 = vmatprep.subr.mxu0 0.0
        %1561 = vmatpush2.xpose.msra.mxu0 0.0
        %1562 = vmatprep.mubr.f32.mxu0 0.0
        %1563 = vmatmul.mubr.f32.gmra.mxu0 %v1494
        %v1564 = vpop.f32.mrf.mxu0
        %v1565 = vadd.f32 0.0, %v1564
        %v1566 = vpop.f32.mrf.mxu0
        %1567 = vdwg.mxu0
        %v1569 = vsel %vm1192, %v1189, 0
        %v1571 = vsel %vm1192, %v1159, 0
        %1573 = vmatprep.subr.mxu0 0.0
        %1574 = vmatpush1.xpose.msra.mxu0 0.0
        %1575 = vmatprep.subr.mxu0 0.0
        %1576 = vmatpush1.xpose.msra.mxu0 0.0
        %1577 = vmatprep.subr.mxu0 0.0
        %1578 = vmatpush1.xpose.msra.mxu0 0.0
        %1579 = vmatprep.subr.mxu0 0.0
        %1580 = vmatpush1.xpose.msra.mxu0 0.0
        %1581 = vmatprep.subr.mxu0 0.0
        %1582 = vmatpush1.xpose.msra.mxu0 0.0
        %1583 = vmatprep.subr.mxu0 0.0
        %1584 = vmatpush1.xpose.msra.mxu0 0.0
        %1585 = vmatprep.subr.mxu0 0.0
        %1586 = vmatpush1.xpose.msra.mxu0 0.0
        %1587 = vmatprep.subr.mxu0 0.0
        %1588 = vmatpush1.xpose.msra.mxu0 0.0
        %1589 = vmatprep.subr.mxu0 0.0
        %1590 = vmatpush1.xpose.msra.mxu0 0.0
        %1591 = vmatprep.subr.mxu0 0.0
        %1592 = vmatpush1.xpose.msra.mxu0 0.0
        %1593 = vmatprep.subr.mxu0 0.0
        %1594 = vmatpush1.xpose.msra.mxu0 0.0
        %1595 = vmatprep.subr.mxu0 0.0
        %1596 = vmatpush1.xpose.msra.mxu0 0.0
        %1597 = vmatprep.subr.mxu0 0.0
        %1598 = vmatpush1.xpose.msra.mxu0 0.0
        %1599 = vmatprep.subr.mxu0 0.0
        %1600 = vmatpush1.xpose.msra.mxu0 0.0
        %1601 = vmatprep.subr.mxu0 0.0
        %1602 = vmatpush1.xpose.msra.mxu0 0.0
        %1603 = vmatprep.subr.mxu0 0.0
        %1604 = vmatpush1.xpose.msra.mxu0 %v1571
        %1605 = vmatprep.subr.mxu0 0.0
        %1606 = vmatpush2.xpose.msra.mxu0 0.0
        %1607 = vmatprep.subr.mxu0 0.0
        %1608 = vmatpush2.xpose.msra.mxu0 0.0
        %1609 = vmatprep.subr.mxu0 0.0
        %1610 = vmatpush2.xpose.msra.mxu0 0.0
        %1611 = vmatprep.subr.mxu0 0.0
        %1612 = vmatpush2.xpose.msra.mxu0 0.0
        %1613 = vmatprep.subr.mxu0 0.0
        %1614 = vmatpush2.xpose.msra.mxu0 0.0
        %1615 = vmatprep.subr.mxu0 0.0
        %1616 = vmatpush2.xpose.msra.mxu0 0.0
        %1617 = vmatprep.subr.mxu0 0.0
        %1618 = vmatpush2.xpose.msra.mxu0 0.0
        %1619 = vmatprep.subr.mxu0 0.0
        %1620 = vmatpush2.xpose.msra.mxu0 0.0
        %1621 = vmatprep.subr.mxu0 0.0
        %1622 = vmatpush2.xpose.msra.mxu0 0.0
        %1623 = vmatprep.subr.mxu0 0.0
        %1624 = vmatpush2.xpose.msra.mxu0 0.0
        %1625 = vmatprep.subr.mxu0 0.0
        %1626 = vmatpush2.xpose.msra.mxu0 0.0
        %1627 = vmatprep.subr.mxu0 0.0
        %1628 = vmatpush2.xpose.msra.mxu0 0.0
        %1629 = vmatprep.subr.mxu0 0.0
        %1630 = vmatpush2.xpose.msra.mxu0 0.0
        %1631 = vmatprep.subr.mxu0 0.0
        %1632 = vmatpush2.xpose.msra.mxu0 0.0
        %1633 = vmatprep.subr.mxu0 0.0
        %1634 = vmatpush2.xpose.msra.mxu0 0.0
        %1635 = vmatprep.subr.mxu0 0.0
        %1636 = vmatpush2.xpose.msra.mxu0 0.0
        %1637 = vmatprep.mubr.f32.mxu0 0.0
        %1638 = vmatmul.mubr.f32.gmra.mxu0 %v1569
        %v1639 = vpop.f32.mrf.mxu0
        %v1640 = vadd.f32 0.0, %v1639
        %v1641 = vpop.f32.mrf.mxu0
        %1642 = vdwg.mxu0
        %v1644 = vsel %vm1192, %v1190, 0
        %v1646 = vsel %vm1192, %v1161, 0
        %1648 = vmatprep.subr.mxu0 0.0
        %1649 = vmatpush1.xpose.msra.mxu0 0.0
        %1650 = vmatprep.subr.mxu0 0.0
        %1651 = vmatpush1.xpose.msra.mxu0 0.0
        %1652 = vmatprep.subr.mxu0 0.0
        %1653 = vmatpush1.xpose.msra.mxu0 0.0
        %1654 = vmatprep.subr.mxu0 0.0
        %1655 = vmatpush1.xpose.msra.mxu0 0.0
        %1656 = vmatprep.subr.mxu0 0.0
        %1657 = vmatpush1.xpose.msra.mxu0 0.0
        %1658 = vmatprep.subr.mxu0 0.0
        %1659 = vmatpush1.xpose.msra.mxu0 0.0
        %1660 = vmatprep.subr.mxu0 0.0
        %1661 = vmatpush1.xpose.msra.mxu0 0.0
        %1662 = vmatprep.subr.mxu0 0.0
        %1663 = vmatpush1.xpose.msra.mxu0 0.0
        %1664 = vmatprep.subr.mxu0 0.0
        %1665 = vmatpush1.xpose.msra.mxu0 0.0
        %1666 = vmatprep.subr.mxu0 0.0
        %1667 = vmatpush1.xpose.msra.mxu0 0.0
        %1668 = vmatprep.subr.mxu0 0.0
        %1669 = vmatpush1.xpose.msra.mxu0 0.0
        %1670 = vmatprep.subr.mxu0 0.0
        %1671 = vmatpush1.xpose.msra.mxu0 0.0
        %1672 = vmatprep.subr.mxu0 0.0
        %1673 = vmatpush1.xpose.msra.mxu0 0.0
        %1674 = vmatprep.subr.mxu0 0.0
        %1675 = vmatpush1.xpose.msra.mxu0 0.0
        %1676 = vmatprep.subr.mxu0 0.0
        %1677 = vmatpush1.xpose.msra.mxu0 0.0
        %1678 = vmatprep.subr.mxu0 0.0
        %1679 = vmatpush1.xpose.msra.mxu0 %v1646
        %1680 = vmatprep.subr.mxu0 0.0
        %1681 = vmatpush2.xpose.msra.mxu0 0.0
        %1682 = vmatprep.subr.mxu0 0.0
        %1683 = vmatpush2.xpose.msra.mxu0 0.0
        %1684 = vmatprep.subr.mxu0 0.0
        %1685 = vmatpush2.xpose.msra.mxu0 0.0
        %1686 = vmatprep.subr.mxu0 0.0
        %1687 = vmatpush2.xpose.msra.mxu0 0.0
        %1688 = vmatprep.subr.mxu0 0.0
        %1689 = vmatpush2.xpose.msra.mxu0 0.0
        %1690 = vmatprep.subr.mxu0 0.0
        %1691 = vmatpush2.xpose.msra.mxu0 0.0
        %1692 = vmatprep.subr.mxu0 0.0
        %1693 = vmatpush2.xpose.msra.mxu0 0.0
        %1694 = vmatprep.subr.mxu0 0.0
        %1695 = vmatpush2.xpose.msra.mxu0 0.0
        %1696 = vmatprep.subr.mxu0 0.0
        %1697 = vmatpush2.xpose.msra.mxu0 0.0
        %1698 = vmatprep.subr.mxu0 0.0
        %1699 = vmatpush2.xpose.msra.mxu0 0.0
        %1700 = vmatprep.subr.mxu0 0.0
        %1701 = vmatpush2.xpose.msra.mxu0 0.0
        %1702 = vmatprep.subr.mxu0 0.0
        %1703 = vmatpush2.xpose.msra.mxu0 0.0
        %1704 = vmatprep.subr.mxu0 0.0
        %1705 = vmatpush2.xpose.msra.mxu0 0.0
        %1706 = vmatprep.subr.mxu0 0.0
        %1707 = vmatpush2.xpose.msra.mxu0 0.0
        %1708 = vmatprep.subr.mxu0 0.0
        %1709 = vmatpush2.xpose.msra.mxu0 0.0
        %1710 = vmatprep.subr.mxu0 0.0
        %1711 = vmatpush2.xpose.msra.mxu0 0.0
        %1712 = vmatprep.mubr.f32.mxu0 0.0
        %1713 = vmatmul.mubr.f32.gmra.mxu0 %v1644
        %v1714 = vpop.f32.mrf.mxu0
        %v1715 = vadd.f32 0.0, %v1714
        %v1716 = vpop.f32.mrf.mxu0
        %1717 = vdwg.mxu0
        %v1719 = vsel %vm1192, %v1191, 0
        %v1721 = vsel %vm1192, %v1163, 0
        %1723 = vmatprep.subr.mxu0 0.0
        %1724 = vmatpush1.xpose.msra.mxu0 0.0
        %1725 = vmatprep.subr.mxu0 0.0
        %1726 = vmatpush1.xpose.msra.mxu0 0.0
        %1727 = vmatprep.subr.mxu0 0.0
        %1728 = vmatpush1.xpose.msra.mxu0 0.0
        %1729 = vmatprep.subr.mxu0 0.0
        %1730 = vmatpush1.xpose.msra.mxu0 0.0
        %1731 = vmatprep.subr.mxu0 0.0
        %1732 = vmatpush1.xpose.msra.mxu0 0.0
        %1733 = vmatprep.subr.mxu0 0.0
        %1734 = vmatpush1.xpose.msra.mxu0 0.0
        %1735 = vmatprep.subr.mxu0 0.0
        %1736 = vmatpush1.xpose.msra.mxu0 0.0
        %1737 = vmatprep.subr.mxu0 0.0
        %1738 = vmatpush1.xpose.msra.mxu0 0.0
        %1739 = vmatprep.subr.mxu0 0.0
        %1740 = vmatpush1.xpose.msra.mxu0 0.0
        %1741 = vmatprep.subr.mxu0 0.0
        %1742 = vmatpush1.xpose.msra.mxu0 0.0
        %1743 = vmatprep.subr.mxu0 0.0
        %1744 = vmatpush1.xpose.msra.mxu0 0.0
        %1745 = vmatprep.subr.mxu0 0.0
        %1746 = vmatpush1.xpose.msra.mxu0 0.0
        %1747 = vmatprep.subr.mxu0 0.0
        %1748 = vmatpush1.xpose.msra.mxu0 0.0
        %1749 = vmatprep.subr.mxu0 0.0
        %1750 = vmatpush1.xpose.msra.mxu0 0.0
        %1751 = vmatprep.subr.mxu0 0.0
        %1752 = vmatpush1.xpose.msra.mxu0 0.0
        %1753 = vmatprep.subr.mxu0 0.0
        %1754 = vmatpush1.xpose.msra.mxu0 %v1721
        %1755 = vmatprep.subr.mxu0 0.0
        %1756 = vmatpush2.xpose.msra.mxu0 0.0
        %1757 = vmatprep.subr.mxu0 0.0
        %1758 = vmatpush2.xpose.msra.mxu0 0.0
        %1759 = vmatprep.subr.mxu0 0.0
        %1760 = vmatpush2.xpose.msra.mxu0 0.0
        %1761 = vmatprep.subr.mxu0 0.0
        %1762 = vmatpush2.xpose.msra.mxu0 0.0
        %1763 = vmatprep.subr.mxu0 0.0
        %1764 = vmatpush2.xpose.msra.mxu0 0.0
        %1765 = vmatprep.subr.mxu0 0.0
        %1766 = vmatpush2.xpose.msra.mxu0 0.0
        %1767 = vmatprep.subr.mxu0 0.0
        %1768 = vmatpush2.xpose.msra.mxu0 0.0
        %1769 = vmatprep.subr.mxu0 0.0
        %1770 = vmatpush2.xpose.msra.mxu0 0.0
        %1771 = vmatprep.subr.mxu0 0.0
        %1772 = vmatpush2.xpose.msra.mxu0 0.0
        %1773 = vmatprep.subr.mxu0 0.0
        %1774 = vmatpush2.xpose.msra.mxu0 0.0
        %1775 = vmatprep.subr.mxu0 0.0
        %1776 = vmatpush2.xpose.msra.mxu0 0.0
        %1777 = vmatprep.subr.mxu0 0.0
        %1778 = vmatpush2.xpose.msra.mxu0 0.0
        %1779 = vmatprep.subr.mxu0 0.0
        %1780 = vmatpush2.xpose.msra.mxu0 0.0
        %1781 = vmatprep.subr.mxu0 0.0
        %1782 = vmatpush2.xpose.msra.mxu0 0.0
        %1783 = vmatprep.subr.mxu0 0.0
        %1784 = vmatpush2.xpose.msra.mxu0 0.0
        %1785 = vmatprep.subr.mxu0 0.0
        %1786 = vmatpush2.xpose.msra.mxu0 0.0
        %1787 = vmatprep.mubr.f32.mxu0 0.0
        %1788 = vmatmul.mubr.f32.gmra.mxu0 %v1719
        %v1789 = vpop.f32.mrf.mxu0
        %v1790 = vadd.f32 0.0, %v1789
        %v1791 = vpop.f32.mrf.mxu0
        %1792 = vdwg.mxu0
        %v1793 = vsel %vm1192, %v1265, -inf
        %1794 = vmax.xlane.f32.xlu0 %v1793
        %v1795 = vpop.xlane.xlu0 %1794
        %v1796 = vsel %vm1192, %v1340, -inf
        %1797 = vmax.xlane.f32.xlu0 %v1796
        %v1798 = vpop.xlane.xlu0 %1797
        %v1799 = vsel %vm1192, %v1415, -inf
        %1800 = vmax.xlane.f32.xlu0 %v1799
        %v1801 = vpop.xlane.xlu0 %1800
        %v1802 = vsel %vm1192, %v1490, -inf
        %1803 = vmax.xlane.f32.xlu0 %v1802
        %v1804 = vpop.xlane.xlu0 %1803
        %v1805 = vsel %vm1192, %v1565, -inf
        %1806 = vmax.xlane.f32.xlu0 %v1805
        %v1807 = vpop.xlane.xlu0 %1806
        %v1808 = vsel %vm1192, %v1640, -inf
        %1809 = vmax.xlane.f32.xlu0 %v1808
        %v1810 = vpop.xlane.xlu0 %1809
        %v1811 = vsel %vm1192, %v1715, -inf
        %1812 = vmax.xlane.f32.xlu0 %v1811
        %v1813 = vpop.xlane.xlu0 %1812
        %v1814 = vsel %vm1192, %v1790, -inf
        %1815 = vmax.xlane.f32.xlu0 %v1814
        %v1816 = vpop.xlane.xlu0 %1815
        %v1817 = vsub.f32 %v1265, %v1795
        %v1818 = vsub.f32 %v1340, %v1798
        %v1819 = vsub.f32 %v1415, %v1801
        %v1820 = vsub.f32 %v1490, %v1804
        %v1821 = vsub.f32 %v1565, %v1807
        %v1822 = vsub.f32 %v1640, %v1810
        %v1823 = vsub.f32 %v1715, %v1813
        %v1824 = vsub.f32 %v1790, %v1816
        %v1825 = vmul.f32 %v1817, 1.442695
        %v1826 = vpow.pop %v1825
        %v1827 = vmul.f32 %v1818, 1.442695
        %v1828 = vpow.pop %v1827
        %v1829 = vmul.f32 %v1819, 1.442695
        %v1830 = vpow.pop %v1829
        %v1831 = vmul.f32 %v1820, 1.442695
        %v1832 = vpow.pop %v1831
        %v1833 = vmul.f32 %v1821, 1.442695
        %v1834 = vpow.pop %v1833
        %v1835 = vmul.f32 %v1822, 1.442695
        %v1836 = vpow.pop %v1835
        %v1837 = vmul.f32 %v1823, 1.442695
        %v1838 = vpow.pop %v1837
        %v1839 = vmul.f32 %v1824, 1.442695
        %v1840 = vpow.pop %v1839
        %v1841 = vsel %vm1192, %v1826, 0.0
        %1842 = vadd.xlane.f32.xlu0 %v1841
        %v1843 = vpop.xlane.xlu0 %1842
        %v1844 = vsel %vm1192, %v1828, 0.0
        %1845 = vadd.xlane.f32.xlu0 %v1844
        %v1846 = vpop.xlane.xlu0 %1845
        %v1847 = vsel %vm1192, %v1830, 0.0
        %1848 = vadd.xlane.f32.xlu0 %v1847
        %v1849 = vpop.xlane.xlu0 %1848
        %v1850 = vsel %vm1192, %v1832, 0.0
        %1851 = vadd.xlane.f32.xlu0 %v1850
        %v1852 = vpop.xlane.xlu0 %1851
        %v1853 = vsel %vm1192, %v1834, 0.0
        %1854 = vadd.xlane.f32.xlu0 %v1853
        %v1855 = vpop.xlane.xlu0 %1854
        %v1856 = vsel %vm1192, %v1836, 0.0
        %1857 = vadd.xlane.f32.xlu0 %v1856
        %v1858 = vpop.xlane.xlu0 %1857
        %v1859 = vsel %vm1192, %v1838, 0.0
        %1860 = vadd.xlane.f32.xlu0 %v1859
        %v1861 = vpop.xlane.xlu0 %1860
        %v1862 = vsel %vm1192, %v1840, 0.0
        %1863 = vadd.xlane.f32.xlu0 %v1862
        %v1864 = vpop.xlane.xlu0 %1863
        %v1865 = vrcp.pop %v1843
        %v1866 = vrcp.pop %v1846
        %v1867 = vrcp.pop %v1849
        %v1868 = vrcp.pop %v1852
        %v1869 = vrcp.pop %v1855
        %v1870 = vrcp.pop %v1858
        %v1871 = vrcp.pop %v1861
        %v1872 = vrcp.pop %v1864
        %v1873 = vmul.f32 %v1826, %v1865
        %v1874 = vmul.f32 %v1828, %v1866
        %v1875 = vmul.f32 %v1830, %v1867
        %v1876 = vmul.f32 %v1832, %v1868
        %v1877 = vmul.f32 %v1834, %v1869
        %v1878 = vmul.f32 %v1836, %v1870
        %v1879 = vmul.f32 %v1838, %v1871
        %v1880 = vmul.f32 %v1840, %v1872
        %v1882 = vsel %vm1192, %v1873, 0
        %1884 = vmatprep.subr.mxu0 0.0
        %1885 = vmatpush1.msra.mxu0 0.0
        %1886 = vmatprep.subr.mxu0 0.0
        %1887 = vmatpush1.msra.mxu0 0.0
        %1888 = vmatprep.subr.mxu0 0.0
        %1889 = vmatpush1.msra.mxu0 0.0
        %1890 = vmatprep.subr.mxu0 0.0
        %1891 = vmatpush1.msra.mxu0 0.0
        %1892 = vmatprep.subr.mxu0 0.0
        %1893 = vmatpush1.msra.mxu0 0.0
        %1894 = vmatprep.subr.mxu0 0.0
        %1895 = vmatpush1.msra.mxu0 0.0
        %1896 = vmatprep.subr.mxu0 0.0
        %1897 = vmatpush1.msra.mxu0 0.0
        %1898 = vmatprep.subr.mxu0 0.0
        %1899 = vmatpush1.msra.mxu0 0.0
        %1900 = vmatprep.subr.mxu0 0.0
        %1901 = vmatpush1.msra.mxu0 0.0
        %1902 = vmatprep.subr.mxu0 0.0
        %1903 = vmatpush1.msra.mxu0 0.0
        %1904 = vmatprep.subr.mxu0 0.0
        %1905 = vmatpush1.msra.mxu0 0.0
        %1906 = vmatprep.subr.mxu0 0.0
        %1907 = vmatpush1.msra.mxu0 0.0
        %1908 = vmatprep.subr.mxu0 0.0
        %1909 = vmatpush1.msra.mxu0 0.0
        %1910 = vmatprep.subr.mxu0 0.0
        %1911 = vmatpush1.msra.mxu0 0.0
        %1912 = vmatprep.subr.mxu0 0.0
        %1913 = vmatpush1.msra.mxu0 0.0
        %1914 = vmatprep.subr.mxu0 0.0
        %1915 = vmatpush1.msra.mxu0 %v1122
        %1916 = vmatprep.subr.mxu0 0.0
        %1917 = vmatpush2.msra.mxu0 0.0
        %1918 = vmatprep.subr.mxu0 0.0
        %1919 = vmatpush2.msra.mxu0 0.0
        %1920 = vmatprep.subr.mxu0 0.0
        %1921 = vmatpush2.msra.mxu0 0.0
        %1922 = vmatprep.subr.mxu0 0.0
        %1923 = vmatpush2.msra.mxu0 0.0
        %1924 = vmatprep.subr.mxu0 0.0
        %1925 = vmatpush2.msra.mxu0 0.0
        %1926 = vmatprep.subr.mxu0 0.0
        %1927 = vmatpush2.msra.mxu0 0.0
        %1928 = vmatprep.subr.mxu0 0.0
        %1929 = vmatpush2.msra.mxu0 0.0
        %1930 = vmatprep.subr.mxu0 0.0
        %1931 = vmatpush2.msra.mxu0 0.0
        %1932 = vmatprep.subr.mxu0 0.0
        %1933 = vmatpush2.msra.mxu0 0.0
        %1934 = vmatprep.subr.mxu0 0.0
        %1935 = vmatpush2.msra.mxu0 0.0
        %1936 = vmatprep.subr.mxu0 0.0
        %1937 = vmatpush2.msra.mxu0 0.0
        %1938 = vmatprep.subr.mxu0 0.0
        %1939 = vmatpush2.msra.mxu0 0.0
        %1940 = vmatprep.subr.mxu0 0.0
        %1941 = vmatpush2.msra.mxu0 0.0
        %1942 = vmatprep.subr.mxu0 0.0
        %1943 = vmatpush2.msra.mxu0 0.0
        %1944 = vmatprep.subr.mxu0 0.0
        %1945 = vmatpush2.msra.mxu0 0.0
        %1946 = vmatprep.subr.mxu0 0.0
        %1947 = vmatpush2.msra.mxu0 0.0
        %1948 = vmatprep.mubr.f32.mxu0 0.0
        %1949 = vmatmul.mubr.f32.gmra.mxu0 %v1882
        %v1950 = vpop.f32.mrf.mxu0
        %v1951 = vadd.f32 0.0, %v1950
        %v1952 = vpop.f32.mrf.mxu0
        %1953 = vdwg.mxu0
        %v1955 = vsel %vm1192, %v1874, 0
        %1957 = vmatprep.subr.mxu0 0.0
        %1958 = vmatpush1.msra.mxu0 0.0
        %1959 = vmatprep.subr.mxu0 0.0
        %1960 = vmatpush1.msra.mxu0 0.0
        %1961 = vmatprep.subr.mxu0 0.0
        %1962 = vmatpush1.msra.mxu0 0.0
        %1963 = vmatprep.subr.mxu0 0.0
        %1964 = vmatpush1.msra.mxu0 0.0
        %1965 = vmatprep.subr.mxu0 0.0
        %1966 = vmatpush1.msra.mxu0 0.0
        %1967 = vmatprep.subr.mxu0 0.0
        %1968 = vmatpush1.msra.mxu0 0.0
        %1969 = vmatprep.subr.mxu0 0.0
        %1970 = vmatpush1.msra.mxu0 0.0
        %1971 = vmatprep.subr.mxu0 0.0
        %1972 = vmatpush1.msra.mxu0 0.0
        %1973 = vmatprep.subr.mxu0 0.0
        %1974 = vmatpush1.msra.mxu0 0.0
        %1975 = vmatprep.subr.mxu0 0.0
        %1976 = vmatpush1.msra.mxu0 0.0
        %1977 = vmatprep.subr.mxu0 0.0
        %1978 = vmatpush1.msra.mxu0 0.0
        %1979 = vmatprep.subr.mxu0 0.0
        %1980 = vmatpush1.msra.mxu0 0.0
        %1981 = vmatprep.subr.mxu0 0.0
        %1982 = vmatpush1.msra.mxu0 0.0
        %1983 = vmatprep.subr.mxu0 0.0
        %1984 = vmatpush1.msra.mxu0 0.0
        %1985 = vmatprep.subr.mxu0 0.0
        %1986 = vmatpush1.msra.mxu0 0.0
        %1987 = vmatprep.subr.mxu0 0.0
        %1988 = vmatpush1.msra.mxu0 %v1127
        %1989 = vmatprep.subr.mxu0 0.0
        %1990 = vmatpush2.msra.mxu0 0.0
        %1991 = vmatprep.subr.mxu0 0.0
        %1992 = vmatpush2.msra.mxu0 0.0
        %1993 = vmatprep.subr.mxu0 0.0
        %1994 = vmatpush2.msra.mxu0 0.0
        %1995 = vmatprep.subr.mxu0 0.0
        %1996 = vmatpush2.msra.mxu0 0.0
        %1997 = vmatprep.subr.mxu0 0.0
        %1998 = vmatpush2.msra.mxu0 0.0
        %1999 = vmatprep.subr.mxu0 0.0
        %2000 = vmatpush2.msra.mxu0 0.0
        %2001 = vmatprep.subr.mxu0 0.0
        %2002 = vmatpush2.msra.mxu0 0.0
        %2003 = vmatprep.subr.mxu0 0.0
        %2004 = vmatpush2.msra.mxu0 0.0
        %2005 = vmatprep.subr.mxu0 0.0
        %2006 = vmatpush2.msra.mxu0 0.0
        %2007 = vmatprep.subr.mxu0 0.0
        %2008 = vmatpush2.msra.mxu0 0.0
        %2009 = vmatprep.subr.mxu0 0.0
        %2010 = vmatpush2.msra.mxu0 0.0
        %2011 = vmatprep.subr.mxu0 0.0
        %2012 = vmatpush2.msra.mxu0 0.0
        %2013 = vmatprep.subr.mxu0 0.0
        %2014 = vmatpush2.msra.mxu0 0.0
        %2015 = vmatprep.subr.mxu0 0.0
        %2016 = vmatpush2.msra.mxu0 0.0
        %2017 = vmatprep.subr.mxu0 0.0
        %2018 = vmatpush2.msra.mxu0 0.0
        %2019 = vmatprep.subr.mxu0 0.0
        %2020 = vmatpush2.msra.mxu0 0.0
        %2021 = vmatprep.mubr.f32.mxu0 0.0
        %2022 = vmatmul.mubr.f32.gmra.mxu0 %v1955
        %v2023 = vpop.f32.mrf.mxu0
        %v2024 = vadd.f32 0.0, %v2023
        %v2025 = vpop.f32.mrf.mxu0
        %2026 = vdwg.mxu0
        %v2028 = vsel %vm1192, %v1875, 0
        %2030 = vmatprep.subr.mxu0 0.0
        %2031 = vmatpush1.msra.mxu0 0.0
        %2032 = vmatprep.subr.mxu0 0.0
        %2033 = vmatpush1.msra.mxu0 0.0
        %2034 = vmatprep.subr.mxu0 0.0
        %2035 = vmatpush1.msra.mxu0 0.0
        %2036 = vmatprep.subr.mxu0 0.0
        %2037 = vmatpush1.msra.mxu0 0.0
        %2038 = vmatprep.subr.mxu0 0.0
        %2039 = vmatpush1.msra.mxu0 0.0
        %2040 = vmatprep.subr.mxu0 0.0
        %2041 = vmatpush1.msra.mxu0 0.0
        %2042 = vmatprep.subr.mxu0 0.0
        %2043 = vmatpush1.msra.mxu0 0.0
        %2044 = vmatprep.subr.mxu0 0.0
        %2045 = vmatpush1.msra.mxu0 0.0
        %2046 = vmatprep.subr.mxu0 0.0
        %2047 = vmatpush1.msra.mxu0 0.0
        %2048 = vmatprep.subr.mxu0 0.0
        %2049 = vmatpush1.msra.mxu0 0.0
        %2050 = vmatprep.subr.mxu0 0.0
        %2051 = vmatpush1.msra.mxu0 0.0
        %2052 = vmatprep.subr.mxu0 0.0
        %2053 = vmatpush1.msra.mxu0 0.0
        %2054 = vmatprep.subr.mxu0 0.0
        %2055 = vmatpush1.msra.mxu0 0.0
        %2056 = vmatprep.subr.mxu0 0.0
        %2057 = vmatpush1.msra.mxu0 0.0
        %2058 = vmatprep.subr.mxu0 0.0
        %2059 = vmatpush1.msra.mxu0 0.0
        %2060 = vmatprep.subr.mxu0 0.0
        %2061 = vmatpush1.msra.mxu0 %v1167
        %2062 = vmatprep.subr.mxu0 0.0
        %2063 = vmatpush2.msra.mxu0 0.0
        %2064 = vmatprep.subr.mxu0 0.0
        %2065 = vmatpush2.msra.mxu0 0.0
        %2066 = vmatprep.subr.mxu0 0.0
        %2067 = vmatpush2.msra.mxu0 0.0
        %2068 = vmatprep.subr.mxu0 0.0
        %2069 = vmatpush2.msra.mxu0 0.0
        %2070 = vmatprep.subr.mxu0 0.0
        %2071 = vmatpush2.msra.mxu0 0.0
        %2072 = vmatprep.subr.mxu0 0.0
        %2073 = vmatpush2.msra.mxu0 0.0
        %2074 = vmatprep.subr.mxu0 0.0
        %2075 = vmatpush2.msra.mxu0 0.0
        %2076 = vmatprep.subr.mxu0 0.0
        %2077 = vmatpush2.msra.mxu0 0.0
        %2078 = vmatprep.subr.mxu0 0.0
        %2079 = vmatpush2.msra.mxu0 0.0
        %2080 = vmatprep.subr.mxu0 0.0
        %2081 = vmatpush2.msra.mxu0 0.0
        %2082 = vmatprep.subr.mxu0 0.0
        %2083 = vmatpush2.msra.mxu0 0.0
        %2084 = vmatprep.subr.mxu0 0.0
        %2085 = vmatpush2.msra.mxu0 0.0
        %2086 = vmatprep.subr.mxu0 0.0
        %2087 = vmatpush2.msra.mxu0 0.0
        %2088 = vmatprep.subr.mxu0 0.0
        %2089 = vmatpush2.msra.mxu0 0.0
        %2090 = vmatprep.subr.mxu0 0.0
        %2091 = vmatpush2.msra.mxu0 0.0
        %2092 = vmatprep.subr.mxu0 0.0
        %2093 = vmatpush2.msra.mxu0 0.0
        %2094 = vmatprep.mubr.f32.mxu0 0.0
        %2095 = vmatmul.mubr.f32.gmra.mxu0 %v2028
        %v2096 = vpop.f32.mrf.mxu0
        %v2097 = vadd.f32 0.0, %v2096
        %v2098 = vpop.f32.mrf.mxu0
        %2099 = vdwg.mxu0
        %v2101 = vsel %vm1192, %v1876, 0
        %2103 = vmatprep.subr.mxu0 0.0
        %2104 = vmatpush1.msra.mxu0 0.0
        %2105 = vmatprep.subr.mxu0 0.0
        %2106 = vmatpush1.msra.mxu0 0.0
        %2107 = vmatprep.subr.mxu0 0.0
        %2108 = vmatpush1.msra.mxu0 0.0
        %2109 = vmatprep.subr.mxu0 0.0
        %2110 = vmatpush1.msra.mxu0 0.0
        %2111 = vmatprep.subr.mxu0 0.0
        %2112 = vmatpush1.msra.mxu0 0.0
        %2113 = vmatprep.subr.mxu0 0.0
        %2114 = vmatpush1.msra.mxu0 0.0
        %2115 = vmatprep.subr.mxu0 0.0
        %2116 = vmatpush1.msra.mxu0 0.0
        %2117 = vmatprep.subr.mxu0 0.0
        %2118 = vmatpush1.msra.mxu0 0.0
        %2119 = vmatprep.subr.mxu0 0.0
        %2120 = vmatpush1.msra.mxu0 0.0
        %2121 = vmatprep.subr.mxu0 0.0
        %2122 = vmatpush1.msra.mxu0 0.0
        %2123 = vmatprep.subr.mxu0 0.0
        %2124 = vmatpush1.msra.mxu0 0.0
        %2125 = vmatprep.subr.mxu0 0.0
        %2126 = vmatpush1.msra.mxu0 0.0
        %2127 = vmatprep.subr.mxu0 0.0
        %2128 = vmatpush1.msra.mxu0 0.0
        %2129 = vmatprep.subr.mxu0 0.0
        %2130 = vmatpush1.msra.mxu0 0.0
        %2131 = vmatprep.subr.mxu0 0.0
        %2132 = vmatpush1.msra.mxu0 0.0
        %2133 = vmatprep.subr.mxu0 0.0
        %2134 = vmatpush1.msra.mxu0 %v1169
        %2135 = vmatprep.subr.mxu0 0.0
        %2136 = vmatpush2.msra.mxu0 0.0
        %2137 = vmatprep.subr.mxu0 0.0
        %2138 = vmatpush2.msra.mxu0 0.0
        %2139 = vmatprep.subr.mxu0 0.0
        %2140 = vmatpush2.msra.mxu0 0.0
        %2141 = vmatprep.subr.mxu0 0.0
        %2142 = vmatpush2.msra.mxu0 0.0
        %2143 = vmatprep.subr.mxu0 0.0
        %2144 = vmatpush2.msra.mxu0 0.0
        %2145 = vmatprep.subr.mxu0 0.0
        %2146 = vmatpush2.msra.mxu0 0.0
        %2147 = vmatprep.subr.mxu0 0.0
        %2148 = vmatpush2.msra.mxu0 0.0
        %2149 = vmatprep.subr.mxu0 0.0
        %2150 = vmatpush2.msra.mxu0 0.0
        %2151 = vmatprep.subr.mxu0 0.0
        %2152 = vmatpush2.msra.mxu0 0.0
        %2153 = vmatprep.subr.mxu0 0.0
        %2154 = vmatpush2.msra.mxu0 0.0
        %2155 = vmatprep.subr.mxu0 0.0
        %2156 = vmatpush2.msra.mxu0 0.0
        %2157 = vmatprep.subr.mxu0 0.0
        %2158 = vmatpush2.msra.mxu0 0.0
        %2159 = vmatprep.subr.mxu0 0.0
        %2160 = vmatpush2.msra.mxu0 0.0
        %2161 = vmatprep.subr.mxu0 0.0
        %2162 = vmatpush2.msra.mxu0 0.0
        %2163 = vmatprep.subr.mxu0 0.0
        %2164 = vmatpush2.msra.mxu0 0.0
        %2165 = vmatprep.subr.mxu0 0.0
        %2166 = vmatpush2.msra.mxu0 0.0
        %2167 = vmatprep.mubr.f32.mxu0 0.0
        %2168 = vmatmul.mubr.f32.gmra.mxu0 %v2101
        %v2169 = vpop.f32.mrf.mxu0
        %v2170 = vadd.f32 0.0, %v2169
        %v2171 = vpop.f32.mrf.mxu0
        %2172 = vdwg.mxu0
        %v2174 = vsel %vm1192, %v1877, 0
        %2176 = vmatprep.subr.mxu0 0.0
        %2177 = vmatpush1.msra.mxu0 0.0
        %2178 = vmatprep.subr.mxu0 0.0
        %2179 = vmatpush1.msra.mxu0 0.0
        %2180 = vmatprep.subr.mxu0 0.0
        %2181 = vmatpush1.msra.mxu0 0.0
        %2182 = vmatprep.subr.mxu0 0.0
        %2183 = vmatpush1.msra.mxu0 0.0
        %2184 = vmatprep.subr.mxu0 0.0
        %2185 = vmatpush1.msra.mxu0 0.0
        %2186 = vmatprep.subr.mxu0 0.0
        %2187 = vmatpush1.msra.mxu0 0.0
        %2188 = vmatprep.subr.mxu0 0.0
        %2189 = vmatpush1.msra.mxu0 0.0
        %2190 = vmatprep.subr.mxu0 0.0
        %2191 = vmatpush1.msra.mxu0 0.0
        %2192 = vmatprep.subr.mxu0 0.0
        %2193 = vmatpush1.msra.mxu0 0.0
        %2194 = vmatprep.subr.mxu0 0.0
        %2195 = vmatpush1.msra.mxu0 0.0
        %2196 = vmatprep.subr.mxu0 0.0
        %2197 = vmatpush1.msra.mxu0 0.0
        %2198 = vmatprep.subr.mxu0 0.0
        %2199 = vmatpush1.msra.mxu0 0.0
        %2200 = vmatprep.subr.mxu0 0.0
        %2201 = vmatpush1.msra.mxu0 0.0
        %2202 = vmatprep.subr.mxu0 0.0
        %2203 = vmatpush1.msra.mxu0 0.0
        %2204 = vmatprep.subr.mxu0 0.0
        %2205 = vmatpush1.msra.mxu0 0.0
        %2206 = vmatprep.subr.mxu0 0.0
        %2207 = vmatpush1.msra.mxu0 %v1173
        %2208 = vmatprep.subr.mxu0 0.0
        %2209 = vmatpush2.msra.mxu0 0.0
        %2210 = vmatprep.subr.mxu0 0.0
        %2211 = vmatpush2.msra.mxu0 0.0
        %2212 = vmatprep.subr.mxu0 0.0
        %2213 = vmatpush2.msra.mxu0 0.0
        %2214 = vmatprep.subr.mxu0 0.0
        %2215 = vmatpush2.msra.mxu0 0.0
        %2216 = vmatprep.subr.mxu0 0.0
        %2217 = vmatpush2.msra.mxu0 0.0
        %2218 = vmatprep.subr.mxu0 0.0
        %2219 = vmatpush2.msra.mxu0 0.0
        %2220 = vmatprep.subr.mxu0 0.0
        %2221 = vmatpush2.msra.mxu0 0.0
        %2222 = vmatprep.subr.mxu0 0.0
        %2223 = vmatpush2.msra.mxu0 0.0
        %2224 = vmatprep.subr.mxu0 0.0
        %2225 = vmatpush2.msra.mxu0 0.0
        %2226 = vmatprep.subr.mxu0 0.0
        %2227 = vmatpush2.msra.mxu0 0.0
        %2228 = vmatprep.subr.mxu0 0.0
        %2229 = vmatpush2.msra.mxu0 0.0
        %2230 = vmatprep.subr.mxu0 0.0
        %2231 = vmatpush2.msra.mxu0 0.0
        %2232 = vmatprep.subr.mxu0 0.0
        %2233 = vmatpush2.msra.mxu0 0.0
        %2234 = vmatprep.subr.mxu0 0.0
        %2235 = vmatpush2.msra.mxu0 0.0
        %2236 = vmatprep.subr.mxu0 0.0
        %2237 = vmatpush2.msra.mxu0 0.0
        %2238 = vmatprep.subr.mxu0 0.0
        %2239 = vmatpush2.msra.mxu0 0.0
        %2240 = vmatprep.mubr.f32.mxu0 0.0
        %2241 = vmatmul.mubr.f32.gmra.mxu0 %v2174
        %v2242 = vpop.f32.mrf.mxu0
        %v2243 = vadd.f32 0.0, %v2242
        %v2244 = vpop.f32.mrf.mxu0
        %2245 = vdwg.mxu0
        %v2247 = vsel %vm1192, %v1878, 0
        %2249 = vmatprep.subr.mxu0 0.0
        %2250 = vmatpush1.msra.mxu0 0.0
        %2251 = vmatprep.subr.mxu0 0.0
        %2252 = vmatpush1.msra.mxu0 0.0
        %2253 = vmatprep.subr.mxu0 0.0
        %2254 = vmatpush1.msra.mxu0 0.0
        %2255 = vmatprep.subr.mxu0 0.0
        %2256 = vmatpush1.msra.mxu0 0.0
        %2257 = vmatprep.subr.mxu0 0.0
        %2258 = vmatpush1.msra.mxu0 0.0
        %2259 = vmatprep.subr.mxu0 0.0
        %2260 = vmatpush1.msra.mxu0 0.0
        %2261 = vmatprep.subr.mxu0 0.0
        %2262 = vmatpush1.msra.mxu0 0.0
        %2263 = vmatprep.subr.mxu0 0.0
        %2264 = vmatpush1.msra.mxu0 0.0
        %2265 = vmatprep.subr.mxu0 0.0
        %2266 = vmatpush1.msra.mxu0 0.0
        %2267 = vmatprep.subr.mxu0 0.0
        %2268 = vmatpush1.msra.mxu0 0.0
        %2269 = vmatprep.subr.mxu0 0.0
        %2270 = vmatpush1.msra.mxu0 0.0
        %2271 = vmatprep.subr.mxu0 0.0
        %2272 = vmatpush1.msra.mxu0 0.0
        %2273 = vmatprep.subr.mxu0 0.0
        %2274 = vmatpush1.msra.mxu0 0.0
        %2275 = vmatprep.subr.mxu0 0.0
        %2276 = vmatpush1.msra.mxu0 0.0
        %2277 = vmatprep.subr.mxu0 0.0
        %2278 = vmatpush1.msra.mxu0 0.0
        %2279 = vmatprep.subr.mxu0 0.0
        %2280 = vmatpush1.msra.mxu0 %v1175
        %2281 = vmatprep.subr.mxu0 0.0
        %2282 = vmatpush2.msra.mxu0 0.0
        %2283 = vmatprep.subr.mxu0 0.0
        %2284 = vmatpush2.msra.mxu0 0.0
        %2285 = vmatprep.subr.mxu0 0.0
        %2286 = vmatpush2.msra.mxu0 0.0
        %2287 = vmatprep.subr.mxu0 0.0
        %2288 = vmatpush2.msra.mxu0 0.0
        %2289 = vmatprep.subr.mxu0 0.0
        %2290 = vmatpush2.msra.mxu0 0.0
        %2291 = vmatprep.subr.mxu0 0.0
        %2292 = vmatpush2.msra.mxu0 0.0
        %2293 = vmatprep.subr.mxu0 0.0
        %2294 = vmatpush2.msra.mxu0 0.0
        %2295 = vmatprep.subr.mxu0 0.0
        %2296 = vmatpush2.msra.mxu0 0.0
        %2297 = vmatprep.subr.mxu0 0.0
        %2298 = vmatpush2.msra.mxu0 0.0
        %2299 = vmatprep.subr.mxu0 0.0
        %2300 = vmatpush2.msra.mxu0 0.0
        %2301 = vmatprep.subr.mxu0 0.0
        %2302 = vmatpush2.msra.mxu0 0.0
        %2303 = vmatprep.subr.mxu0 0.0
        %2304 = vmatpush2.msra.mxu0 0.0
        %2305 = vmatprep.subr.mxu0 0.0
        %2306 = vmatpush2.msra.mxu0 0.0
        %2307 = vmatprep.subr.mxu0 0.0
        %2308 = vmatpush2.msra.mxu0 0.0
        %2309 = vmatprep.subr.mxu0 0.0
        %2310 = vmatpush2.msra.mxu0 0.0
        %2311 = vmatprep.subr.mxu0 0.0
        %2312 = vmatpush2.msra.mxu0 0.0
        %2313 = vmatprep.mubr.f32.mxu0 0.0
        %2314 = vmatmul.mubr.f32.gmra.mxu0 %v2247
        %v2315 = vpop.f32.mrf.mxu0
        %v2316 = vadd.f32 0.0, %v2315
        %v2317 = vpop.f32.mrf.mxu0
        %2318 = vdwg.mxu0
        %v2320 = vsel %vm1192, %v1879, 0
        %2322 = vmatprep.subr.mxu0 0.0
        %2323 = vmatpush1.msra.mxu0 0.0
        %2324 = vmatprep.subr.mxu0 0.0
        %2325 = vmatpush1.msra.mxu0 0.0
        %2326 = vmatprep.subr.mxu0 0.0
        %2327 = vmatpush1.msra.mxu0 0.0
        %2328 = vmatprep.subr.mxu0 0.0
        %2329 = vmatpush1.msra.mxu0 0.0
        %2330 = vmatprep.subr.mxu0 0.0
        %2331 = vmatpush1.msra.mxu0 0.0
        %2332 = vmatprep.subr.mxu0 0.0
        %2333 = vmatpush1.msra.mxu0 0.0
        %2334 = vmatprep.subr.mxu0 0.0
        %2335 = vmatpush1.msra.mxu0 0.0
        %2336 = vmatprep.subr.mxu0 0.0
        %2337 = vmatpush1.msra.mxu0 0.0
        %2338 = vmatprep.subr.mxu0 0.0
        %2339 = vmatpush1.msra.mxu0 0.0
        %2340 = vmatprep.subr.mxu0 0.0
        %2341 = vmatpush1.msra.mxu0 0.0
        %2342 = vmatprep.subr.mxu0 0.0
        %2343 = vmatpush1.msra.mxu0 0.0
        %2344 = vmatprep.subr.mxu0 0.0
        %2345 = vmatpush1.msra.mxu0 0.0
        %2346 = vmatprep.subr.mxu0 0.0
        %2347 = vmatpush1.msra.mxu0 0.0
        %2348 = vmatprep.subr.mxu0 0.0
        %2349 = vmatpush1.msra.mxu0 0.0
        %2350 = vmatprep.subr.mxu0 0.0
        %2351 = vmatpush1.msra.mxu0 0.0
        %2352 = vmatprep.subr.mxu0 0.0
        %2353 = vmatpush1.msra.mxu0 %v1179
        %2354 = vmatprep.subr.mxu0 0.0
        %2355 = vmatpush2.msra.mxu0 0.0
        %2356 = vmatprep.subr.mxu0 0.0
        %2357 = vmatpush2.msra.mxu0 0.0
        %2358 = vmatprep.subr.mxu0 0.0
        %2359 = vmatpush2.msra.mxu0 0.0
        %2360 = vmatprep.subr.mxu0 0.0
        %2361 = vmatpush2.msra.mxu0 0.0
        %2362 = vmatprep.subr.mxu0 0.0
        %2363 = vmatpush2.msra.mxu0 0.0
        %2364 = vmatprep.subr.mxu0 0.0
        %2365 = vmatpush2.msra.mxu0 0.0
        %2366 = vmatprep.subr.mxu0 0.0
        %2367 = vmatpush2.msra.mxu0 0.0
        %2368 = vmatprep.subr.mxu0 0.0
        %2369 = vmatpush2.msra.mxu0 0.0
        %2370 = vmatprep.subr.mxu0 0.0
        %2371 = vmatpush2.msra.mxu0 0.0
        %2372 = vmatprep.subr.mxu0 0.0
        %2373 = vmatpush2.msra.mxu0 0.0
        %2374 = vmatprep.subr.mxu0 0.0
        %2375 = vmatpush2.msra.mxu0 0.0
        %2376 = vmatprep.subr.mxu0 0.0
        %2377 = vmatpush2.msra.mxu0 0.0
        %2378 = vmatprep.subr.mxu0 0.0
        %2379 = vmatpush2.msra.mxu0 0.0
        %2380 = vmatprep.subr.mxu0 0.0
        %2381 = vmatpush2.msra.mxu0 0.0
        %2382 = vmatprep.subr.mxu0 0.0
        %2383 = vmatpush2.msra.mxu0 0.0
        %2384 = vmatprep.subr.mxu0 0.0
        %2385 = vmatpush2.msra.mxu0 0.0
        %2386 = vmatprep.mubr.f32.mxu0 0.0
        %2387 = vmatmul.mubr.f32.gmra.mxu0 %v2320
        %v2388 = vpop.f32.mrf.mxu0
        %v2389 = vadd.f32 0.0, %v2388
        %v2390 = vpop.f32.mrf.mxu0
        %2391 = vdwg.mxu0
        %v2393 = vsel %vm1192, %v1880, 0
        %2395 = vmatprep.subr.mxu0 0.0
        %2396 = vmatpush1.msra.mxu0 0.0
        %2397 = vmatprep.subr.mxu0 0.0
        %2398 = vmatpush1.msra.mxu0 0.0
        %2399 = vmatprep.subr.mxu0 0.0
        %2400 = vmatpush1.msra.mxu0 0.0
        %2401 = vmatprep.subr.mxu0 0.0
        %2402 = vmatpush1.msra.mxu0 0.0
        %2403 = vmatprep.subr.mxu0 0.0
        %2404 = vmatpush1.msra.mxu0 0.0
        %2405 = vmatprep.subr.mxu0 0.0
        %2406 = vmatpush1.msra.mxu0 0.0
        %2407 = vmatprep.subr.mxu0 0.0
        %2408 = vmatpush1.msra.mxu0 0.0
        %2409 = vmatprep.subr.mxu0 0.0
        %2410 = vmatpush1.msra.mxu0 0.0
        %2411 = vmatprep.subr.mxu0 0.0
        %2412 = vmatpush1.msra.mxu0 0.0
        %2413 = vmatprep.subr.mxu0 0.0
        %2414 = vmatpush1.msra.mxu0 0.0
        %2415 = vmatprep.subr.mxu0 0.0
        %2416 = vmatpush1.msra.mxu0 0.0
        %2417 = vmatprep.subr.mxu0 0.0
        %2418 = vmatpush1.msra.mxu0 0.0
        %2419 = vmatprep.subr.mxu0 0.0
        %2420 = vmatpush1.msra.mxu0 0.0
        %2421 = vmatprep.subr.mxu0 0.0
        %2422 = vmatpush1.msra.mxu0 0.0
        %2423 = vmatprep.subr.mxu0 0.0
        %2424 = vmatpush1.msra.mxu0 0.0
        %2425 = vmatprep.subr.mxu0 0.0
        %2426 = vmatpush1.msra.mxu0 %v1181
        %2427 = vmatprep.subr.mxu0 0.0
        %2428 = vmatpush2.msra.mxu0 0.0
        %2429 = vmatprep.subr.mxu0 0.0
        %2430 = vmatpush2.msra.mxu0 0.0
        %2431 = vmatprep.subr.mxu0 0.0
        %2432 = vmatpush2.msra.mxu0 0.0
        %2433 = vmatprep.subr.mxu0 0.0
        %2434 = vmatpush2.msra.mxu0 0.0
        %2435 = vmatprep.subr.mxu0 0.0
        %2436 = vmatpush2.msra.mxu0 0.0
        %2437 = vmatprep.subr.mxu0 0.0
        %2438 = vmatpush2.msra.mxu0 0.0
        %2439 = vmatprep.subr.mxu0 0.0
        %2440 = vmatpush2.msra.mxu0 0.0
        %2441 = vmatprep.subr.mxu0 0.0
        %2442 = vmatpush2.msra.mxu0 0.0
        %2443 = vmatprep.subr.mxu0 0.0
        %2444 = vmatpush2.msra.mxu0 0.0
        %2445 = vmatprep.subr.mxu0 0.0
        %2446 = vmatpush2.msra.mxu0 0.0
        %2447 = vmatprep.subr.mxu0 0.0
        %2448 = vmatpush2.msra.mxu0 0.0
        %2449 = vmatprep.subr.mxu0 0.0
        %2450 = vmatpush2.msra.mxu0 0.0
        %2451 = vmatprep.subr.mxu0 0.0
        %2452 = vmatpush2.msra.mxu0 0.0
        %2453 = vmatprep.subr.mxu0 0.0
        %2454 = vmatpush2.msra.mxu0 0.0
        %2455 = vmatprep.subr.mxu0 0.0
        %2456 = vmatpush2.msra.mxu0 0.0
        %2457 = vmatprep.subr.mxu0 0.0
        %2458 = vmatpush2.msra.mxu0 0.0
        %2459 = vmatprep.mubr.f32.mxu0 0.0
        %2460 = vmatmul.mubr.f32.gmra.mxu0 %v2393
        %v2461 = vpop.f32.mrf.mxu0
        %v2462 = vadd.f32 0.0, %v2461
        %v2463 = vpop.f32.mrf.mxu0
        %2464 = vdwg.mxu0
        %2467 = vrot.lane.b32.xlu0 %v2097, 8
        %v2468 = vpop.permute.xlu0 %2467
        %2469 = vrot.lane.b32.xlu0 %v2170, 8
        %v2470 = vpop.permute.xlu0 %2469
        %2475 = vrot.lane.b32.xlu0 %v2243, 16
        %v2476 = vpop.permute.xlu0 %2475
        %2477 = vrot.lane.b32.xlu0 %v2316, 16
        %v2478 = vpop.permute.xlu0 %2477
        %2483 = vrot.lane.b32.xlu0 %v2389, 24
        %v2484 = vpop.permute.xlu0 %2483
        %2485 = vrot.lane.b32.xlu0 %v2462, 24
        %v2486 = vpop.permute.xlu0 %2485
        %v2489 = vsel %vm1192, %v1951, %v2468
        %v2490 = vsel %vm1192, %v2024, %v2470
        %vm2491 = vcmask 130048
        %v2492 = vsel %vm2491, %v2489, %v2476
        %v2493 = vsel %vm2491, %v2490, %v2478
        %vm2494 = vcmask 195584
        %v2495 = vsel %vm2494, %v2492, %v2484
        %v2496 = vsel %vm2494, %v2493, %v2486
        %v2497 = vld [vmem:[%s692] sm:$0xff]
        %v2498 = vld [vmem:[%s692 + $0x8] sm:$0xff]
        %v2499 = vld [vmem:[%s692 + $0x10] sm:$0xff]
        %v2500 = vld [vmem:[%s692 + $0x18] sm:$0xff]
        %v2501 = vld [vmem:[%s829] sm:$0x1]
        %v2503 = vlaneseq
        %v2504 = vshrl.u32 %v2503, 7
        %v2505 = vsub.s32 0, %v2504
        %v2506 = vrot.slane %v2501, %v2505
        %v2509 = vsel %vm876, %v2495, 0
        %v2512 = vsel %vm876, %v2496, 0
        %2514 = vmatprep.subr.mxu0 0.0
        %2515 = vmatpush1.msra.mxu0 0.0
        %2516 = vmatprep.subr.mxu0 0.0
        %2517 = vmatpush1.msra.mxu0 0.0
        %2518 = vmatprep.subr.mxu0 0.0
        %2519 = vmatpush1.msra.mxu0 0.0
        %2520 = vmatprep.subr.mxu0 0.0
        %2521 = vmatpush1.msra.mxu0 0.0
        %2522 = vmatprep.subr.mxu0 0.0
        %2523 = vmatpush1.msra.mxu0 0.0
        %2524 = vmatprep.subr.mxu0 0.0
        %2525 = vmatpush1.msra.mxu0 0.0
        %2526 = vmatprep.subr.mxu0 0.0
        %2527 = vmatpush1.msra.mxu0 0.0
        %2528 = vmatprep.subr.mxu0 0.0
        %2529 = vmatpush1.msra.mxu0 0.0
        %2530 = vmatprep.subr.mxu0 0.0
        %2531 = vmatpush1.msra.mxu0 0.0
        %2532 = vmatprep.subr.mxu0 0.0
        %2533 = vmatpush1.msra.mxu0 0.0
        %2534 = vmatprep.subr.mxu0 0.0
        %2535 = vmatpush1.msra.mxu0 0.0
        %2536 = vmatprep.subr.mxu0 0.0
        %2537 = vmatpush1.msra.mxu0 0.0
        %2538 = vmatprep.subr.mxu0 0.0
        %2539 = vmatpush1.msra.mxu0 %v2500
        %2540 = vmatprep.subr.mxu0 0.0
        %2541 = vmatpush1.msra.mxu0 %v2499
        %2542 = vmatprep.subr.mxu0 0.0
        %2543 = vmatpush1.msra.mxu0 %v2498
        %2544 = vmatprep.subr.mxu0 0.0
        %2545 = vmatpush1.msra.mxu0 %v2497
        %2546 = vmatprep.subr.mxu0 0.0
        %2547 = vmatpush2.msra.mxu0 0.0
        %2548 = vmatprep.subr.mxu0 0.0
        %2549 = vmatpush2.msra.mxu0 0.0
        %2550 = vmatprep.subr.mxu0 0.0
        %2551 = vmatpush2.msra.mxu0 0.0
        %2552 = vmatprep.subr.mxu0 0.0
        %2553 = vmatpush2.msra.mxu0 0.0
        %2554 = vmatprep.subr.mxu0 0.0
        %2555 = vmatpush2.msra.mxu0 0.0
        %2556 = vmatprep.subr.mxu0 0.0
        %2557 = vmatpush2.msra.mxu0 0.0
        %2558 = vmatprep.subr.mxu0 0.0
        %2559 = vmatpush2.msra.mxu0 0.0
        %2560 = vmatprep.subr.mxu0 0.0
        %2561 = vmatpush2.msra.mxu0 0.0
        %2562 = vmatprep.subr.mxu0 0.0
        %2563 = vmatpush2.msra.mxu0 0.0
        %2564 = vmatprep.subr.mxu0 0.0
        %2565 = vmatpush2.msra.mxu0 0.0
        %2566 = vmatprep.subr.mxu0 0.0
        %2567 = vmatpush2.msra.mxu0 0.0
        %2568 = vmatprep.subr.mxu0 0.0
        %2569 = vmatpush2.msra.mxu0 0.0
        %2570 = vmatprep.subr.mxu0 0.0
        %2571 = vmatpush2.msra.mxu0 0.0
        %2572 = vmatprep.subr.mxu0 0.0
        %2573 = vmatpush2.msra.mxu0 0.0
        %2574 = vmatprep.subr.mxu0 0.0
        %2575 = vmatpush2.msra.mxu0 0.0
        %2576 = vmatprep.subr.mxu0 0.0
        %2577 = vmatpush2.msra.mxu0 0.0
        %2578 = vmatprep.mubr.f32.mxu0 0.0
        %2579 = vmatmul.mubr.f32.gmra.mxu0 %v2509
        %v2580 = vpop.f32.mrf.mxu0
        %v2581 = vadd.f32 %v2506, %v2580
        %v2582 = vpop.f32.mrf.mxu0
        %2583 = vmatprep.mubr.f32.mxu0 0.0
        %2584 = vmatmul.mubr.f32.gmra.mxu0 %v2512
        %v2585 = vpop.f32.mrf.mxu0
        %v2586 = vadd.f32 %v2506, %v2585
        %v2587 = vpop.f32.mrf.mxu0
        %2588 = vdwg.mxu0
        %v2589 = vadd.f32 %v863, %v2581
        %v2590 = vadd.f32 %v864, %v2586
        %v2591 = vld [vmem:[%s832] sm:$0x1]
        %v2592 = vld [vmem:[%s835] sm:$0x1]
        %v2593 = vsel %vm876, %v2589, 0.0
        %2594 = vadd.xlane.f32.xlu0 %v2593
        %v2595 = vpop.xlane.xlu0 %2594
        %v2596 = vsel %vm876, %v2590, 0.0
        %2597 = vadd.xlane.f32.xlu0 %v2596
        %v2598 = vpop.xlane.xlu0 %2597
        %v2599 = vrcp.pop 32.0
        %v2600 = vmul.f32 %v2595, %v2599
        %v2601 = vmul.f32 %v2598, %v2599
        %v2602 = vsub.f32 %v2589, %v2600
        %v2603 = vsub.f32 %v2590, %v2601
        %v2604 = vmul.f32 %v2602, %v2602
        %v2605 = vmul.f32 %v2603, %v2603
        %v2606 = vsel %vm876, %v2604, 0.0
        %2607 = vadd.xlane.f32.xlu0 %v2606
        %v2608 = vpop.xlane.xlu0 %2607
        %v2609 = vsel %vm876, %v2605, 0.0
        %2610 = vadd.xlane.f32.xlu0 %v2609
        %v2611 = vpop.xlane.xlu0 %2610
        %v2612 = vmul.f32 %v2608, %v2599
        %v2613 = vmul.f32 %v2611, %v2599
        %v2614 = vadd.f32 %v2612, 1e-05
        %v2615 = vadd.f32 %v2613, 1e-05
        %v2616 = vrsqrt.pop %v2614
        %v2617 = vrsqrt.pop %v2615
        %v2618 = vmul.f32 %v2602, %v2616
        %v2619 = vmul.f32 %v2603, %v2617
        %v2621 = vlaneseq
        %v2622 = vshrl.u32 %v2621, 7
        %v2623 = vsub.s32 0, %v2622
        %v2624 = vrot.slane %v2591, %v2623
        %v2626 = vmul.f32 %v2618, %v2624
        %v2627 = vmul.f32 %v2619, %v2624
        %v2629 = vlaneseq
        %v2630 = vshrl.u32 %v2629, 7
        %v2631 = vsub.s32 0, %v2630
        %v2632 = vrot.slane %v2592, %v2631
        %v2634 = vadd.f32 %v2626, %v2632
        %v2635 = vadd.f32 %v2627, %v2632
        %v2636 = vld [vmem:[%s701] sm:$0xff]
        %v2637 = vld [vmem:[%s701 + $0x8] sm:$0xff]
        %v2638 = vld [vmem:[%s701 + $0x10] sm:$0xff]
        %v2639 = vld [vmem:[%s701 + $0x18] sm:$0xff]
        %v2640 = vld [vmem:[%s838] sm:$0x1]
        %v2642 = vlaneseq
        %v2643 = vshrl.u32 %v2642, 7
        %v2644 = vsub.s32 0, %v2643
        %v2645 = vrot.slane %v2640, %v2644
        %v2648 = vsel %vm876, %v2634, 0
        %v2651 = vsel %vm876, %v2635, 0
        %2653 = vmatprep.subr.mxu0 0.0
        %2654 = vmatpush1.msra.mxu0 0.0
        %2655 = vmatprep.subr.mxu0 0.0
        %2656 = vmatpush1.msra.mxu0 0.0
        %2657 = vmatprep.subr.mxu0 0.0
        %2658 = vmatpush1.msra.mxu0 0.0
        %2659 = vmatprep.subr.mxu0 0.0
        %2660 = vmatpush1.msra.mxu0 0.0
        %2661 = vmatprep.subr.mxu0 0.0
        %2662 = vmatpush1.msra.mxu0 0.0
        %2663 = vmatprep.subr.mxu0 0.0
        %2664 = vmatpush1.msra.mxu0 0.0
        %2665 = vmatprep.subr.mxu0 0.0
        %2666 = vmatpush1.msra.mxu0 0.0
        %2667 = vmatprep.subr.mxu0 0.0
        %2668 = vmatpush1.msra.mxu0 0.0
        %2669 = vmatprep.subr.mxu0 0.0
        %2670 = vmatpush1.msra.mxu0 0.0
        %2671 = vmatprep.subr.mxu0 0.0
        %2672 = vmatpush1.msra.mxu0 0.0
        %2673 = vmatprep.subr.mxu0 0.0
        %2674 = vmatpush1.msra.mxu0 0.0
        %2675 = vmatprep.subr.mxu0 0.0
        %2676 = vmatpush1.msra.mxu0 0.0
        %2677 = vmatprep.subr.mxu0 0.0
        %2678 = vmatpush1.msra.mxu0 %v2639
        %2679 = vmatprep.subr.mxu0 0.0
        %2680 = vmatpush1.msra.mxu0 %v2638
        %2681 = vmatprep.subr.mxu0 0.0
        %2682 = vmatpush1.msra.mxu0 %v2637
        %2683 = vmatprep.subr.mxu0 0.0
        %2684 = vmatpush1.msra.mxu0 %v2636
        %2685 = vmatprep.subr.mxu0 0.0
        %2686 = vmatpush2.msra.mxu0 0.0
        %2687 = vmatprep.subr.mxu0 0.0
        %2688 = vmatpush2.msra.mxu0 0.0
        %2689 = vmatprep.subr.mxu0 0.0
        %2690 = vmatpush2.msra.mxu0 0.0
        %2691 = vmatprep.subr.mxu0 0.0
        %2692 = vmatpush2.msra.mxu0 0.0
        %2693 = vmatprep.subr.mxu0 0.0
        %2694 = vmatpush2.msra.mxu0 0.0
        %2695 = vmatprep.subr.mxu0 0.0
        %2696 = vmatpush2.msra.mxu0 0.0
        %2697 = vmatprep.subr.mxu0 0.0
        %2698 = vmatpush2.msra.mxu0 0.0
        %2699 = vmatprep.subr.mxu0 0.0
        %2700 = vmatpush2.msra.mxu0 0.0
        %2701 = vmatprep.subr.mxu0 0.0
        %2702 = vmatpush2.msra.mxu0 0.0
        %2703 = vmatprep.subr.mxu0 0.0
        %2704 = vmatpush2.msra.mxu0 0.0
        %2705 = vmatprep.subr.mxu0 0.0
        %2706 = vmatpush2.msra.mxu0 0.0
        %2707 = vmatprep.subr.mxu0 0.0
        %2708 = vmatpush2.msra.mxu0 0.0
        %2709 = vmatprep.subr.mxu0 0.0
        %2710 = vmatpush2.msra.mxu0 0.0
        %2711 = vmatprep.subr.mxu0 0.0
        %2712 = vmatpush2.msra.mxu0 0.0
        %2713 = vmatprep.subr.mxu0 0.0
        %2714 = vmatpush2.msra.mxu0 0.0
        %2715 = vmatprep.subr.mxu0 0.0
        %2716 = vmatpush2.msra.mxu0 0.0
        %2717 = vmatprep.mubr.f32.mxu0 0.0
        %2718 = vmatmul.mubr.f32.gmra.mxu0 %v2648
        %v2719 = vpop.f32.mrf.mxu0
        %v2720 = vadd.f32 %v2645, %v2719
        %v2721 = vpop.f32.mrf.mxu0
        %2722 = vmatprep.mubr.f32.mxu0 0.0
        %2723 = vmatmul.mubr.f32.gmra.mxu0 %v2651
        %v2724 = vpop.f32.mrf.mxu0
        %v2725 = vadd.f32 %v2645, %v2724
        %v2726 = vpop.f32.mrf.mxu0
        %2727 = vdwg.mxu0
        %v2728 = vmax.f32 %v2720, 0.0
        %v2729 = vmax.f32 %v2725, 0.0
        %v2730 = vld [vmem:[%s843] sm:$0xff]
        %v2731 = vld [vmem:[%s843 + $0x8] sm:$0xff]
        %v2732 = vld [vmem:[%s843 + $0x10] sm:$0xff]
        %v2733 = vld [vmem:[%s843 + $0x18] sm:$0xff]
        %v2734 = vld [vmem:[%s843 + $0x20] sm:$0xff]
        %v2735 = vld [vmem:[%s843 + $0x28] sm:$0xff]
        %v2736 = vld [vmem:[%s843 + $0x30] sm:$0xff]
        %v2737 = vld [vmem:[%s843 + $0x38] sm:$0xff]
        %v2738 = vld [vmem:[%s846] sm:$0x1]
        %v2740 = vlaneseq
        %v2741 = vshrl.u32 %v2740, 7
        %v2742 = vsub.s32 0, %v2741
        %v2743 = vrot.slane %v2738, %v2742
        %vm2745 = vcmask 523264
        %v2747 = vsel %vm2745, %v2728, 0
        %v2750 = vsel %vm2745, %v2729, 0
        %2752 = vmatprep.subr.mxu0 0.0
        %2753 = vmatpush1.msra.mxu0 0.0
        %2754 = vmatprep.subr.mxu0 0.0
        %2755 = vmatpush1.msra.mxu0 0.0
        %2756 = vmatprep.subr.mxu0 0.0
        %2757 = vmatpush1.msra.mxu0 0.0
        %2758 = vmatprep.subr.mxu0 0.0
        %2759 = vmatpush1.msra.mxu0 0.0
        %2760 = vmatprep.subr.mxu0 0.0
        %2761 = vmatpush1.msra.mxu0 0.0
        %2762 = vmatprep.subr.mxu0 0.0
        %2763 = vmatpush1.msra.mxu0 0.0
        %2764 = vmatprep.subr.mxu0 0.0
        %2765 = vmatpush1.msra.mxu0 0.0
        %2766 = vmatprep.subr.mxu0 0.0
        %2767 = vmatpush1.msra.mxu0 0.0
        %2768 = vmatprep.subr.mxu0 0.0
        %2769 = vmatpush1.msra.mxu0 %v2737
        %2770 = vmatprep.subr.mxu0 0.0
        %2771 = vmatpush1.msra.mxu0 %v2736
        %2772 = vmatprep.subr.mxu0 0.0
        %2773 = vmatpush1.msra.mxu0 %v2735
        %2774 = vmatprep.subr.mxu0 0.0
        %2775 = vmatpush1.msra.mxu0 %v2734
        %2776 = vmatprep.subr.mxu0 0.0
        %2777 = vmatpush1.msra.mxu0 %v2733
        %2778 = vmatprep.subr.mxu0 0.0
        %2779 = vmatpush1.msra.mxu0 %v2732
        %2780 = vmatprep.subr.mxu0 0.0
        %2781 = vmatpush1.msra.mxu0 %v2731
        %2782 = vmatprep.subr.mxu0 0.0
        %2783 = vmatpush1.msra.mxu0 %v2730
        %2784 = vmatprep.subr.mxu0 0.0
        %2785 = vmatpush2.msra.mxu0 0.0
        %2786 = vmatprep.subr.mxu0 0.0
        %2787 = vmatpush2.msra.mxu0 0.0
        %2788 = vmatprep.subr.mxu0 0.0
        %2789 = vmatpush2.msra.mxu0 0.0
        %2790 = vmatprep.subr.mxu0 0.0
        %2791 = vmatpush2.msra.mxu0 0.0
        %2792 = vmatprep.subr.mxu0 0.0
        %2793 = vmatpush2.msra.mxu0 0.0
        %2794 = vmatprep.subr.mxu0 0.0
        %2795 = vmatpush2.msra.mxu0 0.0
        %2796 = vmatprep.subr.mxu0 0.0
        %2797 = vmatpush2.msra.mxu0 0.0
        %2798 = vmatprep.subr.mxu0 0.0
        %2799 = vmatpush2.msra.mxu0 0.0
        %2800 = vmatprep.subr.mxu0 0.0
        %2801 = vmatpush2.msra.mxu0 0.0
        %2802 = vmatprep.subr.mxu0 0.0
        %2803 = vmatpush2.msra.mxu0 0.0
        %2804 = vmatprep.subr.mxu0 0.0
        %2805 = vmatpush2.msra.mxu0 0.0
        %2806 = vmatprep.subr.mxu0 0.0
        %2807 = vmatpush2.msra.mxu0 0.0
        %2808 = vmatprep.subr.mxu0 0.0
        %2809 = vmatpush2.msra.mxu0 0.0
        %2810 = vmatprep.subr.mxu0 0.0
        %2811 = vmatpush2.msra.mxu0 0.0
        %2812 = vmatprep.subr.mxu0 0.0
        %2813 = vmatpush2.msra.mxu0 0.0
        %2814 = vmatprep.subr.mxu0 0.0
        %2815 = vmatpush2.msra.mxu0 0.0
        %2816 = vmatprep.mubr.f32.mxu0 0.0
        %2817 = vmatmul.mubr.f32.gmra.mxu0 %v2747
        %v2818 = vpop.f32.mrf.mxu0
        %v2819 = vadd.f32 %v2743, %v2818
        %v2820 = vpop.f32.mrf.mxu0
        %2821 = vmatprep.mubr.f32.mxu0 0.0
        %2822 = vmatmul.mubr.f32.gmra.mxu0 %v2750
        %v2823 = vpop.f32.mrf.mxu0
        %v2824 = vadd.f32 %v2743, %v2823
        %v2825 = vpop.f32.mrf.mxu0
        %2826 = vdwg.mxu0
        %v2827 = vadd.f32 %v2634, %v2819
        %v2828 = vadd.f32 %v2635, %v2824
        %v2829 = vld [vmem:[%s849] sm:$0x1]
        %v2830 = vld [vmem:[%s852] sm:$0x1]
        %v2831 = vsel %vm876, %v2827, 0.0
        %2832 = vadd.xlane.f32.xlu0 %v2831
        %v2833 = vpop.xlane.xlu0 %2832
        %v2834 = vsel %vm876, %v2828, 0.0
        %2835 = vadd.xlane.f32.xlu0 %v2834
        %v2836 = vpop.xlane.xlu0 %2835
        %v2837 = vmul.f32 %v2833, %v2599
        %v2838 = vmul.f32 %v2836, %v2599
        %v2839 = vsub.f32 %v2827, %v2837
        %v2840 = vsub.f32 %v2828, %v2838
        %v2841 = vmul.f32 %v2839, %v2839
        %v2842 = vmul.f32 %v2840, %v2840
        %v2843 = vsel %vm876, %v2841, 0.0
        %2844 = vadd.xlane.f32.xlu0 %v2843
        %v2845 = vpop.xlane.xlu0 %2844
        %v2846 = vsel %vm876, %v2842, 0.0
        %2847 = vadd.xlane.f32.xlu0 %v2846
        %v2848 = vpop.xlane.xlu0 %2847
        %v2849 = vmul.f32 %v2845, %v2599
        %v2850 = vmul.f32 %v2848, %v2599
        %v2851 = vadd.f32 %v2849, 1e-05
        %v2852 = vadd.f32 %v2850, 1e-05
        %v2853 = vrsqrt.pop %v2851
        %v2854 = vrsqrt.pop %v2852
        %v2855 = vmul.f32 %v2839, %v2853
        %v2856 = vmul.f32 %v2840, %v2854
        %v2858 = vlaneseq
        %v2859 = vshrl.u32 %v2858, 7
        %v2860 = vsub.s32 0, %v2859
        %v2861 = vrot.slane %v2829, %v2860
        %v2863 = vmul.f32 %v2855, %v2861
        %v2864 = vmul.f32 %v2856, %v2861
        %v2866 = vlaneseq
        %v2867 = vshrl.u32 %v2866, 7
        %v2868 = vsub.s32 0, %v2867
        %v2869 = vrot.slane %v2830, %v2868
        %v2871 = vadd.f32 %v2863, %v2869
        %v2872 = vadd.f32 %v2864, %v2869
        %2873 = vst.msk [vmem:[#allocation2] sm:$0xff] %vm876, %v2871
        %2874 = vst.msk [vmem:[#allocation2 + $0x8] sm:$0xff] %vm876, %v2872
        %p2875 = scmp.eq.s32.totalorder %s38, 1
        // Predicated region
        $region105: #{tpu_custom_call.1} parent=87 // pred_check
          %p2876 = pneg %p2875
        $region106: #{tpu_custom_call.1} parent=87 // pred_check_branch
          %2878 = sbr.rel (%p2876) target = $region108
        $region107: #{tpu_custom_call.1} parent=87 // pred_region
          %2879 = vst.msk [vmem:[#allocation9] sm:$0xff] %vm876, %v2871
          %2880 = vst.msk [vmem:[#allocation9 + $0x8] sm:$0xff] %vm876, %v2872
        $region108: #{tpu_custom_call.1} parent=87 // pred_fallthru
          _
        // Predicated region
        $region109: #{tpu_custom_call.1} parent=87 // pred_check
          %p2881 = pneg %p505
        $region110: #{tpu_custom_call.1} parent=87 // pred_check_branch
          %2883 = sbr.rel (%p2881) target = $region112
        $region111: #{tpu_custom_call.1} parent=87 // pred_region
          %s2884 = smul.u32 2, %s37
          %s2886 = ssub.s32 256, 256
          %2887 = vsyncadd [#allocation5], %s2886
          %s2888 = smul.addr %s2884, 128
          %s2889 = scalar_lea.hbm %s17, %s2888
          %s2890 = sshll.u32 [#allocation9], 4
          %s2891 = int_to_ptr.vmem [resolvable:$true] %s2890
          %2896 = dma.vmem_to_hbm [thread:$0]  %s2891, 256, %s2889, [#allocation5], 128, 128, 8
        $region112: #{tpu_custom_call.1} parent=87 // pred_fallthru
          _
        // Predicated region
        $region113: #{tpu_custom_call.1} parent=87 // pred_check
          %p2897 = pneg %p505
        $region114: #{tpu_custom_call.1} parent=87 // pred_check_branch
          %2899 = sbr.rel (%p2897) target = $region116
        $region115: #{tpu_custom_call.1} parent=87 // pred_region
          %2900 = dma.done [#allocation5], 256
        $region116: #{tpu_custom_call.1} parent=87 // pred_fallthru
          _
      $region88: #{tpu_custom_call.1} parent=5 // pred_fallthru
        _
      %p2901 = scmp.le.s32.totalorder 2, %s28
      // Predicated region
      $region117: #{tpu_custom_call.1} parent=5 // pred_check
        %p2902 = pneg %p2901
      $region118: #{tpu_custom_call.1} parent=5 // pred_check_branch
        %2904 = sbr.rel (%p2902) target = $region120
      $region119: #{tpu_custom_call.1} parent=5 // pred_region
        %s2905 = ssub.s32 %s28, 2
      $region120: #{tpu_custom_call.1} parent=5 // pred_fallthru
        _
    $region6: #{tpu_custom_call.1} parent=1 // loop_footer
      %s32 = sadd.s32 1, %s28
    $region7: #{tpu_custom_call.1} parent=1 // loop_footer_branch
      %27 = sbr.rel target = $region3
    $region8: #{tpu_custom_call.1} parent=1 // loop_exit
      _
    %2906 = vsyncpa [#allocation4], 1
    %s2907 = scalar_lea.sflag [#allocation4], 1
    %2908 = vsyncpa %s2907, 1
    %2909 = vsyncpa [#allocation7], 1
    %s2910 = scalar_lea.sflag [#allocation7], 1
    %2911 = vsyncpa %s2910, 1
    %2912 = vsyncpa [#allocation5], 1
    %s2913 = scalar_lea.sflag [#allocation5], 1
    %2914 = vsyncpa %s2913, 1

</llo_original>
